<compile_context>
chip_gen: v7x
topology: tpu7x:2x2x1
jax: 0.10.0
libtpu: 0.0.40
codegen_flags: <defaults>
</compile_context>

<pallas_src>
import numpy as np
import jax
import jax.numpy as jnp
from jax.experimental import pallas as pl
from jax.experimental.pallas import tpu as pltpu


# ----------------------------------------------------------------------------
# Raw (PyTorch-layout) parameter init — used by the independent reference path
# ----------------------------------------------------------------------------
def init_lstm_raw(key, input_size, hidden, num_layers):
    bound = 1.0 / np.sqrt(hidden)
    raw = []
    for l in range(num_layers):
        in_l = input_size if l == 0 else hidden
        key, k1, k2, k3, k4 = jax.random.split(key, 5)
        w_ih = jax.random.uniform(k1, (4 * hidden, in_l), jnp.float32, -bound, bound)
        w_hh = jax.random.uniform(k2, (4 * hidden, hidden), jnp.float32, -bound, bound)
        b_ih = jax.random.uniform(k3, (4 * hidden,), jnp.float32, -bound, bound)
        b_hh = jax.random.uniform(k4, (4 * hidden,), jnp.float32, -bound, bound)
        raw.append((w_ih.T, w_hh.T, (b_ih + b_hh)[None, :]))   # (in,4H),(H,4H),(1,4H)
    return raw, key


def init_linear_raw(key, hidden, input_size):
    bound = 1.0 / np.sqrt(hidden)
    key, k1, k2 = jax.random.split(key, 3)
    w = jax.random.uniform(k1, (input_size, hidden), jnp.float32, -bound, bound)
    b = jax.random.uniform(k2, (input_size,), jnp.float32, -bound, bound)
    return (w.T, b[None, :]), key                               # (H, Din), (1, Din)


# ----------------------------------------------------------------------------
# Pack everything the kernel needs into one lane-width-4H slab (8-row aligned),
# pre-scaled for the single-sigmoid gate trick and with the decoder output
# linear folded into the next-step layer-0 input projection (built in f64).
# ----------------------------------------------------------------------------
def _round8(n):
    return ((n + 7) // 8) * 8


def build_packed_params(enc_raw, dec_raw, lin_raw, H, Din):
    G = 4 * H
    L = len(enc_raw)
    g_scale = np.ones((G,), np.float64)
    g_scale[2 * H:3 * H] = 2.0          # so tanh(z) = 2*sigmoid(2z) - 1 applies

    wlinT = np.asarray(lin_raw[0], np.float64)      # (H, Din)
    blin = np.asarray(lin_raw[1], np.float64)       # (1, Din)

    pieces, layout = [], {}
    rows = 0

    def add(name, arr):
        nonlocal rows
        a = np.asarray(arr, np.float64)
        n = a.shape[0]
        pad = _round8(n) - n
        if pad:
            a = np.concatenate([a, np.zeros((pad, G), np.float64)], axis=0)
        layout[name] = (rows, n)
        pieces.append(a)
        rows += a.shape[0]

    # encoder layers (g-gate columns pre-scaled by 2)
    for l, (wih, whh, b) in enumerate(enc_raw):
        add(f"enc_wih{l}", np.asarray(wih, np.float64) * g_scale)
        add(f"enc_whh{l}", np.asarray(whh, np.float64) * g_scale)
        add(f"enc_b{l}", np.asarray(b, np.float64) * g_scale)

    # decoder layer 0: raw (for step 0) and output-linear-folded (steps >= 1)
    dwih0 = np.asarray(dec_raw[0][0], np.float64) * g_scale     # (Din, 4H)
    dwhh0 = np.asarray(dec_raw[0][1], np.float64) * g_scale     # (H, 4H)
    db0 = np.asarray(dec_raw[0][2], np.float64) * g_scale       # (1, 4H)
    add("dec_wih0", dwih0)
    add("dec_whh0", dwhh0)
    add("dec_b0", db0)
    add("dec_wfold", wlinT @ dwih0)                              # (H, 4H)
    add("dec_bfold", blin @ dwih0 + db0)                         # (1, 4H)
    for l in range(1, L):
        wih, whh, b = dec_raw[l]
        add(f"dec_wih{l}", np.asarray(wih, np.float64) * g_scale)
        add(f"dec_whh{l}", np.asarray(whh, np.float64) * g_scale)
        add(f"dec_b{l}", np.asarray(b, np.float64) * g_scale)

    # output linear, zero-padded to the 4H lane width (only first Din cols used)
    wlin_pad = np.zeros((H, G), np.float64); wlin_pad[:, :Din] = wlinT
    blin_pad = np.zeros((1, G), np.float64); blin_pad[:, :Din] = blin
    add("wlin", wlin_pad)
    add("blin", blin_pad)

    slab = jnp.asarray(np.concatenate(pieces, axis=0).astype(np.float32))
    return slab, layout


# ----------------------------------------------------------------------------
# Fused encoder + decoder kernel (single pallas_call, everything VMEM-resident)
# ----------------------------------------------------------------------------
def make_pfm_forward(layout, *, S, B, T, L, H, Din):
    G = 4 * H

    def read(slab_ref, name):
        off, n = layout[name]
        return slab_ref[off:off + n, :]

    def lstm_update(gates, c):
        # one full-width sigmoid over (B, 4H); g recovered via tanh identity
        sg = jax.nn.sigmoid(gates)
        i = sg[:, 0 * H:1 * H]
        f = sg[:, 1 * H:2 * H]
        g = 2.0 * sg[:, 2 * H:3 * H] - 1.0
        o = sg[:, 3 * H:4 * H]
        c_new = f * c + i * g
        h_new = o * jnp.tanh(c_new)
        return h_new, c_new

    def kernel(x2d_ref, st0_ref, slab_ref, out_ref):
        f32 = jnp.float32

        # ---------------- encoder: layer-major ----------------
        src = x2d_ref[...]                              # (S*B, Din) time-major
        hs, cs = [], []
        for l in range(L):
            wih = read(slab_ref, f"enc_wih{l}")         # (in_l, 4H)
            whh = read(slab_ref, f"enc_whh{l}")         # (H, 4H)
            b = read(slab_ref, f"enc_b{l}")             # (1, 4H)
            # batched input projection (all S steps at once), bias folded in
            gx = jnp.dot(src, wih, preferred_element_type=f32) + b   # (S*B, 4H)
            h = st0_ref[l]                               # (B, H)
            c = st0_ref[L + l]
            h_steps = []
            for t in range(S):
                gates = gx[t * B:(t + 1) * B, :] + jnp.dot(
                    h, whh, preferred_element_type=f32)
                h, c = lstm_update(gates, c)
                h_steps.append(h)
            if l + 1 < L:
                src = jnp.concatenate(h_steps, axis=0)   # (S*B, H) next layer input
            hs.append(h)
            cs.append(c)

        # ---------------- decoder: autoregressive ----------------
        dwih0 = read(slab_ref, "dec_wih0")               # (Din, 4H)  (step 0 only)
        dwhh0 = read(slab_ref, "dec_whh0")               # (H, 4H)
        db0 = read(slab_ref, "dec_b0")                   # (1, 4H)    (step 0 only)
        wfold = read(slab_ref, "dec_wfold")              # (H, 4H)
        bfold = jnp.broadcast_to(read(slab_ref, "dec_bfold"), (B, G))
        dwih = [read(slab_ref, f"dec_wih{l}") for l in range(1, L)]
        dwhh = [read(slab_ref, f"dec_whh{l}") for l in range(1, L)]
        db = [jnp.broadcast_to(read(slab_ref, f"dec_b{l}"), (B, G))
              for l in range(1, L)]
        wlin = read(slab_ref, "wlin")                    # (H, 4H), cols >= Din zero
        blin = jnp.broadcast_to(read(slab_ref, "blin"), (B, G))

        x_last = x2d_ref[(S - 1) * B:S * B, :]           # (B, Din) last time step
        h_top = None
        for t in range(T):
            if t == 0:
                g0 = (jnp.dot(x_last, dwih0, preferred_element_type=f32)
                      + jnp.dot(hs[0], dwhh0, preferred_element_type=f32) + db0)
            else:
                # output linear folded into this step's layer-0 input projection
                g0 = (jnp.dot(h_top, wfold, preferred_element_type=f32)
                      + jnp.dot(hs[0], dwhh0, preferred_element_type=f32) + bfold)
            hs[0], cs[0] = lstm_update(g0, cs[0])
            inp = hs[0]
            for l in range(1, L):
                gl = (jnp.dot(inp, dwih[l - 1], preferred_element_type=f32)
                      + jnp.dot(hs[l], dwhh[l - 1], preferred_element_type=f32)
                      + db[l - 1])
                hs[l], cs[l] = lstm_update(gl, cs[l])
                inp = hs[l]
            h_top = hs[L - 1]
            # prediction: off the recurrence chain thanks to the fold above
            y = jnp.dot(h_top, wlin, preferred_element_type=f32) + blin   # (B, 4H)
            out_ref[t] = y[:, :Din]

    vmem = pl.BlockSpec(memory_space=pltpu.MemorySpace.VMEM)

    @jax.jit
    def forward(x, state0, slab):
        """x: (B, S, Din) f32 -> (B, Din, T).  Transpose/reshape fuse into the
        same executable as the kernel (no extra dispatch)."""
        x2d = jnp.transpose(x, (1, 0, 2)).reshape(S * B, Din)   # time-major rows
        out_tbd = pl.pallas_call(
            kernel,
            out_shape=jax.ShapeDtypeStruct((T, B, Din), jnp.float32),
            in_specs=[vmem, vmem, vmem],
            out_specs=vmem,
        )(x2d, state0, slab)
        return jnp.transpose(out_tbd, (1, 2, 0))                 # (B, Din, T)

    return forward


# ----------------------------------------------------------------------------
# Pure-JAX reference using the UNfused / unscaled raw parameters
# ----------------------------------------------------------------------------
def _ref_cell(inp, h, c, w_ih_T, w_hh_T, b, H):
    gates = inp @ w_ih_T + h @ w_hh_T + b
    i = jax.nn.sigmoid(gates[:, :H])
    f = jax.nn.sigmoid(gates[:, H:2 * H])
    g = jnp.tanh(gates[:, 2 * H:3 * H])
    o = jax.nn.sigmoid(gates[:, 3 * H:])
    c = f * c + i * g
    h = o * jnp.tanh(c)
    return h, c


def pfm_reference(x, enc_raw, dec_raw, lin_raw, h0, c0, output_size):
    B, S, Din = x.shape
    L = len(enc_raw)
    H = h0.shape[2]
    wlin, blin = lin_raw

    hs = [h0[l] for l in range(L)]
    cs = [c0[l] for l in range(L)]
    for t in range(S):
        inp = x[:, t, :]
        for l in range(L):
            hs[l], cs[l] = _ref_cell(inp, hs[l], cs[l], *enc_raw[l], H)
            inp = hs[l]

    xcur = x[:, -1, :]
    outs = []
    for _ in range(output_size):
        inp = xcur
        for l in range(L):
            hs[l], cs[l] = _ref_cell(inp, hs[l], cs[l], *dec_raw[l], H)
            inp = hs[l]
        xcur = hs[-1] @ wlin + blin
        outs.append(xcur)
    return jnp.stack(outs, axis=-1)                             # (B, Din, T)


# ----------------------------------------------------------------------------
if __name__ == "__main__":
    batch_size = 2
    seq_len = 8
    input_size = 4
    hidden_size = 32
    num_layers = 2
    output_size = 4

    key = jax.random.PRNGKey(0)
    key, kx, kh, kc = jax.random.split(key, 4)
    x = jax.random.normal(kx, (batch_size, seq_len, input_size), jnp.float32)

    # the module's per-forward torch.randn(h_0/c_0), replicated deterministically
    h0 = jax.random.normal(kh, (num_layers, batch_size, hidden_size), jnp.float32)
    c0 = jax.random.normal(kc, (num_layers, batch_size, hidden_size), jnp.float32)

    enc_raw, key = init_lstm_raw(key, input_size, hidden_size, num_layers)
    dec_raw, key = init_lstm_raw(key, input_size, hidden_size, num_layers)
    lin_raw, key = init_linear_raw(key, hidden_size, input_size)

    slab, layout = build_packed_params(enc_raw, dec_raw, lin_raw,
                                       hidden_size, input_size)
    state0 = jnp.concatenate([h0, c0], axis=0)                  # (2L, B, H): 1 DMA

    fwd = make_pfm_forward(layout, S=seq_len, B=batch_size, T=output_size,
                           L=num_layers, H=hidden_size, Din=input_size)
    out = jax.block_until_ready(fwd(x, state0, slab))

    ref = jax.block_until_ready(
        pfm_reference(x, enc_raw, dec_raw, lin_raw, h0, c0, output_size))

    assert out.shape == (batch_size, input_size, output_size), out.shape
    # Tolerance note: the kernel recovers the candidate-gate tanh via
    # 2*sigmoid(2z)-1 (pre-scaled weights), folds the decoder output linear into
    # the next step's input projection (re-associated matmuls), and the TPU MXU
    # evaluates f32 matmuls as bf16 passes whose rounding no longer cancels
    # between the two computation orders; all are benign sub-1e-3 effects.
    np.testing.assert_allclose(np.asarray(out), np.asarray(ref),
                               rtol=1e-3, atol=1e-3)
    print("KERNEL_OK")
</pallas_src>

<mosaic_0001>
module attributes {stable_mosaic.version = 11 : i64} {
  func.func @kernel(%arg0: memref<16x4xf32, #tpu.memory_space<vmem>>, %arg1: memref<4x2x32xf32, #tpu.memory_space<vmem>>, %arg2: memref<320x128xf32, #tpu.memory_space<vmem>>, %arg3: memref<4x2x4xf32, #tpu.memory_space<vmem>>) attributes {dimension_semantics = [], scalar_prefetch = 0 : i64, scratch_operands = 0 : i64, tpu.core_type = #tpu.core_type<tc>} {
    %c0 = arith.constant 0 : index
    %c0_0 = arith.constant 0 : index
    %0 = vector.load %arg0[%c0, %c0_0] : memref<16x4xf32, #tpu.memory_space<vmem>>, vector<16x4xf32>
    %c0_1 = arith.constant 0 : index
    %c0_2 = arith.constant 0 : index
    %1 = vector.load %arg2[%c0_1, %c0_2] : memref<320x128xf32, #tpu.memory_space<vmem>>, vector<4x128xf32>
    %c8 = arith.constant 8 : index
    %c0_3 = arith.constant 0 : index
    %2 = vector.load %arg2[%c8, %c0_3] : memref<320x128xf32, #tpu.memory_space<vmem>>, vector<32x128xf32>
    %c40 = arith.constant 40 : index
    %c0_4 = arith.constant 0 : index
    %3 = vector.load %arg2[%c40, %c0_4] : memref<320x128xf32, #tpu.memory_space<vmem>>, vector<1x128xf32>
    %cst = arith.constant dense<0.000000e+00> : vector<16x128xf32>
    %4 = tpu.matmul %0, %1, %cst {dimension_numbers = #tpu.dot_dimension_numbers<[1], [0], [0], [1], [0, 0, 1, 1], [], []>} : vector<16x4xf32>, vector<4x128xf32>, vector<16x128xf32> -> vector<16x128xf32>
    %5 = vector.broadcast %3 : vector<1x128xf32> to vector<16x128xf32>
    %6 = arith.addf %4, %5 : vector<16x128xf32>
    %c0_5 = arith.constant 0 : index
    %c0_6 = arith.constant 0 : index
    %c0_7 = arith.constant 0 : index
    %7 = vector.load %arg1[%c0_5, %c0_6, %c0_7] : memref<4x2x32xf32, #tpu.memory_space<vmem>>, vector<1x2x32xf32>
    %8 = vector.shape_cast %7 : vector<1x2x32xf32> to vector<2x32xf32>
    %c2 = arith.constant 2 : index
    %c0_8 = arith.constant 0 : index
    %c0_9 = arith.constant 0 : index
    %9 = vector.load %arg1[%c2, %c0_8, %c0_9] : memref<4x2x32xf32, #tpu.memory_space<vmem>>, vector<1x2x32xf32>
    %10 = vector.shape_cast %9 : vector<1x2x32xf32> to vector<2x32xf32>
    %11 = vector.extract_strided_slice %6 {offsets = [0, 0], sizes = [2, 128], strides = [1, 1]} : vector<16x128xf32> to vector<2x128xf32>
    %cst_10 = arith.constant dense<0.000000e+00> : vector<2x128xf32>
    %12 = tpu.matmul %8, %2, %cst_10 {dimension_numbers = #tpu.dot_dimension_numbers<[1], [0], [0], [1], [0, 0, 1, 1], [], []>} : vector<2x32xf32>, vector<32x128xf32>, vector<2x128xf32> -> vector<2x128xf32>
    %13 = arith.addf %11, %12 : vector<2x128xf32>
    %14 = arith.negf %13 : vector<2x128xf32>
    %15 = math.exp %14 : vector<2x128xf32>
    %cst_11 = arith.constant 1.000000e+00 : f32
    %16 = vector.broadcast %cst_11 : f32 to vector<2x128xf32>
    %17 = arith.addf %16, %15 : vector<2x128xf32>
    %18 = arith.divf %16, %17 : vector<2x128xf32>
    %19 = vector.extract_strided_slice %18 {offsets = [0, 0], sizes = [2, 32], strides = [1, 1]} : vector<2x128xf32> to vector<2x32xf32>
    %20 = vector.extract_strided_slice %18 {offsets = [0, 32], sizes = [2, 32], strides = [1, 1]} : vector<2x128xf32> to vector<2x32xf32>
    %21 = vector.extract_strided_slice %18 {offsets = [0, 64], sizes = [2, 32], strides = [1, 1]} : vector<2x128xf32> to vector<2x32xf32>
    %cst_12 = arith.constant 2.000000e+00 : f32
    %22 = vector.broadcast %cst_12 : f32 to vector<2x32xf32>
    %23 = arith.mulf %22, %21 : vector<2x32xf32>
    %cst_13 = arith.constant 1.000000e+00 : f32
    %24 = vector.broadcast %cst_13 : f32 to vector<2x32xf32>
    %25 = arith.subf %23, %24 : vector<2x32xf32>
    %26 = vector.extract_strided_slice %18 {offsets = [0, 96], sizes = [2, 32], strides = [1, 1]} : vector<2x128xf32> to vector<2x32xf32>
    %27 = arith.mulf %20, %10 : vector<2x32xf32>
    %28 = arith.mulf %19, %25 : vector<2x32xf32>
    %29 = arith.addf %27, %28 : vector<2x32xf32>
    %30 = math.tanh %29 : vector<2x32xf32>
    %31 = arith.mulf %26, %30 : vector<2x32xf32>
    %32 = vector.extract_strided_slice %6 {offsets = [2, 0], sizes = [2, 128], strides = [1, 1]} : vector<16x128xf32> to vector<2x128xf32>
    %cst_14 = arith.constant dense<0.000000e+00> : vector<2x128xf32>
    %33 = tpu.matmul %31, %2, %cst_14 {dimension_numbers = #tpu.dot_dimension_numbers<[1], [0], [0], [1], [0, 0, 1, 1], [], []>} : vector<2x32xf32>, vector<32x128xf32>, vector<2x128xf32> -> vector<2x128xf32>
    %34 = arith.addf %32, %33 : vector<2x128xf32>
    %35 = arith.negf %34 : vector<2x128xf32>
    %36 = math.exp %35 : vector<2x128xf32>
    %cst_15 = arith.constant 1.000000e+00 : f32
    %37 = vector.broadcast %cst_15 : f32 to vector<2x128xf32>
    %38 = arith.addf %37, %36 : vector<2x128xf32>
    %39 = arith.divf %37, %38 : vector<2x128xf32>
    %40 = vector.extract_strided_slice %39 {offsets = [0, 0], sizes = [2, 32], strides = [1, 1]} : vector<2x128xf32> to vector<2x32xf32>
    %41 = vector.extract_strided_slice %39 {offsets = [0, 32], sizes = [2, 32], strides = [1, 1]} : vector<2x128xf32> to vector<2x32xf32>
    %42 = vector.extract_strided_slice %39 {offsets = [0, 64], sizes = [2, 32], strides = [1, 1]} : vector<2x128xf32> to vector<2x32xf32>
    %cst_16 = arith.constant 2.000000e+00 : f32
    %43 = vector.broadcast %cst_16 : f32 to vector<2x32xf32>
    %44 = arith.mulf %43, %42 : vector<2x32xf32>
    %cst_17 = arith.constant 1.000000e+00 : f32
    %45 = vector.broadcast %cst_17 : f32 to vector<2x32xf32>
    %46 = arith.subf %44, %45 : vector<2x32xf32>
    %47 = vector.extract_strided_slice %39 {offsets = [0, 96], sizes = [2, 32], strides = [1, 1]} : vector<2x128xf32> to vector<2x32xf32>
    %48 = arith.mulf %41, %29 : vector<2x32xf32>
    %49 = arith.mulf %40, %46 : vector<2x32xf32>
    %50 = arith.addf %48, %49 : vector<2x32xf32>
    %51 = math.tanh %50 : vector<2x32xf32>
    %52 = arith.mulf %47, %51 : vector<2x32xf32>
    %53 = vector.extract_strided_slice %6 {offsets = [4, 0], sizes = [2, 128], strides = [1, 1]} : vector<16x128xf32> to vector<2x128xf32>
    %cst_18 = arith.constant dense<0.000000e+00> : vector<2x128xf32>
    %54 = tpu.matmul %52, %2, %cst_18 {dimension_numbers = #tpu.dot_dimension_numbers<[1], [0], [0], [1], [0, 0, 1, 1], [], []>} : vector<2x32xf32>, vector<32x128xf32>, vector<2x128xf32> -> vector<2x128xf32>
    %55 = arith.addf %53, %54 : vector<2x128xf32>
    %56 = arith.negf %55 : vector<2x128xf32>
    %57 = math.exp %56 : vector<2x128xf32>
    %cst_19 = arith.constant 1.000000e+00 : f32
    %58 = vector.broadcast %cst_19 : f32 to vector<2x128xf32>
    %59 = arith.addf %58, %57 : vector<2x128xf32>
    %60 = arith.divf %58, %59 : vector<2x128xf32>
    %61 = vector.extract_strided_slice %60 {offsets = [0, 0], sizes = [2, 32], strides = [1, 1]} : vector<2x128xf32> to vector<2x32xf32>
    %62 = vector.extract_strided_slice %60 {offsets = [0, 32], sizes = [2, 32], strides = [1, 1]} : vector<2x128xf32> to vector<2x32xf32>
    %63 = vector.extract_strided_slice %60 {offsets = [0, 64], sizes = [2, 32], strides = [1, 1]} : vector<2x128xf32> to vector<2x32xf32>
    %cst_20 = arith.constant 2.000000e+00 : f32
    %64 = vector.broadcast %cst_20 : f32 to vector<2x32xf32>
    %65 = arith.mulf %64, %63 : vector<2x32xf32>
    %cst_21 = arith.constant 1.000000e+00 : f32
    %66 = vector.broadcast %cst_21 : f32 to vector<2x32xf32>
    %67 = arith.subf %65, %66 : vector<2x32xf32>
    %68 = vector.extract_strided_slice %60 {offsets = [0, 96], sizes = [2, 32], strides = [1, 1]} : vector<2x128xf32> to vector<2x32xf32>
    %69 = arith.mulf %62, %50 : vector<2x32xf32>
    %70 = arith.mulf %61, %67 : vector<2x32xf32>
    %71 = arith.addf %69, %70 : vector<2x32xf32>
    %72 = math.tanh %71 : vector<2x32xf32>
    %73 = arith.mulf %68, %72 : vector<2x32xf32>
    %74 = vector.extract_strided_slice %6 {offsets = [6, 0], sizes = [2, 128], strides = [1, 1]} : vector<16x128xf32> to vector<2x128xf32>
    %cst_22 = arith.constant dense<0.000000e+00> : vector<2x128xf32>
    %75 = tpu.matmul %73, %2, %cst_22 {dimension_numbers = #tpu.dot_dimension_numbers<[1], [0], [0], [1], [0, 0, 1, 1], [], []>} : vector<2x32xf32>, vector<32x128xf32>, vector<2x128xf32> -> vector<2x128xf32>
    %76 = arith.addf %74, %75 : vector<2x128xf32>
    %77 = arith.negf %76 : vector<2x128xf32>
    %78 = math.exp %77 : vector<2x128xf32>
    %cst_23 = arith.constant 1.000000e+00 : f32
    %79 = vector.broadcast %cst_23 : f32 to vector<2x128xf32>
    %80 = arith.addf %79, %78 : vector<2x128xf32>
    %81 = arith.divf %79, %80 : vector<2x128xf32>
    %82 = vector.extract_strided_slice %81 {offsets = [0, 0], sizes = [2, 32], strides = [1, 1]} : vector<2x128xf32> to vector<2x32xf32>
    %83 = vector.extract_strided_slice %81 {offsets = [0, 32], sizes = [2, 32], strides = [1, 1]} : vector<2x128xf32> to vector<2x32xf32>
    %84 = vector.extract_strided_slice %81 {offsets = [0, 64], sizes = [2, 32], strides = [1, 1]} : vector<2x128xf32> to vector<2x32xf32>
    %cst_24 = arith.constant 2.000000e+00 : f32
    %85 = vector.broadcast %cst_24 : f32 to vector<2x32xf32>
    %86 = arith.mulf %85, %84 : vector<2x32xf32>
    %cst_25 = arith.constant 1.000000e+00 : f32
    %87 = vector.broadcast %cst_25 : f32 to vector<2x32xf32>
    %88 = arith.subf %86, %87 : vector<2x32xf32>
    %89 = vector.extract_strided_slice %81 {offsets = [0, 96], sizes = [2, 32], strides = [1, 1]} : vector<2x128xf32> to vector<2x32xf32>
    %90 = arith.mulf %83, %71 : vector<2x32xf32>
    %91 = arith.mulf %82, %88 : vector<2x32xf32>
    %92 = arith.addf %90, %91 : vector<2x32xf32>
    %93 = math.tanh %92 : vector<2x32xf32>
    %94 = arith.mulf %89, %93 : vector<2x32xf32>
    %95 = vector.extract_strided_slice %6 {offsets = [8, 0], sizes = [2, 128], strides = [1, 1]} : vector<16x128xf32> to vector<2x128xf32>
    %cst_26 = arith.constant dense<0.000000e+00> : vector<2x128xf32>
    %96 = tpu.matmul %94, %2, %cst_26 {dimension_numbers = #tpu.dot_dimension_numbers<[1], [0], [0], [1], [0, 0, 1, 1], [], []>} : vector<2x32xf32>, vector<32x128xf32>, vector<2x128xf32> -> vector<2x128xf32>
    %97 = arith.addf %95, %96 : vector<2x128xf32>
    %98 = arith.negf %97 : vector<2x128xf32>
    %99 = math.exp %98 : vector<2x128xf32>
    %cst_27 = arith.constant 1.000000e+00 : f32
    %100 = vector.broadcast %cst_27 : f32 to vector<2x128xf32>
    %101 = arith.addf %100, %99 : vector<2x128xf32>
    %102 = arith.divf %100, %101 : vector<2x128xf32>
    %103 = vector.extract_strided_slice %102 {offsets = [0, 0], sizes = [2, 32], strides = [1, 1]} : vector<2x128xf32> to vector<2x32xf32>
    %104 = vector.extract_strided_slice %102 {offsets = [0, 32], sizes = [2, 32], strides = [1, 1]} : vector<2x128xf32> to vector<2x32xf32>
    %105 = vector.extract_strided_slice %102 {offsets = [0, 64], sizes = [2, 32], strides = [1, 1]} : vector<2x128xf32> to vector<2x32xf32>
    %cst_28 = arith.constant 2.000000e+00 : f32
    %106 = vector.broadcast %cst_28 : f32 to vector<2x32xf32>
    %107 = arith.mulf %106, %105 : vector<2x32xf32>
    %cst_29 = arith.constant 1.000000e+00 : f32
    %108 = vector.broadcast %cst_29 : f32 to vector<2x32xf32>
    %109 = arith.subf %107, %108 : vector<2x32xf32>
    %110 = vector.extract_strided_slice %102 {offsets = [0, 96], sizes = [2, 32], strides = [1, 1]} : vector<2x128xf32> to vector<2x32xf32>
    %111 = arith.mulf %104, %92 : vector<2x32xf32>
    %112 = arith.mulf %103, %109 : vector<2x32xf32>
    %113 = arith.addf %111, %112 : vector<2x32xf32>
    %114 = math.tanh %113 : vector<2x32xf32>
    %115 = arith.mulf %110, %114 : vector<2x32xf32>
    %116 = vector.extract_strided_slice %6 {offsets = [10, 0], sizes = [2, 128], strides = [1, 1]} : vector<16x128xf32> to vector<2x128xf32>
    %cst_30 = arith.constant dense<0.000000e+00> : vector<2x128xf32>
    %117 = tpu.matmul %115, %2, %cst_30 {dimension_numbers = #tpu.dot_dimension_numbers<[1], [0], [0], [1], [0, 0, 1, 1], [], []>} : vector<2x32xf32>, vector<32x128xf32>, vector<2x128xf32> -> vector<2x128xf32>
    %118 = arith.addf %116, %117 : vector<2x128xf32>
    %119 = arith.negf %118 : vector<2x128xf32>
    %120 = math.exp %119 : vector<2x128xf32>
    %cst_31 = arith.constant 1.000000e+00 : f32
    %121 = vector.broadcast %cst_31 : f32 to vector<2x128xf32>
    %122 = arith.addf %121, %120 : vector<2x128xf32>
    %123 = arith.divf %121, %122 : vector<2x128xf32>
    %124 = vector.extract_strided_slice %123 {offsets = [0, 0], sizes = [2, 32], strides = [1, 1]} : vector<2x128xf32> to vector<2x32xf32>
    %125 = vector.extract_strided_slice %123 {offsets = [0, 32], sizes = [2, 32], strides = [1, 1]} : vector<2x128xf32> to vector<2x32xf32>
    %126 = vector.extract_strided_slice %123 {offsets = [0, 64], sizes = [2, 32], strides = [1, 1]} : vector<2x128xf32> to vector<2x32xf32>
    %cst_32 = arith.constant 2.000000e+00 : f32
    %127 = vector.broadcast %cst_32 : f32 to vector<2x32xf32>
    %128 = arith.mulf %127, %126 : vector<2x32xf32>
    %cst_33 = arith.constant 1.000000e+00 : f32
    %129 = vector.broadcast %cst_33 : f32 to vector<2x32xf32>
    %130 = arith.subf %128, %129 : vector<2x32xf32>
    %131 = vector.extract_strided_slice %123 {offsets = [0, 96], sizes = [2, 32], strides = [1, 1]} : vector<2x128xf32> to vector<2x32xf32>
    %132 = arith.mulf %125, %113 : vector<2x32xf32>
    %133 = arith.mulf %124, %130 : vector<2x32xf32>
    %134 = arith.addf %132, %133 : vector<2x32xf32>
    %135 = math.tanh %134 : vector<2x32xf32>
    %136 = arith.mulf %131, %135 : vector<2x32xf32>
    %137 = vector.extract_strided_slice %6 {offsets = [12, 0], sizes = [2, 128], strides = [1, 1]} : vector<16x128xf32> to vector<2x128xf32>
    %cst_34 = arith.constant dense<0.000000e+00> : vector<2x128xf32>
    %138 = tpu.matmul %136, %2, %cst_34 {dimension_numbers = #tpu.dot_dimension_numbers<[1], [0], [0], [1], [0, 0, 1, 1], [], []>} : vector<2x32xf32>, vector<32x128xf32>, vector<2x128xf32> -> vector<2x128xf32>
    %139 = arith.addf %137, %138 : vector<2x128xf32>
    %140 = arith.negf %139 : vector<2x128xf32>
    %141 = math.exp %140 : vector<2x128xf32>
    %cst_35 = arith.constant 1.000000e+00 : f32
    %142 = vector.broadcast %cst_35 : f32 to vector<2x128xf32>
    %143 = arith.addf %142, %141 : vector<2x128xf32>
    %144 = arith.divf %142, %143 : vector<2x128xf32>
    %145 = vector.extract_strided_slice %144 {offsets = [0, 0], sizes = [2, 32], strides = [1, 1]} : vector<2x128xf32> to vector<2x32xf32>
    %146 = vector.extract_strided_slice %144 {offsets = [0, 32], sizes = [2, 32], strides = [1, 1]} : vector<2x128xf32> to vector<2x32xf32>
    %147 = vector.extract_strided_slice %144 {offsets = [0, 64], sizes = [2, 32], strides = [1, 1]} : vector<2x128xf32> to vector<2x32xf32>
    %cst_36 = arith.constant 2.000000e+00 : f32
    %148 = vector.broadcast %cst_36 : f32 to vector<2x32xf32>
    %149 = arith.mulf %148, %147 : vector<2x32xf32>
    %cst_37 = arith.constant 1.000000e+00 : f32
    %150 = vector.broadcast %cst_37 : f32 to vector<2x32xf32>
    %151 = arith.subf %149, %150 : vector<2x32xf32>
    %152 = vector.extract_strided_slice %144 {offsets = [0, 96], sizes = [2, 32], strides = [1, 1]} : vector<2x128xf32> to vector<2x32xf32>
    %153 = arith.mulf %146, %134 : vector<2x32xf32>
    %154 = arith.mulf %145, %151 : vector<2x32xf32>
    %155 = arith.addf %153, %154 : vector<2x32xf32>
    %156 = math.tanh %155 : vector<2x32xf32>
    %157 = arith.mulf %152, %156 : vector<2x32xf32>
    %158 = vector.extract_strided_slice %6 {offsets = [14, 0], sizes = [2, 128], strides = [1, 1]} : vector<16x128xf32> to vector<2x128xf32>
    %cst_38 = arith.constant dense<0.000000e+00> : vector<2x128xf32>
    %159 = tpu.matmul %157, %2, %cst_38 {dimension_numbers = #tpu.dot_dimension_numbers<[1], [0], [0], [1], [0, 0, 1, 1], [], []>} : vector<2x32xf32>, vector<32x128xf32>, vector<2x128xf32> -> vector<2x128xf32>
    %160 = arith.addf %158, %159 : vector<2x128xf32>
    %161 = arith.negf %160 : vector<2x128xf32>
    %162 = math.exp %161 : vector<2x128xf32>
    %cst_39 = arith.constant 1.000000e+00 : f32
    %163 = vector.broadcast %cst_39 : f32 to vector<2x128xf32>
    %164 = arith.addf %163, %162 : vector<2x128xf32>
    %165 = arith.divf %163, %164 : vector<2x128xf32>
    %166 = vector.extract_strided_slice %165 {offsets = [0, 0], sizes = [2, 32], strides = [1, 1]} : vector<2x128xf32> to vector<2x32xf32>
    %167 = vector.extract_strided_slice %165 {offsets = [0, 32], sizes = [2, 32], strides = [1, 1]} : vector<2x128xf32> to vector<2x32xf32>
    %168 = vector.extract_strided_slice %165 {offsets = [0, 64], sizes = [2, 32], strides = [1, 1]} : vector<2x128xf32> to vector<2x32xf32>
    %cst_40 = arith.constant 2.000000e+00 : f32
    %169 = vector.broadcast %cst_40 : f32 to vector<2x32xf32>
    %170 = arith.mulf %169, %168 : vector<2x32xf32>
    %cst_41 = arith.constant 1.000000e+00 : f32
    %171 = vector.broadcast %cst_41 : f32 to vector<2x32xf32>
    %172 = arith.subf %170, %171 : vector<2x32xf32>
    %173 = vector.extract_strided_slice %165 {offsets = [0, 96], sizes = [2, 32], strides = [1, 1]} : vector<2x128xf32> to vector<2x32xf32>
    %174 = arith.mulf %167, %155 : vector<2x32xf32>
    %175 = arith.mulf %166, %172 : vector<2x32xf32>
    %176 = arith.addf %174, %175 : vector<2x32xf32>
    %177 = math.tanh %176 : vector<2x32xf32>
    %178 = arith.mulf %173, %177 : vector<2x32xf32>
    %179 = tpu.concatenate %31, %52, %73, %94, %115, %136, %157, %178 in 0 : vector<2x32xf32>, vector<2x32xf32>, vector<2x32xf32>, vector<2x32xf32>, vector<2x32xf32>, vector<2x32xf32>, vector<2x32xf32>, vector<2x32xf32> -> vector<16x32xf32>
    %c48 = arith.constant 48 : index
    %c0_42 = arith.constant 0 : index
    %180 = vector.load %arg2[%c48, %c0_42] : memref<320x128xf32, #tpu.memory_space<vmem>>, vector<32x128xf32>
    %c80 = arith.constant 80 : index
    %c0_43 = arith.constant 0 : index
    %181 = vector.load %arg2[%c80, %c0_43] : memref<320x128xf32, #tpu.memory_space<vmem>>, vector<32x128xf32>
    %c112 = arith.constant 112 : index
    %c0_44 = arith.constant 0 : index
    %182 = vector.load %arg2[%c112, %c0_44] : memref<320x128xf32, #tpu.memory_space<vmem>>, vector<1x128xf32>
    %cst_45 = arith.constant dense<0.000000e+00> : vector<16x128xf32>
    %183 = tpu.matmul %179, %180, %cst_45 {dimension_numbers = #tpu.dot_dimension_numbers<[1], [0], [0], [1], [0, 0, 1, 1], [], []>} : vector<16x32xf32>, vector<32x128xf32>, vector<16x128xf32> -> vector<16x128xf32>
    %184 = vector.broadcast %182 : vector<1x128xf32> to vector<16x128xf32>
    %185 = arith.addf %183, %184 : vector<16x128xf32>
    %c1 = arith.constant 1 : index
    %c0_46 = arith.constant 0 : index
    %c0_47 = arith.constant 0 : index
    %186 = vector.load %arg1[%c1, %c0_46, %c0_47] : memref<4x2x32xf32, #tpu.memory_space<vmem>>, vector<1x2x32xf32>
    %187 = vector.shape_cast %186 : vector<1x2x32xf32> to vector<2x32xf32>
    %c3 = arith.constant 3 : index
    %c0_48 = arith.constant 0 : index
    %c0_49 = arith.constant 0 : index
    %188 = vector.load %arg1[%c3, %c0_48, %c0_49] : memref<4x2x32xf32, #tpu.memory_space<vmem>>, vector<1x2x32xf32>
    %189 = vector.shape_cast %188 : vector<1x2x32xf32> to vector<2x32xf32>
    %190 = vector.extract_strided_slice %185 {offsets = [0, 0], sizes = [2, 128], strides = [1, 1]} : vector<16x128xf32> to vector<2x128xf32>
    %cst_50 = arith.constant dense<0.000000e+00> : vector<2x128xf32>
    %191 = tpu.matmul %187, %181, %cst_50 {dimension_numbers = #tpu.dot_dimension_numbers<[1], [0], [0], [1], [0, 0, 1, 1], [], []>} : vector<2x32xf32>, vector<32x128xf32>, vector<2x128xf32> -> vector<2x128xf32>
    %192 = arith.addf %190, %191 : vector<2x128xf32>
    %193 = arith.negf %192 : vector<2x128xf32>
    %194 = math.exp %193 : vector<2x128xf32>
    %cst_51 = arith.constant 1.000000e+00 : f32
    %195 = vector.broadcast %cst_51 : f32 to vector<2x128xf32>
    %196 = arith.addf %195, %194 : vector<2x128xf32>
    %197 = arith.divf %195, %196 : vector<2x128xf32>
    %198 = vector.extract_strided_slice %197 {offsets = [0, 0], sizes = [2, 32], strides = [1, 1]} : vector<2x128xf32> to vector<2x32xf32>
    %199 = vector.extract_strided_slice %197 {offsets = [0, 32], sizes = [2, 32], strides = [1, 1]} : vector<2x128xf32> to vector<2x32xf32>
    %200 = vector.extract_strided_slice %197 {offsets = [0, 64], sizes = [2, 32], strides = [1, 1]} : vector<2x128xf32> to vector<2x32xf32>
    %cst_52 = arith.constant 2.000000e+00 : f32
    %201 = vector.broadcast %cst_52 : f32 to vector<2x32xf32>
    %202 = arith.mulf %201, %200 : vector<2x32xf32>
    %cst_53 = arith.constant 1.000000e+00 : f32
    %203 = vector.broadcast %cst_53 : f32 to vector<2x32xf32>
    %204 = arith.subf %202, %203 : vector<2x32xf32>
    %205 = vector.extract_strided_slice %197 {offsets = [0, 96], sizes = [2, 32], strides = [1, 1]} : vector<2x128xf32> to vector<2x32xf32>
    %206 = arith.mulf %199, %189 : vector<2x32xf32>
    %207 = arith.mulf %198, %204 : vector<2x32xf32>
    %208 = arith.addf %206, %207 : vector<2x32xf32>
    %209 = math.tanh %208 : vector<2x32xf32>
    %210 = arith.mulf %205, %209 : vector<2x32xf32>
    %211 = vector.extract_strided_slice %185 {offsets = [2, 0], sizes = [2, 128], strides = [1, 1]} : vector<16x128xf32> to vector<2x128xf32>
    %cst_54 = arith.constant dense<0.000000e+00> : vector<2x128xf32>
    %212 = tpu.matmul %210, %181, %cst_54 {dimension_numbers = #tpu.dot_dimension_numbers<[1], [0], [0], [1], [0, 0, 1, 1], [], []>} : vector<2x32xf32>, vector<32x128xf32>, vector<2x128xf32> -> vector<2x128xf32>
    %213 = arith.addf %211, %212 : vector<2x128xf32>
    %214 = arith.negf %213 : vector<2x128xf32>
    %215 = math.exp %214 : vector<2x128xf32>
    %cst_55 = arith.constant 1.000000e+00 : f32
    %216 = vector.broadcast %cst_55 : f32 to vector<2x128xf32>
    %217 = arith.addf %216, %215 : vector<2x128xf32>
    %218 = arith.divf %216, %217 : vector<2x128xf32>
    %219 = vector.extract_strided_slice %218 {offsets = [0, 0], sizes = [2, 32], strides = [1, 1]} : vector<2x128xf32> to vector<2x32xf32>
    %220 = vector.extract_strided_slice %218 {offsets = [0, 32], sizes = [2, 32], strides = [1, 1]} : vector<2x128xf32> to vector<2x32xf32>
    %221 = vector.extract_strided_slice %218 {offsets = [0, 64], sizes = [2, 32], strides = [1, 1]} : vector<2x128xf32> to vector<2x32xf32>
    %cst_56 = arith.constant 2.000000e+00 : f32
    %222 = vector.broadcast %cst_56 : f32 to vector<2x32xf32>
    %223 = arith.mulf %222, %221 : vector<2x32xf32>
    %cst_57 = arith.constant 1.000000e+00 : f32
    %224 = vector.broadcast %cst_57 : f32 to vector<2x32xf32>
    %225 = arith.subf %223, %224 : vector<2x32xf32>
    %226 = vector.extract_strided_slice %218 {offsets = [0, 96], sizes = [2, 32], strides = [1, 1]} : vector<2x128xf32> to vector<2x32xf32>
    %227 = arith.mulf %220, %208 : vector<2x32xf32>
    %228 = arith.mulf %219, %225 : vector<2x32xf32>
    %229 = arith.addf %227, %228 : vector<2x32xf32>
    %230 = math.tanh %229 : vector<2x32xf32>
    %231 = arith.mulf %226, %230 : vector<2x32xf32>
    %232 = vector.extract_strided_slice %185 {offsets = [4, 0], sizes = [2, 128], strides = [1, 1]} : vector<16x128xf32> to vector<2x128xf32>
    %cst_58 = arith.constant dense<0.000000e+00> : vector<2x128xf32>
    %233 = tpu.matmul %231, %181, %cst_58 {dimension_numbers = #tpu.dot_dimension_numbers<[1], [0], [0], [1], [0, 0, 1, 1], [], []>} : vector<2x32xf32>, vector<32x128xf32>, vector<2x128xf32> -> vector<2x128xf32>
    %234 = arith.addf %232, %233 : vector<2x128xf32>
    %235 = arith.negf %234 : vector<2x128xf32>
    %236 = math.exp %235 : vector<2x128xf32>
    %cst_59 = arith.constant 1.000000e+00 : f32
    %237 = vector.broadcast %cst_59 : f32 to vector<2x128xf32>
    %238 = arith.addf %237, %236 : vector<2x128xf32>
    %239 = arith.divf %237, %238 : vector<2x128xf32>
    %240 = vector.extract_strided_slice %239 {offsets = [0, 0], sizes = [2, 32], strides = [1, 1]} : vector<2x128xf32> to vector<2x32xf32>
    %241 = vector.extract_strided_slice %239 {offsets = [0, 32], sizes = [2, 32], strides = [1, 1]} : vector<2x128xf32> to vector<2x32xf32>
    %242 = vector.extract_strided_slice %239 {offsets = [0, 64], sizes = [2, 32], strides = [1, 1]} : vector<2x128xf32> to vector<2x32xf32>
    %cst_60 = arith.constant 2.000000e+00 : f32
    %243 = vector.broadcast %cst_60 : f32 to vector<2x32xf32>
    %244 = arith.mulf %243, %242 : vector<2x32xf32>
    %cst_61 = arith.constant 1.000000e+00 : f32
    %245 = vector.broadcast %cst_61 : f32 to vector<2x32xf32>
    %246 = arith.subf %244, %245 : vector<2x32xf32>
    %247 = vector.extract_strided_slice %239 {offsets = [0, 96], sizes = [2, 32], strides = [1, 1]} : vector<2x128xf32> to vector<2x32xf32>
    %248 = arith.mulf %241, %229 : vector<2x32xf32>
    %249 = arith.mulf %240, %246 : vector<2x32xf32>
    %250 = arith.addf %248, %249 : vector<2x32xf32>
    %251 = math.tanh %250 : vector<2x32xf32>
    %252 = arith.mulf %247, %251 : vector<2x32xf32>
    %253 = vector.extract_strided_slice %185 {offsets = [6, 0], sizes = [2, 128], strides = [1, 1]} : vector<16x128xf32> to vector<2x128xf32>
    %cst_62 = arith.constant dense<0.000000e+00> : vector<2x128xf32>
    %254 = tpu.matmul %252, %181, %cst_62 {dimension_numbers = #tpu.dot_dimension_numbers<[1], [0], [0], [1], [0, 0, 1, 1], [], []>} : vector<2x32xf32>, vector<32x128xf32>, vector<2x128xf32> -> vector<2x128xf32>
    %255 = arith.addf %253, %254 : vector<2x128xf32>
    %256 = arith.negf %255 : vector<2x128xf32>
    %257 = math.exp %256 : vector<2x128xf32>
    %cst_63 = arith.constant 1.000000e+00 : f32
    %258 = vector.broadcast %cst_63 : f32 to vector<2x128xf32>
    %259 = arith.addf %258, %257 : vector<2x128xf32>
    %260 = arith.divf %258, %259 : vector<2x128xf32>
    %261 = vector.extract_strided_slice %260 {offsets = [0, 0], sizes = [2, 32], strides = [1, 1]} : vector<2x128xf32> to vector<2x32xf32>
    %262 = vector.extract_strided_slice %260 {offsets = [0, 32], sizes = [2, 32], strides = [1, 1]} : vector<2x128xf32> to vector<2x32xf32>
    %263 = vector.extract_strided_slice %260 {offsets = [0, 64], sizes = [2, 32], strides = [1, 1]} : vector<2x128xf32> to vector<2x32xf32>
    %cst_64 = arith.constant 2.000000e+00 : f32
    %264 = vector.broadcast %cst_64 : f32 to vector<2x32xf32>
    %265 = arith.mulf %264, %263 : vector<2x32xf32>
    %cst_65 = arith.constant 1.000000e+00 : f32
    %266 = vector.broadcast %cst_65 : f32 to vector<2x32xf32>
    %267 = arith.subf %265, %266 : vector<2x32xf32>
    %268 = vector.extract_strided_slice %260 {offsets = [0, 96], sizes = [2, 32], strides = [1, 1]} : vector<2x128xf32> to vector<2x32xf32>
    %269 = arith.mulf %262, %250 : vector<2x32xf32>
    %270 = arith.mulf %261, %267 : vector<2x32xf32>
    %271 = arith.addf %269, %270 : vector<2x32xf32>
    %272 = math.tanh %271 : vector<2x32xf32>
    %273 = arith.mulf %268, %272 : vector<2x32xf32>
    %274 = vector.extract_strided_slice %185 {offsets = [8, 0], sizes = [2, 128], strides = [1, 1]} : vector<16x128xf32> to vector<2x128xf32>
    %cst_66 = arith.constant dense<0.000000e+00> : vector<2x128xf32>
    %275 = tpu.matmul %273, %181, %cst_66 {dimension_numbers = #tpu.dot_dimension_numbers<[1], [0], [0], [1], [0, 0, 1, 1], [], []>} : vector<2x32xf32>, vector<32x128xf32>, vector<2x128xf32> -> vector<2x128xf32>
    %276 = arith.addf %274, %275 : vector<2x128xf32>
    %277 = arith.negf %276 : vector<2x128xf32>
    %278 = math.exp %277 : vector<2x128xf32>
    %cst_67 = arith.constant 1.000000e+00 : f32
    %279 = vector.broadcast %cst_67 : f32 to vector<2x128xf32>
    %280 = arith.addf %279, %278 : vector<2x128xf32>
    %281 = arith.divf %279, %280 : vector<2x128xf32>
    %282 = vector.extract_strided_slice %281 {offsets = [0, 0], sizes = [2, 32], strides = [1, 1]} : vector<2x128xf32> to vector<2x32xf32>
    %283 = vector.extract_strided_slice %281 {offsets = [0, 32], sizes = [2, 32], strides = [1, 1]} : vector<2x128xf32> to vector<2x32xf32>
    %284 = vector.extract_strided_slice %281 {offsets = [0, 64], sizes = [2, 32], strides = [1, 1]} : vector<2x128xf32> to vector<2x32xf32>
    %cst_68 = arith.constant 2.000000e+00 : f32
    %285 = vector.broadcast %cst_68 : f32 to vector<2x32xf32>
    %286 = arith.mulf %285, %284 : vector<2x32xf32>
    %cst_69 = arith.constant 1.000000e+00 : f32
    %287 = vector.broadcast %cst_69 : f32 to vector<2x32xf32>
    %288 = arith.subf %286, %287 : vector<2x32xf32>
    %289 = vector.extract_strided_slice %281 {offsets = [0, 96], sizes = [2, 32], strides = [1, 1]} : vector<2x128xf32> to vector<2x32xf32>
    %290 = arith.mulf %283, %271 : vector<2x32xf32>
    %291 = arith.mulf %282, %288 : vector<2x32xf32>
    %292 = arith.addf %290, %291 : vector<2x32xf32>
    %293 = math.tanh %292 : vector<2x32xf32>
    %294 = arith.mulf %289, %293 : vector<2x32xf32>
    %295 = vector.extract_strided_slice %185 {offsets = [10, 0], sizes = [2, 128], strides = [1, 1]} : vector<16x128xf32> to vector<2x128xf32>
    %cst_70 = arith.constant dense<0.000000e+00> : vector<2x128xf32>
    %296 = tpu.matmul %294, %181, %cst_70 {dimension_numbers = #tpu.dot_dimension_numbers<[1], [0], [0], [1], [0, 0, 1, 1], [], []>} : vector<2x32xf32>, vector<32x128xf32>, vector<2x128xf32> -> vector<2x128xf32>
    %297 = arith.addf %295, %296 : vector<2x128xf32>
    %298 = arith.negf %297 : vector<2x128xf32>
    %299 = math.exp %298 : vector<2x128xf32>
    %cst_71 = arith.constant 1.000000e+00 : f32
    %300 = vector.broadcast %cst_71 : f32 to vector<2x128xf32>
    %301 = arith.addf %300, %299 : vector<2x128xf32>
    %302 = arith.divf %300, %301 : vector<2x128xf32>
    %303 = vector.extract_strided_slice %302 {offsets = [0, 0], sizes = [2, 32], strides = [1, 1]} : vector<2x128xf32> to vector<2x32xf32>
    %304 = vector.extract_strided_slice %302 {offsets = [0, 32], sizes = [2, 32], strides = [1, 1]} : vector<2x128xf32> to vector<2x32xf32>
    %305 = vector.extract_strided_slice %302 {offsets = [0, 64], sizes = [2, 32], strides = [1, 1]} : vector<2x128xf32> to vector<2x32xf32>
    %cst_72 = arith.constant 2.000000e+00 : f32
    %306 = vector.broadcast %cst_72 : f32 to vector<2x32xf32>
    %307 = arith.mulf %306, %305 : vector<2x32xf32>
    %cst_73 = arith.constant 1.000000e+00 : f32
    %308 = vector.broadcast %cst_73 : f32 to vector<2x32xf32>
    %309 = arith.subf %307, %308 : vector<2x32xf32>
    %310 = vector.extract_strided_slice %302 {offsets = [0, 96], sizes = [2, 32], strides = [1, 1]} : vector<2x128xf32> to vector<2x32xf32>
    %311 = arith.mulf %304, %292 : vector<2x32xf32>
    %312 = arith.mulf %303, %309 : vector<2x32xf32>
    %313 = arith.addf %311, %312 : vector<2x32xf32>
    %314 = math.tanh %313 : vector<2x32xf32>
    %315 = arith.mulf %310, %314 : vector<2x32xf32>
    %316 = vector.extract_strided_slice %185 {offsets = [12, 0], sizes = [2, 128], strides = [1, 1]} : vector<16x128xf32> to vector<2x128xf32>
    %cst_74 = arith.constant dense<0.000000e+00> : vector<2x128xf32>
    %317 = tpu.matmul %315, %181, %cst_74 {dimension_numbers = #tpu.dot_dimension_numbers<[1], [0], [0], [1], [0, 0, 1, 1], [], []>} : vector<2x32xf32>, vector<32x128xf32>, vector<2x128xf32> -> vector<2x128xf32>
    %318 = arith.addf %316, %317 : vector<2x128xf32>
    %319 = arith.negf %318 : vector<2x128xf32>
    %320 = math.exp %319 : vector<2x128xf32>
    %cst_75 = arith.constant 1.000000e+00 : f32
    %321 = vector.broadcast %cst_75 : f32 to vector<2x128xf32>
    %322 = arith.addf %321, %320 : vector<2x128xf32>
    %323 = arith.divf %321, %322 : vector<2x128xf32>
    %324 = vector.extract_strided_slice %323 {offsets = [0, 0], sizes = [2, 32], strides = [1, 1]} : vector<2x128xf32> to vector<2x32xf32>
    %325 = vector.extract_strided_slice %323 {offsets = [0, 32], sizes = [2, 32], strides = [1, 1]} : vector<2x128xf32> to vector<2x32xf32>
    %326 = vector.extract_strided_slice %323 {offsets = [0, 64], sizes = [2, 32], strides = [1, 1]} : vector<2x128xf32> to vector<2x32xf32>
    %cst_76 = arith.constant 2.000000e+00 : f32
    %327 = vector.broadcast %cst_76 : f32 to vector<2x32xf32>
    %328 = arith.mulf %327, %326 : vector<2x32xf32>
    %cst_77 = arith.constant 1.000000e+00 : f32
    %329 = vector.broadcast %cst_77 : f32 to vector<2x32xf32>
    %330 = arith.subf %328, %329 : vector<2x32xf32>
    %331 = vector.extract_strided_slice %323 {offsets = [0, 96], sizes = [2, 32], strides = [1, 1]} : vector<2x128xf32> to vector<2x32xf32>
    %332 = arith.mulf %325, %313 : vector<2x32xf32>
    %333 = arith.mulf %324, %330 : vector<2x32xf32>
    %334 = arith.addf %332, %333 : vector<2x32xf32>
    %335 = math.tanh %334 : vector<2x32xf32>
    %336 = arith.mulf %331, %335 : vector<2x32xf32>
    %337 = vector.extract_strided_slice %185 {offsets = [14, 0], sizes = [2, 128], strides = [1, 1]} : vector<16x128xf32> to vector<2x128xf32>
    %cst_78 = arith.constant dense<0.000000e+00> : vector<2x128xf32>
    %338 = tpu.matmul %336, %181, %cst_78 {dimension_numbers = #tpu.dot_dimension_numbers<[1], [0], [0], [1], [0, 0, 1, 1], [], []>} : vector<2x32xf32>, vector<32x128xf32>, vector<2x128xf32> -> vector<2x128xf32>
    %339 = arith.addf %337, %338 : vector<2x128xf32>
    %340 = arith.negf %339 : vector<2x128xf32>
    %341 = math.exp %340 : vector<2x128xf32>
    %cst_79 = arith.constant 1.000000e+00 : f32
    %342 = vector.broadcast %cst_79 : f32 to vector<2x128xf32>
    %343 = arith.addf %342, %341 : vector<2x128xf32>
    %344 = arith.divf %342, %343 : vector<2x128xf32>
    %345 = vector.extract_strided_slice %344 {offsets = [0, 0], sizes = [2, 32], strides = [1, 1]} : vector<2x128xf32> to vector<2x32xf32>
    %346 = vector.extract_strided_slice %344 {offsets = [0, 32], sizes = [2, 32], strides = [1, 1]} : vector<2x128xf32> to vector<2x32xf32>
    %347 = vector.extract_strided_slice %344 {offsets = [0, 64], sizes = [2, 32], strides = [1, 1]} : vector<2x128xf32> to vector<2x32xf32>
    %cst_80 = arith.constant 2.000000e+00 : f32
    %348 = vector.broadcast %cst_80 : f32 to vector<2x32xf32>
    %349 = arith.mulf %348, %347 : vector<2x32xf32>
    %cst_81 = arith.constant 1.000000e+00 : f32
    %350 = vector.broadcast %cst_81 : f32 to vector<2x32xf32>
    %351 = arith.subf %349, %350 : vector<2x32xf32>
    %352 = vector.extract_strided_slice %344 {offsets = [0, 96], sizes = [2, 32], strides = [1, 1]} : vector<2x128xf32> to vector<2x32xf32>
    %353 = arith.mulf %346, %334 : vector<2x32xf32>
    %354 = arith.mulf %345, %351 : vector<2x32xf32>
    %355 = arith.addf %353, %354 : vector<2x32xf32>
    %356 = math.tanh %355 : vector<2x32xf32>
    %357 = arith.mulf %352, %356 : vector<2x32xf32>
    %c120 = arith.constant 120 : index
    %c0_82 = arith.constant 0 : index
    %358 = vector.load %arg2[%c120, %c0_82] : memref<320x128xf32, #tpu.memory_space<vmem>>, vector<4x128xf32>
    %c128 = arith.constant 128 : index
    %c0_83 = arith.constant 0 : index
    %359 = vector.load %arg2[%c128, %c0_83] : memref<320x128xf32, #tpu.memory_space<vmem>>, vector<32x128xf32>
    %c160 = arith.constant 160 : index
    %c0_84 = arith.constant 0 : index
    %360 = vector.load %arg2[%c160, %c0_84] : memref<320x128xf32, #tpu.memory_space<vmem>>, vector<1x128xf32>
    %c168 = arith.constant 168 : index
    %c0_85 = arith.constant 0 : index
    %361 = vector.load %arg2[%c168, %c0_85] : memref<320x128xf32, #tpu.memory_space<vmem>>, vector<32x128xf32>
    %c200 = arith.constant 200 : index
    %c0_86 = arith.constant 0 : index
    %362 = vector.load %arg2[%c200, %c0_86] : memref<320x128xf32, #tpu.memory_space<vmem>>, vector<1x128xf32>
    %363 = vector.shape_cast %362 : vector<1x128xf32> to vector<1x128xf32>
    %364 = vector.broadcast %363 : vector<1x128xf32> to vector<2x128xf32>
    %c208 = arith.constant 208 : index
    %c0_87 = arith.constant 0 : index
    %365 = vector.load %arg2[%c208, %c0_87] : memref<320x128xf32, #tpu.memory_space<vmem>>, vector<32x128xf32>
    %c240 = arith.constant 240 : index
    %c0_88 = arith.constant 0 : index
    %366 = vector.load %arg2[%c240, %c0_88] : memref<320x128xf32, #tpu.memory_space<vmem>>, vector<32x128xf32>
    %c272 = arith.constant 272 : index
    %c0_89 = arith.constant 0 : index
    %367 = vector.load %arg2[%c272, %c0_89] : memref<320x128xf32, #tpu.memory_space<vmem>>, vector<1x128xf32>
    %368 = vector.shape_cast %367 : vector<1x128xf32> to vector<1x128xf32>
    %369 = vector.broadcast %368 : vector<1x128xf32> to vector<2x128xf32>
    %c280 = arith.constant 280 : index
    %c0_90 = arith.constant 0 : index
    %370 = vector.load %arg2[%c280, %c0_90] : memref<320x128xf32, #tpu.memory_space<vmem>>, vector<32x128xf32>
    %c312 = arith.constant 312 : index
    %c0_91 = arith.constant 0 : index
    %371 = vector.load %arg2[%c312, %c0_91] : memref<320x128xf32, #tpu.memory_space<vmem>>, vector<1x128xf32>
    %372 = vector.shape_cast %371 : vector<1x128xf32> to vector<1x128xf32>
    %373 = vector.broadcast %372 : vector<1x128xf32> to vector<2x128xf32>
    %c14 = arith.constant 14 : index
    %c0_92 = arith.constant 0 : index
    %374 = vector.load %arg0[%c14, %c0_92] : memref<16x4xf32, #tpu.memory_space<vmem>>, vector<2x4xf32>
    %cst_93 = arith.constant dense<0.000000e+00> : vector<2x128xf32>
    %375 = tpu.matmul %374, %358, %cst_93 {dimension_numbers = #tpu.dot_dimension_numbers<[1], [0], [0], [1], [0, 0, 1, 1], [], []>} : vector<2x4xf32>, vector<4x128xf32>, vector<2x128xf32> -> vector<2x128xf32>
    %cst_94 = arith.constant dense<0.000000e+00> : vector<2x128xf32>
    %376 = tpu.matmul %178, %359, %cst_94 {dimension_numbers = #tpu.dot_dimension_numbers<[1], [0], [0], [1], [0, 0, 1, 1], [], []>} : vector<2x32xf32>, vector<32x128xf32>, vector<2x128xf32> -> vector<2x128xf32>
    %377 = arith.addf %375, %376 : vector<2x128xf32>
    %378 = vector.broadcast %360 : vector<1x128xf32> to vector<2x128xf32>
    %379 = arith.addf %377, %378 : vector<2x128xf32>
    %380 = arith.negf %379 : vector<2x128xf32>
    %381 = math.exp %380 : vector<2x128xf32>
    %cst_95 = arith.constant 1.000000e+00 : f32
    %382 = vector.broadcast %cst_95 : f32 to vector<2x128xf32>
    %383 = arith.addf %382, %381 : vector<2x128xf32>
    %384 = arith.divf %382, %383 : vector<2x128xf32>
    %385 = vector.extract_strided_slice %384 {offsets = [0, 0], sizes = [2, 32], strides = [1, 1]} : vector<2x128xf32> to vector<2x32xf32>
    %386 = vector.extract_strided_slice %384 {offsets = [0, 32], sizes = [2, 32], strides = [1, 1]} : vector<2x128xf32> to vector<2x32xf32>
    %387 = vector.extract_strided_slice %384 {offsets = [0, 64], sizes = [2, 32], strides = [1, 1]} : vector<2x128xf32> to vector<2x32xf32>
    %cst_96 = arith.constant 2.000000e+00 : f32
    %388 = vector.broadcast %cst_96 : f32 to vector<2x32xf32>
    %389 = arith.mulf %388, %387 : vector<2x32xf32>
    %cst_97 = arith.constant 1.000000e+00 : f32
    %390 = vector.broadcast %cst_97 : f32 to vector<2x32xf32>
    %391 = arith.subf %389, %390 : vector<2x32xf32>
    %392 = vector.extract_strided_slice %384 {offsets = [0, 96], sizes = [2, 32], strides = [1, 1]} : vector<2x128xf32> to vector<2x32xf32>
    %393 = arith.mulf %386, %176 : vector<2x32xf32>
    %394 = arith.mulf %385, %391 : vector<2x32xf32>
    %395 = arith.addf %393, %394 : vector<2x32xf32>
    %396 = math.tanh %395 : vector<2x32xf32>
    %397 = arith.mulf %392, %396 : vector<2x32xf32>
    %cst_98 = arith.constant dense<0.000000e+00> : vector<2x128xf32>
    %398 = tpu.matmul %397, %365, %cst_98 {dimension_numbers = #tpu.dot_dimension_numbers<[1], [0], [0], [1], [0, 0, 1, 1], [], []>} : vector<2x32xf32>, vector<32x128xf32>, vector<2x128xf32> -> vector<2x128xf32>
    %cst_99 = arith.constant dense<0.000000e+00> : vector<2x128xf32>
    %399 = tpu.matmul %357, %366, %cst_99 {dimension_numbers = #tpu.dot_dimension_numbers<[1], [0], [0], [1], [0, 0, 1, 1], [], []>} : vector<2x32xf32>, vector<32x128xf32>, vector<2x128xf32> -> vector<2x128xf32>
    %400 = arith.addf %398, %399 : vector<2x128xf32>
    %401 = arith.addf %400, %369 : vector<2x128xf32>
    %402 = arith.negf %401 : vector<2x128xf32>
    %403 = math.exp %402 : vector<2x128xf32>
    %cst_100 = arith.constant 1.000000e+00 : f32
    %404 = vector.broadcast %cst_100 : f32 to vector<2x128xf32>
    %405 = arith.addf %404, %403 : vector<2x128xf32>
    %406 = arith.divf %404, %405 : vector<2x128xf32>
    %407 = vector.extract_strided_slice %406 {offsets = [0, 0], sizes = [2, 32], strides = [1, 1]} : vector<2x128xf32> to vector<2x32xf32>
    %408 = vector.extract_strided_slice %406 {offsets = [0, 32], sizes = [2, 32], strides = [1, 1]} : vector<2x128xf32> to vector<2x32xf32>
    %409 = vector.extract_strided_slice %406 {offsets = [0, 64], sizes = [2, 32], strides = [1, 1]} : vector<2x128xf32> to vector<2x32xf32>
    %cst_101 = arith.constant 2.000000e+00 : f32
    %410 = vector.broadcast %cst_101 : f32 to vector<2x32xf32>
    %411 = arith.mulf %410, %409 : vector<2x32xf32>
    %cst_102 = arith.constant 1.000000e+00 : f32
    %412 = vector.broadcast %cst_102 : f32 to vector<2x32xf32>
    %413 = arith.subf %411, %412 : vector<2x32xf32>
    %414 = vector.extract_strided_slice %406 {offsets = [0, 96], sizes = [2, 32], strides = [1, 1]} : vector<2x128xf32> to vector<2x32xf32>
    %415 = arith.mulf %408, %355 : vector<2x32xf32>
    %416 = arith.mulf %407, %413 : vector<2x32xf32>
    %417 = arith.addf %415, %416 : vector<2x32xf32>
    %418 = math.tanh %417 : vector<2x32xf32>
    %419 = arith.mulf %414, %418 : vector<2x32xf32>
    %cst_103 = arith.constant dense<0.000000e+00> : vector<2x128xf32>
    %420 = tpu.matmul %419, %370, %cst_103 {dimension_numbers = #tpu.dot_dimension_numbers<[1], [0], [0], [1], [0, 0, 1, 1], [], []>} : vector<2x32xf32>, vector<32x128xf32>, vector<2x128xf32> -> vector<2x128xf32>
    %421 = arith.addf %420, %373 : vector<2x128xf32>
    %422 = vector.extract_strided_slice %421 {offsets = [0, 0], sizes = [2, 4], strides = [1, 1]} : vector<2x128xf32> to vector<2x4xf32>
    %c0_104 = arith.constant 0 : index
    %c0_105 = arith.constant 0 : index
    %c0_106 = arith.constant 0 : index
    %423 = vector.load %arg3[%c0_104, %c0_105, %c0_106] : memref<4x2x4xf32, #tpu.memory_space<vmem>>, vector<1x2x4xf32>
    %424 = vector.shape_cast %423 : vector<1x2x4xf32> to vector<2x4xf32>
    %425 = vector.shape_cast %422 : vector<2x4xf32> to vector<1x2x4xf32>
    tpu.vector_store %arg3[%c0_104, %c0_105, %c0_106], %425 {strides = array<i32>} : memref<4x2x4xf32, #tpu.memory_space<vmem>>, vector<1x2x4xf32>,
    %cst_107 = arith.constant dense<0.000000e+00> : vector<2x128xf32>
    %426 = tpu.matmul %419, %361, %cst_107 {dimension_numbers = #tpu.dot_dimension_numbers<[1], [0], [0], [1], [0, 0, 1, 1], [], []>} : vector<2x32xf32>, vector<32x128xf32>, vector<2x128xf32> -> vector<2x128xf32>
    %cst_108 = arith.constant dense<0.000000e+00> : vector<2x128xf32>
    %427 = tpu.matmul %397, %359, %cst_108 {dimension_numbers = #tpu.dot_dimension_numbers<[1], [0], [0], [1], [0, 0, 1, 1], [], []>} : vector<2x32xf32>, vector<32x128xf32>, vector<2x128xf32> -> vector<2x128xf32>
    %428 = arith.addf %426, %427 : vector<2x128xf32>
    %429 = arith.addf %428, %364 : vector<2x128xf32>
    %430 = arith.negf %429 : vector<2x128xf32>
    %431 = math.exp %430 : vector<2x128xf32>
    %cst_109 = arith.constant 1.000000e+00 : f32
    %432 = vector.broadcast %cst_109 : f32 to vector<2x128xf32>
    %433 = arith.addf %432, %431 : vector<2x128xf32>
    %434 = arith.divf %432, %433 : vector<2x128xf32>
    %435 = vector.extract_strided_slice %434 {offsets = [0, 0], sizes = [2, 32], strides = [1, 1]} : vector<2x128xf32> to vector<2x32xf32>
    %436 = vector.extract_strided_slice %434 {offsets = [0, 32], sizes = [2, 32], strides = [1, 1]} : vector<2x128xf32> to vector<2x32xf32>
    %437 = vector.extract_strided_slice %434 {offsets = [0, 64], sizes = [2, 32], strides = [1, 1]} : vector<2x128xf32> to vector<2x32xf32>
    %cst_110 = arith.constant 2.000000e+00 : f32
    %438 = vector.broadcast %cst_110 : f32 to vector<2x32xf32>
    %439 = arith.mulf %438, %437 : vector<2x32xf32>
    %cst_111 = arith.constant 1.000000e+00 : f32
    %440 = vector.broadcast %cst_111 : f32 to vector<2x32xf32>
    %441 = arith.subf %439, %440 : vector<2x32xf32>
    %442 = vector.extract_strided_slice %434 {offsets = [0, 96], sizes = [2, 32], strides = [1, 1]} : vector<2x128xf32> to vector<2x32xf32>
    %443 = arith.mulf %436, %395 : vector<2x32xf32>
    %444 = arith.mulf %435, %441 : vector<2x32xf32>
    %445 = arith.addf %443, %444 : vector<2x32xf32>
    %446 = math.tanh %445 : vector<2x32xf32>
    %447 = arith.mulf %442, %446 : vector<2x32xf32>
    %cst_112 = arith.constant dense<0.000000e+00> : vector<2x128xf32>
    %448 = tpu.matmul %447, %365, %cst_112 {dimension_numbers = #tpu.dot_dimension_numbers<[1], [0], [0], [1], [0, 0, 1, 1], [], []>} : vector<2x32xf32>, vector<32x128xf32>, vector<2x128xf32> -> vector<2x128xf32>
    %cst_113 = arith.constant dense<0.000000e+00> : vector<2x128xf32>
    %449 = tpu.matmul %419, %366, %cst_113 {dimension_numbers = #tpu.dot_dimension_numbers<[1], [0], [0], [1], [0, 0, 1, 1], [], []>} : vector<2x32xf32>, vector<32x128xf32>, vector<2x128xf32> -> vector<2x128xf32>
    %450 = arith.addf %448, %449 : vector<2x128xf32>
    %451 = arith.addf %450, %369 : vector<2x128xf32>
    %452 = arith.negf %451 : vector<2x128xf32>
    %453 = math.exp %452 : vector<2x128xf32>
    %cst_114 = arith.constant 1.000000e+00 : f32
    %454 = vector.broadcast %cst_114 : f32 to vector<2x128xf32>
    %455 = arith.addf %454, %453 : vector<2x128xf32>
    %456 = arith.divf %454, %455 : vector<2x128xf32>
    %457 = vector.extract_strided_slice %456 {offsets = [0, 0], sizes = [2, 32], strides = [1, 1]} : vector<2x128xf32> to vector<2x32xf32>
    %458 = vector.extract_strided_slice %456 {offsets = [0, 32], sizes = [2, 32], strides = [1, 1]} : vector<2x128xf32> to vector<2x32xf32>
    %459 = vector.extract_strided_slice %456 {offsets = [0, 64], sizes = [2, 32], strides = [1, 1]} : vector<2x128xf32> to vector<2x32xf32>
    %cst_115 = arith.constant 2.000000e+00 : f32
    %460 = vector.broadcast %cst_115 : f32 to vector<2x32xf32>
    %461 = arith.mulf %460, %459 : vector<2x32xf32>
    %cst_116 = arith.constant 1.000000e+00 : f32
    %462 = vector.broadcast %cst_116 : f32 to vector<2x32xf32>
    %463 = arith.subf %461, %462 : vector<2x32xf32>
    %464 = vector.extract_strided_slice %456 {offsets = [0, 96], sizes = [2, 32], strides = [1, 1]} : vector<2x128xf32> to vector<2x32xf32>
    %465 = arith.mulf %458, %417 : vector<2x32xf32>
    %466 = arith.mulf %457, %463 : vector<2x32xf32>
    %467 = arith.addf %465, %466 : vector<2x32xf32>
    %468 = math.tanh %467 : vector<2x32xf32>
    %469 = arith.mulf %464, %468 : vector<2x32xf32>
    %cst_117 = arith.constant dense<0.000000e+00> : vector<2x128xf32>
    %470 = tpu.matmul %469, %370, %cst_117 {dimension_numbers = #tpu.dot_dimension_numbers<[1], [0], [0], [1], [0, 0, 1, 1], [], []>} : vector<2x32xf32>, vector<32x128xf32>, vector<2x128xf32> -> vector<2x128xf32>
    %471 = arith.addf %470, %373 : vector<2x128xf32>
    %472 = vector.extract_strided_slice %471 {offsets = [0, 0], sizes = [2, 4], strides = [1, 1]} : vector<2x128xf32> to vector<2x4xf32>
    %c1_118 = arith.constant 1 : index
    %c0_119 = arith.constant 0 : index
    %c0_120 = arith.constant 0 : index
    %473 = vector.load %arg3[%c1_118, %c0_119, %c0_120] : memref<4x2x4xf32, #tpu.memory_space<vmem>>, vector<1x2x4xf32>
    %474 = vector.shape_cast %473 : vector<1x2x4xf32> to vector<2x4xf32>
    %475 = vector.shape_cast %472 : vector<2x4xf32> to vector<1x2x4xf32>
    tpu.vector_store %arg3[%c1_118, %c0_119, %c0_120], %475 {strides = array<i32>} : memref<4x2x4xf32, #tpu.memory_space<vmem>>, vector<1x2x4xf32>,
    %cst_121 = arith.constant dense<0.000000e+00> : vector<2x128xf32>
    %476 = tpu.matmul %469, %361, %cst_121 {dimension_numbers = #tpu.dot_dimension_numbers<[1], [0], [0], [1], [0, 0, 1, 1], [], []>} : vector<2x32xf32>, vector<32x128xf32>, vector<2x128xf32> -> vector<2x128xf32>
    %cst_122 = arith.constant dense<0.000000e+00> : vector<2x128xf32>
    %477 = tpu.matmul %447, %359, %cst_122 {dimension_numbers = #tpu.dot_dimension_numbers<[1], [0], [0], [1], [0, 0, 1, 1], [], []>} : vector<2x32xf32>, vector<32x128xf32>, vector<2x128xf32> -> vector<2x128xf32>
    %478 = arith.addf %476, %477 : vector<2x128xf32>
    %479 = arith.addf %478, %364 : vector<2x128xf32>
    %480 = arith.negf %479 : vector<2x128xf32>
    %481 = math.exp %480 : vector<2x128xf32>
    %cst_123 = arith.constant 1.000000e+00 : f32
    %482 = vector.broadcast %cst_123 : f32 to vector<2x128xf32>
    %483 = arith.addf %482, %481 : vector<2x128xf32>
    %484 = arith.divf %482, %483 : vector<2x128xf32>
    %485 = vector.extract_strided_slice %484 {offsets = [0, 0], sizes = [2, 32], strides = [1, 1]} : vector<2x128xf32> to vector<2x32xf32>
    %486 = vector.extract_strided_slice %484 {offsets = [0, 32], sizes = [2, 32], strides = [1, 1]} : vector<2x128xf32> to vector<2x32xf32>
    %487 = vector.extract_strided_slice %484 {offsets = [0, 64], sizes = [2, 32], strides = [1, 1]} : vector<2x128xf32> to vector<2x32xf32>
    %cst_124 = arith.constant 2.000000e+00 : f32
    %488 = vector.broadcast %cst_124 : f32 to vector<2x32xf32>
    %489 = arith.mulf %488, %487 : vector<2x32xf32>
    %cst_125 = arith.constant 1.000000e+00 : f32
    %490 = vector.broadcast %cst_125 : f32 to vector<2x32xf32>
    %491 = arith.subf %489, %490 : vector<2x32xf32>
    %492 = vector.extract_strided_slice %484 {offsets = [0, 96], sizes = [2, 32], strides = [1, 1]} : vector<2x128xf32> to vector<2x32xf32>
    %493 = arith.mulf %486, %445 : vector<2x32xf32>
    %494 = arith.mulf %485, %491 : vector<2x32xf32>
    %495 = arith.addf %493, %494 : vector<2x32xf32>
    %496 = math.tanh %495 : vector<2x32xf32>
    %497 = arith.mulf %492, %496 : vector<2x32xf32>
    %cst_126 = arith.constant dense<0.000000e+00> : vector<2x128xf32>
    %498 = tpu.matmul %497, %365, %cst_126 {dimension_numbers = #tpu.dot_dimension_numbers<[1], [0], [0], [1], [0, 0, 1, 1], [], []>} : vector<2x32xf32>, vector<32x128xf32>, vector<2x128xf32> -> vector<2x128xf32>
    %cst_127 = arith.constant dense<0.000000e+00> : vector<2x128xf32>
    %499 = tpu.matmul %469, %366, %cst_127 {dimension_numbers = #tpu.dot_dimension_numbers<[1], [0], [0], [1], [0, 0, 1, 1], [], []>} : vector<2x32xf32>, vector<32x128xf32>, vector<2x128xf32> -> vector<2x128xf32>
    %500 = arith.addf %498, %499 : vector<2x128xf32>
    %501 = arith.addf %500, %369 : vector<2x128xf32>
    %502 = arith.negf %501 : vector<2x128xf32>
    %503 = math.exp %502 : vector<2x128xf32>
    %cst_128 = arith.constant 1.000000e+00 : f32
    %504 = vector.broadcast %cst_128 : f32 to vector<2x128xf32>
    %505 = arith.addf %504, %503 : vector<2x128xf32>
    %506 = arith.divf %504, %505 : vector<2x128xf32>
    %507 = vector.extract_strided_slice %506 {offsets = [0, 0], sizes = [2, 32], strides = [1, 1]} : vector<2x128xf32> to vector<2x32xf32>
    %508 = vector.extract_strided_slice %506 {offsets = [0, 32], sizes = [2, 32], strides = [1, 1]} : vector<2x128xf32> to vector<2x32xf32>
    %509 = vector.extract_strided_slice %506 {offsets = [0, 64], sizes = [2, 32], strides = [1, 1]} : vector<2x128xf32> to vector<2x32xf32>
    %cst_129 = arith.constant 2.000000e+00 : f32
    %510 = vector.broadcast %cst_129 : f32 to vector<2x32xf32>
    %511 = arith.mulf %510, %509 : vector<2x32xf32>
    %cst_130 = arith.constant 1.000000e+00 : f32
    %512 = vector.broadcast %cst_130 : f32 to vector<2x32xf32>
    %513 = arith.subf %511, %512 : vector<2x32xf32>
    %514 = vector.extract_strided_slice %506 {offsets = [0, 96], sizes = [2, 32], strides = [1, 1]} : vector<2x128xf32> to vector<2x32xf32>
    %515 = arith.mulf %508, %467 : vector<2x32xf32>
    %516 = arith.mulf %507, %513 : vector<2x32xf32>
    %517 = arith.addf %515, %516 : vector<2x32xf32>
    %518 = math.tanh %517 : vector<2x32xf32>
    %519 = arith.mulf %514, %518 : vector<2x32xf32>
    %cst_131 = arith.constant dense<0.000000e+00> : vector<2x128xf32>
    %520 = tpu.matmul %519, %370, %cst_131 {dimension_numbers = #tpu.dot_dimension_numbers<[1], [0], [0], [1], [0, 0, 1, 1], [], []>} : vector<2x32xf32>, vector<32x128xf32>, vector<2x128xf32> -> vector<2x128xf32>
    %521 = arith.addf %520, %373 : vector<2x128xf32>
    %522 = vector.extract_strided_slice %521 {offsets = [0, 0], sizes = [2, 4], strides = [1, 1]} : vector<2x128xf32> to vector<2x4xf32>
    %c2_132 = arith.constant 2 : index
    %c0_133 = arith.constant 0 : index
    %c0_134 = arith.constant 0 : index
    %523 = vector.load %arg3[%c2_132, %c0_133, %c0_134] : memref<4x2x4xf32, #tpu.memory_space<vmem>>, vector<1x2x4xf32>
    %524 = vector.shape_cast %523 : vector<1x2x4xf32> to vector<2x4xf32>
    %525 = vector.shape_cast %522 : vector<2x4xf32> to vector<1x2x4xf32>
    tpu.vector_store %arg3[%c2_132, %c0_133, %c0_134], %525 {strides = array<i32>} : memref<4x2x4xf32, #tpu.memory_space<vmem>>, vector<1x2x4xf32>,
    %cst_135 = arith.constant dense<0.000000e+00> : vector<2x128xf32>
    %526 = tpu.matmul %519, %361, %cst_135 {dimension_numbers = #tpu.dot_dimension_numbers<[1], [0], [0], [1], [0, 0, 1, 1], [], []>} : vector<2x32xf32>, vector<32x128xf32>, vector<2x128xf32> -> vector<2x128xf32>
    %cst_136 = arith.constant dense<0.000000e+00> : vector<2x128xf32>
    %527 = tpu.matmul %497, %359, %cst_136 {dimension_numbers = #tpu.dot_dimension_numbers<[1], [0], [0], [1], [0, 0, 1, 1], [], []>} : vector<2x32xf32>, vector<32x128xf32>, vector<2x128xf32> -> vector<2x128xf32>
    %528 = arith.addf %526, %527 : vector<2x128xf32>
    %529 = arith.addf %528, %364 : vector<2x128xf32>
    %530 = arith.negf %529 : vector<2x128xf32>
    %531 = math.exp %530 : vector<2x128xf32>
    %cst_137 = arith.constant 1.000000e+00 : f32
    %532 = vector.broadcast %cst_137 : f32 to vector<2x128xf32>
    %533 = arith.addf %532, %531 : vector<2x128xf32>
    %534 = arith.divf %532, %533 : vector<2x128xf32>
    %535 = vector.extract_strided_slice %534 {offsets = [0, 0], sizes = [2, 32], strides = [1, 1]} : vector<2x128xf32> to vector<2x32xf32>
    %536 = vector.extract_strided_slice %534 {offsets = [0, 32], sizes = [2, 32], strides = [1, 1]} : vector<2x128xf32> to vector<2x32xf32>
    %537 = vector.extract_strided_slice %534 {offsets = [0, 64], sizes = [2, 32], strides = [1, 1]} : vector<2x128xf32> to vector<2x32xf32>
    %cst_138 = arith.constant 2.000000e+00 : f32
    %538 = vector.broadcast %cst_138 : f32 to vector<2x32xf32>
    %539 = arith.mulf %538, %537 : vector<2x32xf32>
    %cst_139 = arith.constant 1.000000e+00 : f32
    %540 = vector.broadcast %cst_139 : f32 to vector<2x32xf32>
    %541 = arith.subf %539, %540 : vector<2x32xf32>
    %542 = vector.extract_strided_slice %534 {offsets = [0, 96], sizes = [2, 32], strides = [1, 1]} : vector<2x128xf32> to vector<2x32xf32>
    %543 = arith.mulf %536, %495 : vector<2x32xf32>
    %544 = arith.mulf %535, %541 : vector<2x32xf32>
    %545 = arith.addf %543, %544 : vector<2x32xf32>
    %546 = math.tanh %545 : vector<2x32xf32>
    %547 = arith.mulf %542, %546 : vector<2x32xf32>
    %cst_140 = arith.constant dense<0.000000e+00> : vector<2x128xf32>
    %548 = tpu.matmul %547, %365, %cst_140 {dimension_numbers = #tpu.dot_dimension_numbers<[1], [0], [0], [1], [0, 0, 1, 1], [], []>} : vector<2x32xf32>, vector<32x128xf32>, vector<2x128xf32> -> vector<2x128xf32>
    %cst_141 = arith.constant dense<0.000000e+00> : vector<2x128xf32>
    %549 = tpu.matmul %519, %366, %cst_141 {dimension_numbers = #tpu.dot_dimension_numbers<[1], [0], [0], [1], [0, 0, 1, 1], [], []>} : vector<2x32xf32>, vector<32x128xf32>, vector<2x128xf32> -> vector<2x128xf32>
    %550 = arith.addf %548, %549 : vector<2x128xf32>
    %551 = arith.addf %550, %369 : vector<2x128xf32>
    %552 = arith.negf %551 : vector<2x128xf32>
    %553 = math.exp %552 : vector<2x128xf32>
    %cst_142 = arith.constant 1.000000e+00 : f32
    %554 = vector.broadcast %cst_142 : f32 to vector<2x128xf32>
    %555 = arith.addf %554, %553 : vector<2x128xf32>
    %556 = arith.divf %554, %555 : vector<2x128xf32>
    %557 = vector.extract_strided_slice %556 {offsets = [0, 0], sizes = [2, 32], strides = [1, 1]} : vector<2x128xf32> to vector<2x32xf32>
    %558 = vector.extract_strided_slice %556 {offsets = [0, 32], sizes = [2, 32], strides = [1, 1]} : vector<2x128xf32> to vector<2x32xf32>
    %559 = vector.extract_strided_slice %556 {offsets = [0, 64], sizes = [2, 32], strides = [1, 1]} : vector<2x128xf32> to vector<2x32xf32>
    %cst_143 = arith.constant 2.000000e+00 : f32
    %560 = vector.broadcast %cst_143 : f32 to vector<2x32xf32>
    %561 = arith.mulf %560, %559 : vector<2x32xf32>
    %cst_144 = arith.constant 1.000000e+00 : f32
    %562 = vector.broadcast %cst_144 : f32 to vector<2x32xf32>
    %563 = arith.subf %561, %562 : vector<2x32xf32>
    %564 = vector.extract_strided_slice %556 {offsets = [0, 96], sizes = [2, 32], strides = [1, 1]} : vector<2x128xf32> to vector<2x32xf32>
    %565 = arith.mulf %558, %517 : vector<2x32xf32>
    %566 = arith.mulf %557, %563 : vector<2x32xf32>
    %567 = arith.addf %565, %566 : vector<2x32xf32>
    %568 = math.tanh %567 : vector<2x32xf32>
    %569 = arith.mulf %564, %568 : vector<2x32xf32>
    %cst_145 = arith.constant dense<0.000000e+00> : vector<2x128xf32>
    %570 = tpu.matmul %569, %370, %cst_145 {dimension_numbers = #tpu.dot_dimension_numbers<[1], [0], [0], [1], [0, 0, 1, 1], [], []>} : vector<2x32xf32>, vector<32x128xf32>, vector<2x128xf32> -> vector<2x128xf32>
    %571 = arith.addf %570, %373 : vector<2x128xf32>
    %572 = vector.extract_strided_slice %571 {offsets = [0, 0], sizes = [2, 4], strides = [1, 1]} : vector<2x128xf32> to vector<2x4xf32>
    %c3_146 = arith.constant 3 : index
    %c0_147 = arith.constant 0 : index
    %c0_148 = arith.constant 0 : index
    %573 = vector.load %arg3[%c3_146, %c0_147, %c0_148] : memref<4x2x4xf32, #tpu.memory_space<vmem>>, vector<1x2x4xf32>
    %574 = vector.shape_cast %573 : vector<1x2x4xf32> to vector<2x4xf32>
    %575 = vector.shape_cast %572 : vector<2x4xf32> to vector<1x2x4xf32>
    tpu.vector_store %arg3[%c3_146, %c0_147, %c0_148], %575 {strides = array<i32>} : memref<4x2x4xf32, #tpu.memory_space<vmem>>, vector<1x2x4xf32>,
    return
  }
}

</mosaic_0001>

<llo_original>
// kernel: forward.1
$region0: #{forward.1}
  #allocation0 [shape = 'u32[]', space=smem, size = 0x4, offset = 0x4, fixed_abs, tag = 'smem constant byte address 0x4 - core index']
  #allocation1 [shape = 'u32[144,128]{1,0:T(1,128)}', space=vmem, size = 0x12000, scoped, tag = 'internal scratch']
  %s0 = inlined_call_operand.vmem [shape: f32[16,4], index: 0, kind: input, shape index: {}]
  %s1 = inlined_call_operand.vmem [shape: f32[4,2,32], index: 1, kind: input, shape index: {}]
  %s2 = inlined_call_operand.hbm [shape: f32[320,128], index: 2, kind: input, shape index: {}]
  %s3 = inlined_call_operand.vmem [shape: f32[4,2,4], index: 3, kind: output, shape index: {}]
  %s4 = sld [smem:[#allocation0]]
  $region26: #{forward.1} parent=0
    _
  %s6 = ssub.s32 1, %s4
  %s7 = scalar_select 0, %s6, %s4
  $region1: #{forward.1} parent=0
    #allocation2 [shape = 'u8[163840]{0}', space=vmem, size = 0x28000, scoped, tag = 'input window, operand 2, single buffered']
    #allocation3 [shape = 's32[1]{0}', space=sflag, size = 0x4, scoped, tag = 'scoped memory for forward.1']
    %8 = vsyncpa [#allocation3], 0
    // Predicated region
    $region2: #{forward.1} parent=1 // pred_check
      _
    $region3: #{forward.1} parent=1 // pred_check_branch
      %10 = sbr.rel (0) target = $region5
    $region4: #{forward.1} parent=1 // pred_region
      _
    $region5: #{forward.1} parent=1 // pred_fallthru
      _
    // Predicated region
    $region6: #{forward.1} parent=1 // pred_check
      _
    $region7: #{forward.1} parent=1 // pred_check_branch
      %12 = sbr.rel (0) target = $region9
    $region8: #{forward.1} parent=1 // pred_region
      _
    $region9: #{forward.1} parent=1 // pred_fallthru
      _
    // Predicated region
    $region10: #{forward.1} parent=1 // pred_check
      _
    $region11: #{forward.1} parent=1 // pred_check_branch
      %14 = sbr.rel (0) target = $region13
    $region12: #{forward.1} parent=1 // pred_region
      %s16 = ssub.s32 5120, 5120
      %17 = vsyncadd [#allocation3], %s16
      %s18 = sshll.u32 [#allocation2], 4
      %s19 = int_to_ptr.vmem [resolvable:$true] %s18
      %24 = dma.hbm_to_vmem [thread:$0]  %s2, 5120, %s19, [#allocation3], 128, 128, 8
    $region13: #{forward.1} parent=1 // pred_fallthru
      _
    // Predicated region
    $region14: #{forward.1} parent=1 // pred_check
      _
    $region15: #{forward.1} parent=1 // pred_check_branch
      %26 = sbr.rel (0) target = $region17
    $region16: #{forward.1} parent=1 // pred_region
      %27 = dma.done [#allocation3], 5120
    $region17: #{forward.1} parent=1 // pred_fallthru
      _
    %v28 = vld [vmem:[%s0] sm:$0xff]
    %v29 = vld [vmem:[%s0 + $0x8] sm:$0xff]
    %v30 = vld [vmem:[#allocation2] sm:$0xf]
    %v31 = vld [vmem:[#allocation2 + $0x8] sm:$0xff]
    %v32 = vld [vmem:[#allocation2 + $0x10] sm:$0xff]
    %v33 = vld [vmem:[#allocation2 + $0x18] sm:$0xff]
    %v34 = vld [vmem:[#allocation2 + $0x20] sm:$0xff]
    %v35 = vld [vmem:[#allocation2 + $0x28] sm:$0x1]
    %v36 = vlaneseq
    %v37 = vshrl.u32 %v36, 7
    %v38 = vsub.s32 0, %v37
    %v39 = vrot.slane %v35, %v38
    %vm40 = vcmask 31744
    %v42 = vsel %vm40, %v28, 0
    %v45 = vsel %vm40, %v29, 0
    %vm47 = vcmask 1043456
    %v49 = vsel %vm47, %v30, 0
    %51 = vmatprep.subr.mxu0 0.0
    %52 = vmatpush1.msra.mxu0 %v49
    %53 = vmatprep.subr.mxu0 0.0
    %54 = vmatpush1.msra.mxu0 0.0
    %55 = vmatprep.subr.mxu0 0.0
    %56 = vmatpush1.msra.mxu0 0.0
    %57 = vmatprep.subr.mxu0 0.0
    %58 = vmatpush1.msra.mxu0 0.0
    %59 = vmatprep.subr.mxu0 0.0
    %60 = vmatpush1.msra.mxu0 0.0
    %61 = vmatprep.subr.mxu0 0.0
    %62 = vmatpush1.msra.mxu0 0.0
    %63 = vmatprep.subr.mxu0 0.0
    %64 = vmatpush1.msra.mxu0 0.0
    %65 = vmatprep.subr.mxu0 0.0
    %66 = vmatpush1.msra.mxu0 0.0
    %67 = vmatprep.subr.mxu0 0.0
    %68 = vmatpush1.msra.mxu0 0.0
    %69 = vmatprep.subr.mxu0 0.0
    %70 = vmatpush1.msra.mxu0 0.0
    %71 = vmatprep.subr.mxu0 0.0
    %72 = vmatpush1.msra.mxu0 0.0
    %73 = vmatprep.subr.mxu0 0.0
    %74 = vmatpush1.msra.mxu0 0.0
    %75 = vmatprep.subr.mxu0 0.0
    %76 = vmatpush1.msra.mxu0 0.0
    %77 = vmatprep.subr.mxu0 0.0
    %78 = vmatpush1.msra.mxu0 0.0
    %79 = vmatprep.subr.mxu0 0.0
    %80 = vmatpush1.msra.mxu0 0.0
    %81 = vmatprep.subr.mxu0 0.0
    %82 = vmatpush1.msra.mxu0 0.0
    %83 = vmatprep.subr.mxu0 0.0
    %84 = vmatpush1.msra.mxu0 0.0
    %85 = vmatprep.subr.mxu0 0.0
    %86 = vmatpush1.msra.mxu0 0.0
    %87 = vmatprep.subr.mxu0 0.0
    %88 = vmatpush1.msra.mxu0 0.0
    %89 = vmatprep.subr.mxu0 0.0
    %90 = vmatpush1.msra.mxu0 0.0
    %91 = vmatprep.subr.mxu0 0.0
    %92 = vmatpush1.msra.mxu0 0.0
    %93 = vmatprep.subr.mxu0 0.0
    %94 = vmatpush1.msra.mxu0 0.0
    %95 = vmatprep.subr.mxu0 0.0
    %96 = vmatpush1.msra.mxu0 0.0
    %97 = vmatprep.subr.mxu0 0.0
    %98 = vmatpush1.msra.mxu0 0.0
    %99 = vmatprep.subr.mxu0 0.0
    %100 = vmatpush1.msra.mxu0 0.0
    %101 = vmatprep.subr.mxu0 0.0
    %102 = vmatpush1.msra.mxu0 0.0
    %103 = vmatprep.subr.mxu0 0.0
    %104 = vmatpush1.msra.mxu0 0.0
    %105 = vmatprep.subr.mxu0 0.0
    %106 = vmatpush1.msra.mxu0 0.0
    %107 = vmatprep.subr.mxu0 0.0
    %108 = vmatpush1.msra.mxu0 0.0
    %109 = vmatprep.subr.mxu0 0.0
    %110 = vmatpush1.msra.mxu0 0.0
    %111 = vmatprep.subr.mxu0 0.0
    %112 = vmatpush1.msra.mxu0 0.0
    %113 = vmatprep.subr.mxu0 0.0
    %114 = vmatpush1.msra.mxu0 0.0
    %115 = vmatprep.mubr.f32.mxu0 0.0
    %116 = vmatmul.mubr.f32.gmra.mrb[0].mxu0 %v42
    %v117 = vpop.f32.mrb[0].mxu0
    %v118 = vadd.f32 %v39, %v117
    %v119 = vpop.f32.mrb[0].mxu0
    %120 = vmatprep.mubr.f32.mxu0 0.0
    %121 = vmatmul.mubr.f32.gmra.mrb[0].mxu0 %v45
    %v122 = vpop.f32.mrb[0].mxu0
    %v123 = vadd.f32 %v39, %v122
    %v124 = vpop.f32.mrb[0].mxu0
    %125 = vdwg.mxu0
    %v126 = vld [vmem:[%s1] sm:$0x3]
    %s127 = scalar_lea.vmem %s1, 4
    %v128 = vld [vmem:[%s127] sm:$0x3]
    %vm129 = vcmask 261120
    %v131 = vsel %vm129, %v126, 0
    %133 = vmatprep.subr.mxu0 0.0
    %134 = vmatpush1.msra.mxu0 %v31
    %135 = vmatprep.subr.mxu0 0.0
    %136 = vmatpush1.msra.mxu0 %v32
    %137 = vmatprep.subr.mxu0 0.0
    %138 = vmatpush1.msra.mxu0 %v33
    %139 = vmatprep.subr.mxu0 0.0
    %140 = vmatpush1.msra.mxu0 %v34
    %141 = vmatprep.subr.mxu0 0.0
    %142 = vmatpush1.msra.mxu0 0.0
    %143 = vmatprep.subr.mxu0 0.0
    %144 = vmatpush1.msra.mxu0 0.0
    %145 = vmatprep.subr.mxu0 0.0
    %146 = vmatpush1.msra.mxu0 0.0
    %147 = vmatprep.subr.mxu0 0.0
    %148 = vmatpush1.msra.mxu0 0.0
    %149 = vmatprep.subr.mxu0 0.0
    %150 = vmatpush1.msra.mxu0 0.0
    %151 = vmatprep.subr.mxu0 0.0
    %152 = vmatpush1.msra.mxu0 0.0
    %153 = vmatprep.subr.mxu0 0.0
    %154 = vmatpush1.msra.mxu0 0.0
    %155 = vmatprep.subr.mxu0 0.0
    %156 = vmatpush1.msra.mxu0 0.0
    %157 = vmatprep.subr.mxu0 0.0
    %158 = vmatpush1.msra.mxu0 0.0
    %159 = vmatprep.subr.mxu0 0.0
    %160 = vmatpush1.msra.mxu0 0.0
    %161 = vmatprep.subr.mxu0 0.0
    %162 = vmatpush1.msra.mxu0 0.0
    %163 = vmatprep.subr.mxu0 0.0
    %164 = vmatpush1.msra.mxu0 0.0
    %165 = vmatprep.subr.mxu0 0.0
    %166 = vmatpush1.msra.mxu0 0.0
    %167 = vmatprep.subr.mxu0 0.0
    %168 = vmatpush1.msra.mxu0 0.0
    %169 = vmatprep.subr.mxu0 0.0
    %170 = vmatpush1.msra.mxu0 0.0
    %171 = vmatprep.subr.mxu0 0.0
    %172 = vmatpush1.msra.mxu0 0.0
    %173 = vmatprep.subr.mxu0 0.0
    %174 = vmatpush1.msra.mxu0 0.0
    %175 = vmatprep.subr.mxu0 0.0
    %176 = vmatpush1.msra.mxu0 0.0
    %177 = vmatprep.subr.mxu0 0.0
    %178 = vmatpush1.msra.mxu0 0.0
    %179 = vmatprep.subr.mxu0 0.0
    %180 = vmatpush1.msra.mxu0 0.0
    %181 = vmatprep.subr.mxu0 0.0
    %182 = vmatpush1.msra.mxu0 0.0
    %183 = vmatprep.subr.mxu0 0.0
    %184 = vmatpush1.msra.mxu0 0.0
    %185 = vmatprep.subr.mxu0 0.0
    %186 = vmatpush1.msra.mxu0 0.0
    %187 = vmatprep.subr.mxu0 0.0
    %188 = vmatpush1.msra.mxu0 0.0
    %189 = vmatprep.subr.mxu0 0.0
    %190 = vmatpush1.msra.mxu0 0.0
    %191 = vmatprep.subr.mxu0 0.0
    %192 = vmatpush1.msra.mxu0 0.0
    %193 = vmatprep.subr.mxu0 0.0
    %194 = vmatpush1.msra.mxu0 0.0
    %195 = vmatprep.subr.mxu0 0.0
    %196 = vmatpush1.msra.mxu0 0.0
    %197 = vmatprep.mubr.f32.mxu0 0.0
    %198 = vmatmul.mubr.f32.gmra.mrb[0].mxu0 %v131
    %v199 = vpop.f32.mrb[0].mxu0
    %v200 = vadd.f32 0.0, %v199
    %v201 = vpop.f32.mrb[0].mxu0
    %202 = vdwg.mxu0
    %v203 = vadd.f32 %v118, %v200
    %v204 = vxor.u32 %v203, 2147483648
    %v205 = vmul.f32 %v204, 1.442695
    %v206 = vpow.pop %v205
    %v207 = vadd.f32 %v206, 1.0
    %v208 = vrcp.pop %v207
    %v209 = vmul.f32 1.0, %v208
    %v210 = vmul.f32 %v209, 2.0
    %v211 = vsub.f32 %v210, 1.0
    %213 = vrot.lane.b32.xlu0 %v128, 32
    %v214 = vpop.permute.xlu0 %213
    %v216 = vmul.f32 %v209, %v214
    %218 = vrot.lane.b32.xlu0 %v211, 64
    %v219 = vpop.permute.xlu0 %218
    %v221 = vmul.f32 %v209, %v219
    %223 = vrot.lane.b32.xlu0 %v221, 32
    %v224 = vpop.permute.xlu0 %223
    %v226 = vadd.f32 %v216, %v224
    %v227 = vtanh.pop %v226
    %229 = vrot.lane.b32.xlu0 %v227, 64
    %v230 = vpop.permute.xlu0 %229
    %v232 = vmul.f32 %v209, %v230
    %234 = vrot.lane.b32.xlu0 %v232, 32
    %v235 = vpop.permute.xlu0 %234
    %v236 = vsel %vm129, %v235, 0
    %238 = vmatprep.subr.mxu0 0.0
    %239 = vmatpush1.msra.mxu0 %v31
    %240 = vmatprep.subr.mxu0 0.0
    %241 = vmatpush1.msra.mxu0 %v32
    %242 = vmatprep.subr.mxu0 0.0
    %243 = vmatpush1.msra.mxu0 %v33
    %244 = vmatprep.subr.mxu0 0.0
    %245 = vmatpush1.msra.mxu0 %v34
    %246 = vmatprep.subr.mxu0 0.0
    %247 = vmatpush1.msra.mxu0 0.0
    %248 = vmatprep.subr.mxu0 0.0
    %249 = vmatpush1.msra.mxu0 0.0
    %250 = vmatprep.subr.mxu0 0.0
    %251 = vmatpush1.msra.mxu0 0.0
    %252 = vmatprep.subr.mxu0 0.0
    %253 = vmatpush1.msra.mxu0 0.0
    %254 = vmatprep.subr.mxu0 0.0
    %255 = vmatpush1.msra.mxu0 0.0
    %256 = vmatprep.subr.mxu0 0.0
    %257 = vmatpush1.msra.mxu0 0.0
    %258 = vmatprep.subr.mxu0 0.0
    %259 = vmatpush1.msra.mxu0 0.0
    %260 = vmatprep.subr.mxu0 0.0
    %261 = vmatpush1.msra.mxu0 0.0
    %262 = vmatprep.subr.mxu0 0.0
    %263 = vmatpush1.msra.mxu0 0.0
    %264 = vmatprep.subr.mxu0 0.0
    %265 = vmatpush1.msra.mxu0 0.0
    %266 = vmatprep.subr.mxu0 0.0
    %267 = vmatpush1.msra.mxu0 0.0
    %268 = vmatprep.subr.mxu0 0.0
    %269 = vmatpush1.msra.mxu0 0.0
    %270 = vmatprep.subr.mxu0 0.0
    %271 = vmatpush1.msra.mxu0 0.0
    %272 = vmatprep.subr.mxu0 0.0
    %273 = vmatpush1.msra.mxu0 0.0
    %274 = vmatprep.subr.mxu0 0.0
    %275 = vmatpush1.msra.mxu0 0.0
    %276 = vmatprep.subr.mxu0 0.0
    %277 = vmatpush1.msra.mxu0 0.0
    %278 = vmatprep.subr.mxu0 0.0
    %279 = vmatpush1.msra.mxu0 0.0
    %280 = vmatprep.subr.mxu0 0.0
    %281 = vmatpush1.msra.mxu0 0.0
    %282 = vmatprep.subr.mxu0 0.0
    %283 = vmatpush1.msra.mxu0 0.0
    %284 = vmatprep.subr.mxu0 0.0
    %285 = vmatpush1.msra.mxu0 0.0
    %286 = vmatprep.subr.mxu0 0.0
    %287 = vmatpush1.msra.mxu0 0.0
    %288 = vmatprep.subr.mxu0 0.0
    %289 = vmatpush1.msra.mxu0 0.0
    %290 = vmatprep.subr.mxu0 0.0
    %291 = vmatpush1.msra.mxu0 0.0
    %292 = vmatprep.subr.mxu0 0.0
    %293 = vmatpush1.msra.mxu0 0.0
    %294 = vmatprep.subr.mxu0 0.0
    %295 = vmatpush1.msra.mxu0 0.0
    %296 = vmatprep.subr.mxu0 0.0
    %297 = vmatpush1.msra.mxu0 0.0
    %298 = vmatprep.subr.mxu0 0.0
    %299 = vmatpush1.msra.mxu0 0.0
    %300 = vmatprep.subr.mxu0 0.0
    %301 = vmatpush1.msra.mxu0 0.0
    %302 = vmatprep.mubr.f32.mxu0 0.0
    %303 = vmatmul.mubr.f32.gmra.mrb[0].mxu0 %v236
    %v304 = vpop.f32.mrb[0].mxu0
    %v305 = vadd.f32 0.0, %v304
    %v306 = vpop.f32.mrb[0].mxu0
    %307 = vdwg.mxu0
    %v309 = vrot.slane %v305, 6
    %v311 = vadd.f32 %v118, %v309
    %v312 = vxor.u32 %v311, 2147483648
    %v313 = vmul.f32 %v312, 1.442695
    %v314 = vpow.pop %v313
    %v315 = vadd.f32 %v314, 1.0
    %v316 = vrcp.pop %v315
    %v317 = vmul.f32 1.0, %v316
    %v318 = vmul.f32 %v317, 2.0
    %v319 = vsub.f32 %v318, 1.0
    %v321 = vrot.slane %v226, 6
    %v323 = vmul.f32 %v317, %v321
    %325 = vrot.lane.b32.xlu0 %v319, 64
    %v326 = vpop.permute.xlu0 %325
    %v328 = vmul.f32 %v317, %v326
    %330 = vrot.lane.b32.xlu0 %v328, 32
    %v331 = vpop.permute.xlu0 %330
    %v333 = vadd.f32 %v323, %v331
    %v334 = vtanh.pop %v333
    %336 = vrot.lane.b32.xlu0 %v334, 64
    %v337 = vpop.permute.xlu0 %336
    %v339 = vmul.f32 %v317, %v337
    %v341 = vrot.slane %v339, 2
    %342 = vrot.lane.b32.xlu0 %v341, 32
    %v343 = vpop.permute.xlu0 %342
    %v344 = vsel %vm129, %v343, 0
    %346 = vmatprep.subr.mxu0 0.0
    %347 = vmatpush1.msra.mxu0 %v31
    %348 = vmatprep.subr.mxu0 0.0
    %349 = vmatpush1.msra.mxu0 %v32
    %350 = vmatprep.subr.mxu0 0.0
    %351 = vmatpush1.msra.mxu0 %v33
    %352 = vmatprep.subr.mxu0 0.0
    %353 = vmatpush1.msra.mxu0 %v34
    %354 = vmatprep.subr.mxu0 0.0
    %355 = vmatpush1.msra.mxu0 0.0
    %356 = vmatprep.subr.mxu0 0.0
    %357 = vmatpush1.msra.mxu0 0.0
    %358 = vmatprep.subr.mxu0 0.0
    %359 = vmatpush1.msra.mxu0 0.0
    %360 = vmatprep.subr.mxu0 0.0
    %361 = vmatpush1.msra.mxu0 0.0
    %362 = vmatprep.subr.mxu0 0.0
    %363 = vmatpush1.msra.mxu0 0.0
    %364 = vmatprep.subr.mxu0 0.0
    %365 = vmatpush1.msra.mxu0 0.0
    %366 = vmatprep.subr.mxu0 0.0
    %367 = vmatpush1.msra.mxu0 0.0
    %368 = vmatprep.subr.mxu0 0.0
    %369 = vmatpush1.msra.mxu0 0.0
    %370 = vmatprep.subr.mxu0 0.0
    %371 = vmatpush1.msra.mxu0 0.0
    %372 = vmatprep.subr.mxu0 0.0
    %373 = vmatpush1.msra.mxu0 0.0
    %374 = vmatprep.subr.mxu0 0.0
    %375 = vmatpush1.msra.mxu0 0.0
    %376 = vmatprep.subr.mxu0 0.0
    %377 = vmatpush1.msra.mxu0 0.0
    %378 = vmatprep.subr.mxu0 0.0
    %379 = vmatpush1.msra.mxu0 0.0
    %380 = vmatprep.subr.mxu0 0.0
    %381 = vmatpush1.msra.mxu0 0.0
    %382 = vmatprep.subr.mxu0 0.0
    %383 = vmatpush1.msra.mxu0 0.0
    %384 = vmatprep.subr.mxu0 0.0
    %385 = vmatpush1.msra.mxu0 0.0
    %386 = vmatprep.subr.mxu0 0.0
    %387 = vmatpush1.msra.mxu0 0.0
    %388 = vmatprep.subr.mxu0 0.0
    %389 = vmatpush1.msra.mxu0 0.0
    %390 = vmatprep.subr.mxu0 0.0
    %391 = vmatpush1.msra.mxu0 0.0
    %392 = vmatprep.subr.mxu0 0.0
    %393 = vmatpush1.msra.mxu0 0.0
    %394 = vmatprep.subr.mxu0 0.0
    %395 = vmatpush1.msra.mxu0 0.0
    %396 = vmatprep.subr.mxu0 0.0
    %397 = vmatpush1.msra.mxu0 0.0
    %398 = vmatprep.subr.mxu0 0.0
    %399 = vmatpush1.msra.mxu0 0.0
    %400 = vmatprep.subr.mxu0 0.0
    %401 = vmatpush1.msra.mxu0 0.0
    %402 = vmatprep.subr.mxu0 0.0
    %403 = vmatpush1.msra.mxu0 0.0
    %404 = vmatprep.subr.mxu0 0.0
    %405 = vmatpush1.msra.mxu0 0.0
    %406 = vmatprep.subr.mxu0 0.0
    %407 = vmatpush1.msra.mxu0 0.0
    %408 = vmatprep.subr.mxu0 0.0
    %409 = vmatpush1.msra.mxu0 0.0
    %410 = vmatprep.mubr.f32.mxu0 0.0
    %411 = vmatmul.mubr.f32.gmra.mrb[0].mxu0 %v344
    %v412 = vpop.f32.mrb[0].mxu0
    %v413 = vadd.f32 0.0, %v412
    %v414 = vpop.f32.mrb[0].mxu0
    %415 = vdwg.mxu0
    %v417 = vrot.slane %v413, 4
    %v419 = vadd.f32 %v118, %v417
    %v420 = vxor.u32 %v419, 2147483648
    %v421 = vmul.f32 %v420, 1.442695
    %v422 = vpow.pop %v421
    %v423 = vadd.f32 %v422, 1.0
    %v424 = vrcp.pop %v423
    %v425 = vmul.f32 1.0, %v424
    %v426 = vmul.f32 %v425, 2.0
    %v427 = vsub.f32 %v426, 1.0
    %v429 = vrot.slane %v333, 6
    %v431 = vmul.f32 %v425, %v429
    %433 = vrot.lane.b32.xlu0 %v427, 64
    %v434 = vpop.permute.xlu0 %433
    %v436 = vmul.f32 %v425, %v434
    %438 = vrot.lane.b32.xlu0 %v436, 32
    %v439 = vpop.permute.xlu0 %438
    %v441 = vadd.f32 %v431, %v439
    %v442 = vtanh.pop %v441
    %444 = vrot.lane.b32.xlu0 %v442, 64
    %v445 = vpop.permute.xlu0 %444
    %v447 = vmul.f32 %v425, %v445
    %v449 = vrot.slane %v447, 4
    %450 = vrot.lane.b32.xlu0 %v449, 32
    %v451 = vpop.permute.xlu0 %450
    %v452 = vsel %vm129, %v451, 0
    %454 = vmatprep.subr.mxu0 0.0
    %455 = vmatpush1.msra.mxu0 %v31
    %456 = vmatprep.subr.mxu0 0.0
    %457 = vmatpush1.msra.mxu0 %v32
    %458 = vmatprep.subr.mxu0 0.0
    %459 = vmatpush1.msra.mxu0 %v33
    %460 = vmatprep.subr.mxu0 0.0
    %461 = vmatpush1.msra.mxu0 %v34
    %462 = vmatprep.subr.mxu0 0.0
    %463 = vmatpush1.msra.mxu0 0.0
    %464 = vmatprep.subr.mxu0 0.0
    %465 = vmatpush1.msra.mxu0 0.0
    %466 = vmatprep.subr.mxu0 0.0
    %467 = vmatpush1.msra.mxu0 0.0
    %468 = vmatprep.subr.mxu0 0.0
    %469 = vmatpush1.msra.mxu0 0.0
    %470 = vmatprep.subr.mxu0 0.0
    %471 = vmatpush1.msra.mxu0 0.0
    %472 = vmatprep.subr.mxu0 0.0
    %473 = vmatpush1.msra.mxu0 0.0
    %474 = vmatprep.subr.mxu0 0.0
    %475 = vmatpush1.msra.mxu0 0.0
    %476 = vmatprep.subr.mxu0 0.0
    %477 = vmatpush1.msra.mxu0 0.0
    %478 = vmatprep.subr.mxu0 0.0
    %479 = vmatpush1.msra.mxu0 0.0
    %480 = vmatprep.subr.mxu0 0.0
    %481 = vmatpush1.msra.mxu0 0.0
    %482 = vmatprep.subr.mxu0 0.0
    %483 = vmatpush1.msra.mxu0 0.0
    %484 = vmatprep.subr.mxu0 0.0
    %485 = vmatpush1.msra.mxu0 0.0
    %486 = vmatprep.subr.mxu0 0.0
    %487 = vmatpush1.msra.mxu0 0.0
    %488 = vmatprep.subr.mxu0 0.0
    %489 = vmatpush1.msra.mxu0 0.0
    %490 = vmatprep.subr.mxu0 0.0
    %491 = vmatpush1.msra.mxu0 0.0
    %492 = vmatprep.subr.mxu0 0.0
    %493 = vmatpush1.msra.mxu0 0.0
    %494 = vmatprep.subr.mxu0 0.0
    %495 = vmatpush1.msra.mxu0 0.0
    %496 = vmatprep.subr.mxu0 0.0
    %497 = vmatpush1.msra.mxu0 0.0
    %498 = vmatprep.subr.mxu0 0.0
    %499 = vmatpush1.msra.mxu0 0.0
    %500 = vmatprep.subr.mxu0 0.0
    %501 = vmatpush1.msra.mxu0 0.0
    %502 = vmatprep.subr.mxu0 0.0
    %503 = vmatpush1.msra.mxu0 0.0
    %504 = vmatprep.subr.mxu0 0.0
    %505 = vmatpush1.msra.mxu0 0.0
    %506 = vmatprep.subr.mxu0 0.0
    %507 = vmatpush1.msra.mxu0 0.0
    %508 = vmatprep.subr.mxu0 0.0
    %509 = vmatpush1.msra.mxu0 0.0
    %510 = vmatprep.subr.mxu0 0.0
    %511 = vmatpush1.msra.mxu0 0.0
    %512 = vmatprep.subr.mxu0 0.0
    %513 = vmatpush1.msra.mxu0 0.0
    %514 = vmatprep.subr.mxu0 0.0
    %515 = vmatpush1.msra.mxu0 0.0
    %516 = vmatprep.subr.mxu0 0.0
    %517 = vmatpush1.msra.mxu0 0.0
    %518 = vmatprep.mubr.f32.mxu0 0.0
    %519 = vmatmul.mubr.f32.gmra.mrb[0].mxu0 %v452
    %v520 = vpop.f32.mrb[0].mxu0
    %v521 = vadd.f32 0.0, %v520
    %v522 = vpop.f32.mrb[0].mxu0
    %523 = vdwg.mxu0
    %v525 = vrot.slane %v521, 2
    %v527 = vadd.f32 %v118, %v525
    %v528 = vxor.u32 %v527, 2147483648
    %v529 = vmul.f32 %v528, 1.442695
    %v530 = vpow.pop %v529
    %v531 = vadd.f32 %v530, 1.0
    %v532 = vrcp.pop %v531
    %v533 = vmul.f32 1.0, %v532
    %v534 = vmul.f32 %v533, 2.0
    %v535 = vsub.f32 %v534, 1.0
    %v537 = vrot.slane %v441, 6
    %v539 = vmul.f32 %v533, %v537
    %541 = vrot.lane.b32.xlu0 %v535, 64
    %v542 = vpop.permute.xlu0 %541
    %v544 = vmul.f32 %v533, %v542
    %546 = vrot.lane.b32.xlu0 %v544, 32
    %v547 = vpop.permute.xlu0 %546
    %v549 = vadd.f32 %v539, %v547
    %v550 = vtanh.pop %v549
    %552 = vrot.lane.b32.xlu0 %v550, 64
    %v553 = vpop.permute.xlu0 %552
    %v555 = vmul.f32 %v533, %v553
    %v557 = vrot.slane %v555, 6
    %558 = vrot.lane.b32.xlu0 %v557, 32
    %v559 = vpop.permute.xlu0 %558
    %v560 = vsel %vm129, %v559, 0
    %562 = vmatprep.subr.mxu0 0.0
    %563 = vmatpush1.msra.mxu0 %v31
    %564 = vmatprep.subr.mxu0 0.0
    %565 = vmatpush1.msra.mxu0 %v32
    %566 = vmatprep.subr.mxu0 0.0
    %567 = vmatpush1.msra.mxu0 %v33
    %568 = vmatprep.subr.mxu0 0.0
    %569 = vmatpush1.msra.mxu0 %v34
    %570 = vmatprep.subr.mxu0 0.0
    %571 = vmatpush1.msra.mxu0 0.0
    %572 = vmatprep.subr.mxu0 0.0
    %573 = vmatpush1.msra.mxu0 0.0
    %574 = vmatprep.subr.mxu0 0.0
    %575 = vmatpush1.msra.mxu0 0.0
    %576 = vmatprep.subr.mxu0 0.0
    %577 = vmatpush1.msra.mxu0 0.0
    %578 = vmatprep.subr.mxu0 0.0
    %579 = vmatpush1.msra.mxu0 0.0
    %580 = vmatprep.subr.mxu0 0.0
    %581 = vmatpush1.msra.mxu0 0.0
    %582 = vmatprep.subr.mxu0 0.0
    %583 = vmatpush1.msra.mxu0 0.0
    %584 = vmatprep.subr.mxu0 0.0
    %585 = vmatpush1.msra.mxu0 0.0
    %586 = vmatprep.subr.mxu0 0.0
    %587 = vmatpush1.msra.mxu0 0.0
    %588 = vmatprep.subr.mxu0 0.0
    %589 = vmatpush1.msra.mxu0 0.0
    %590 = vmatprep.subr.mxu0 0.0
    %591 = vmatpush1.msra.mxu0 0.0
    %592 = vmatprep.subr.mxu0 0.0
    %593 = vmatpush1.msra.mxu0 0.0
    %594 = vmatprep.subr.mxu0 0.0
    %595 = vmatpush1.msra.mxu0 0.0
    %596 = vmatprep.subr.mxu0 0.0
    %597 = vmatpush1.msra.mxu0 0.0
    %598 = vmatprep.subr.mxu0 0.0
    %599 = vmatpush1.msra.mxu0 0.0
    %600 = vmatprep.subr.mxu0 0.0
    %601 = vmatpush1.msra.mxu0 0.0
    %602 = vmatprep.subr.mxu0 0.0
    %603 = vmatpush1.msra.mxu0 0.0
    %604 = vmatprep.subr.mxu0 0.0
    %605 = vmatpush1.msra.mxu0 0.0
    %606 = vmatprep.subr.mxu0 0.0
    %607 = vmatpush1.msra.mxu0 0.0
    %608 = vmatprep.subr.mxu0 0.0
    %609 = vmatpush1.msra.mxu0 0.0
    %610 = vmatprep.subr.mxu0 0.0
    %611 = vmatpush1.msra.mxu0 0.0
    %612 = vmatprep.subr.mxu0 0.0
    %613 = vmatpush1.msra.mxu0 0.0
    %614 = vmatprep.subr.mxu0 0.0
    %615 = vmatpush1.msra.mxu0 0.0
    %616 = vmatprep.subr.mxu0 0.0
    %617 = vmatpush1.msra.mxu0 0.0
    %618 = vmatprep.subr.mxu0 0.0
    %619 = vmatpush1.msra.mxu0 0.0
    %620 = vmatprep.subr.mxu0 0.0
    %621 = vmatpush1.msra.mxu0 0.0
    %622 = vmatprep.subr.mxu0 0.0
    %623 = vmatpush1.msra.mxu0 0.0
    %624 = vmatprep.subr.mxu0 0.0
    %625 = vmatpush1.msra.mxu0 0.0
    %626 = vmatprep.mubr.f32.mxu0 0.0
    %627 = vmatmul.mubr.f32.gmra.mrb[0].mxu0 %v560
    %v628 = vpop.f32.mrb[0].mxu0
    %v629 = vadd.f32 0.0, %v628
    %v630 = vpop.f32.mrb[0].mxu0
    %631 = vdwg.mxu0
    %v632 = vadd.f32 %v123, %v629
    %v633 = vxor.u32 %v632, 2147483648
    %v634 = vmul.f32 %v633, 1.442695
    %v635 = vpow.pop %v634
    %v636 = vadd.f32 %v635, 1.0
    %v637 = vrcp.pop %v636
    %v638 = vmul.f32 1.0, %v637
    %v639 = vmul.f32 %v638, 2.0
    %v640 = vsub.f32 %v639, 1.0
    %v642 = vrot.slane %v549, 6
    %v644 = vmul.f32 %v638, %v642
    %646 = vrot.lane.b32.xlu0 %v640, 64
    %v647 = vpop.permute.xlu0 %646
    %v649 = vmul.f32 %v638, %v647
    %651 = vrot.lane.b32.xlu0 %v649, 32
    %v652 = vpop.permute.xlu0 %651
    %v654 = vadd.f32 %v644, %v652
    %v655 = vtanh.pop %v654
    %657 = vrot.lane.b32.xlu0 %v655, 64
    %v658 = vpop.permute.xlu0 %657
    %v660 = vmul.f32 %v638, %v658
    %662 = vrot.lane.b32.xlu0 %v660, 32
    %v663 = vpop.permute.xlu0 %662
    %v664 = vsel %vm129, %v663, 0
    %666 = vmatprep.subr.mxu0 0.0
    %667 = vmatpush1.msra.mxu0 %v31
    %668 = vmatprep.subr.mxu0 0.0
    %669 = vmatpush1.msra.mxu0 %v32
    %670 = vmatprep.subr.mxu0 0.0
    %671 = vmatpush1.msra.mxu0 %v33
    %672 = vmatprep.subr.mxu0 0.0
    %673 = vmatpush1.msra.mxu0 %v34
    %674 = vmatprep.subr.mxu0 0.0
    %675 = vmatpush1.msra.mxu0 0.0
    %676 = vmatprep.subr.mxu0 0.0
    %677 = vmatpush1.msra.mxu0 0.0
    %678 = vmatprep.subr.mxu0 0.0
    %679 = vmatpush1.msra.mxu0 0.0
    %680 = vmatprep.subr.mxu0 0.0
    %681 = vmatpush1.msra.mxu0 0.0
    %682 = vmatprep.subr.mxu0 0.0
    %683 = vmatpush1.msra.mxu0 0.0
    %684 = vmatprep.subr.mxu0 0.0
    %685 = vmatpush1.msra.mxu0 0.0
    %686 = vmatprep.subr.mxu0 0.0
    %687 = vmatpush1.msra.mxu0 0.0
    %688 = vmatprep.subr.mxu0 0.0
    %689 = vmatpush1.msra.mxu0 0.0
    %690 = vmatprep.subr.mxu0 0.0
    %691 = vmatpush1.msra.mxu0 0.0
    %692 = vmatprep.subr.mxu0 0.0
    %693 = vmatpush1.msra.mxu0 0.0
    %694 = vmatprep.subr.mxu0 0.0
    %695 = vmatpush1.msra.mxu0 0.0
    %696 = vmatprep.subr.mxu0 0.0
    %697 = vmatpush1.msra.mxu0 0.0
    %698 = vmatprep.subr.mxu0 0.0
    %699 = vmatpush1.msra.mxu0 0.0
    %700 = vmatprep.subr.mxu0 0.0
    %701 = vmatpush1.msra.mxu0 0.0
    %702 = vmatprep.subr.mxu0 0.0
    %703 = vmatpush1.msra.mxu0 0.0
    %704 = vmatprep.subr.mxu0 0.0
    %705 = vmatpush1.msra.mxu0 0.0
    %706 = vmatprep.subr.mxu0 0.0
    %707 = vmatpush1.msra.mxu0 0.0
    %708 = vmatprep.subr.mxu0 0.0
    %709 = vmatpush1.msra.mxu0 0.0
    %710 = vmatprep.subr.mxu0 0.0
    %711 = vmatpush1.msra.mxu0 0.0
    %712 = vmatprep.subr.mxu0 0.0
    %713 = vmatpush1.msra.mxu0 0.0
    %714 = vmatprep.subr.mxu0 0.0
    %715 = vmatpush1.msra.mxu0 0.0
    %716 = vmatprep.subr.mxu0 0.0
    %717 = vmatpush1.msra.mxu0 0.0
    %718 = vmatprep.subr.mxu0 0.0
    %719 = vmatpush1.msra.mxu0 0.0
    %720 = vmatprep.subr.mxu0 0.0
    %721 = vmatpush1.msra.mxu0 0.0
    %722 = vmatprep.subr.mxu0 0.0
    %723 = vmatpush1.msra.mxu0 0.0
    %724 = vmatprep.subr.mxu0 0.0
    %725 = vmatpush1.msra.mxu0 0.0
    %726 = vmatprep.subr.mxu0 0.0
    %727 = vmatpush1.msra.mxu0 0.0
    %728 = vmatprep.subr.mxu0 0.0
    %729 = vmatpush1.msra.mxu0 0.0
    %730 = vmatprep.mubr.f32.mxu0 0.0
    %731 = vmatmul.mubr.f32.gmra.mrb[0].mxu0 %v664
    %v732 = vpop.f32.mrb[0].mxu0
    %v733 = vadd.f32 0.0, %v732
    %v734 = vpop.f32.mrb[0].mxu0
    %735 = vdwg.mxu0
    %v737 = vrot.slane %v733, 6
    %v739 = vadd.f32 %v123, %v737
    %v740 = vxor.u32 %v739, 2147483648
    %v741 = vmul.f32 %v740, 1.442695
    %v742 = vpow.pop %v741
    %v743 = vadd.f32 %v742, 1.0
    %v744 = vrcp.pop %v743
    %v745 = vmul.f32 1.0, %v744
    %v746 = vmul.f32 %v745, 2.0
    %v747 = vsub.f32 %v746, 1.0
    %v749 = vrot.slane %v654, 6
    %v751 = vmul.f32 %v745, %v749
    %753 = vrot.lane.b32.xlu0 %v747, 64
    %v754 = vpop.permute.xlu0 %753
    %v756 = vmul.f32 %v745, %v754
    %758 = vrot.lane.b32.xlu0 %v756, 32
    %v759 = vpop.permute.xlu0 %758
    %v761 = vadd.f32 %v751, %v759
    %v762 = vtanh.pop %v761
    %764 = vrot.lane.b32.xlu0 %v762, 64
    %v765 = vpop.permute.xlu0 %764
    %v767 = vmul.f32 %v745, %v765
    %v769 = vrot.slane %v767, 2
    %770 = vrot.lane.b32.xlu0 %v769, 32
    %v771 = vpop.permute.xlu0 %770
    %v772 = vsel %vm129, %v771, 0
    %774 = vmatprep.subr.mxu0 0.0
    %775 = vmatpush1.msra.mxu0 %v31
    %776 = vmatprep.subr.mxu0 0.0
    %777 = vmatpush1.msra.mxu0 %v32
    %778 = vmatprep.subr.mxu0 0.0
    %779 = vmatpush1.msra.mxu0 %v33
    %780 = vmatprep.subr.mxu0 0.0
    %781 = vmatpush1.msra.mxu0 %v34
    %782 = vmatprep.subr.mxu0 0.0
    %783 = vmatpush1.msra.mxu0 0.0
    %784 = vmatprep.subr.mxu0 0.0
    %785 = vmatpush1.msra.mxu0 0.0
    %786 = vmatprep.subr.mxu0 0.0
    %787 = vmatpush1.msra.mxu0 0.0
    %788 = vmatprep.subr.mxu0 0.0
    %789 = vmatpush1.msra.mxu0 0.0
    %790 = vmatprep.subr.mxu0 0.0
    %791 = vmatpush1.msra.mxu0 0.0
    %792 = vmatprep.subr.mxu0 0.0
    %793 = vmatpush1.msra.mxu0 0.0
    %794 = vmatprep.subr.mxu0 0.0
    %795 = vmatpush1.msra.mxu0 0.0
    %796 = vmatprep.subr.mxu0 0.0
    %797 = vmatpush1.msra.mxu0 0.0
    %798 = vmatprep.subr.mxu0 0.0
    %799 = vmatpush1.msra.mxu0 0.0
    %800 = vmatprep.subr.mxu0 0.0
    %801 = vmatpush1.msra.mxu0 0.0
    %802 = vmatprep.subr.mxu0 0.0
    %803 = vmatpush1.msra.mxu0 0.0
    %804 = vmatprep.subr.mxu0 0.0
    %805 = vmatpush1.msra.mxu0 0.0
    %806 = vmatprep.subr.mxu0 0.0
    %807 = vmatpush1.msra.mxu0 0.0
    %808 = vmatprep.subr.mxu0 0.0
    %809 = vmatpush1.msra.mxu0 0.0
    %810 = vmatprep.subr.mxu0 0.0
    %811 = vmatpush1.msra.mxu0 0.0
    %812 = vmatprep.subr.mxu0 0.0
    %813 = vmatpush1.msra.mxu0 0.0
    %814 = vmatprep.subr.mxu0 0.0
    %815 = vmatpush1.msra.mxu0 0.0
    %816 = vmatprep.subr.mxu0 0.0
    %817 = vmatpush1.msra.mxu0 0.0
    %818 = vmatprep.subr.mxu0 0.0
    %819 = vmatpush1.msra.mxu0 0.0
    %820 = vmatprep.subr.mxu0 0.0
    %821 = vmatpush1.msra.mxu0 0.0
    %822 = vmatprep.subr.mxu0 0.0
    %823 = vmatpush1.msra.mxu0 0.0
    %824 = vmatprep.subr.mxu0 0.0
    %825 = vmatpush1.msra.mxu0 0.0
    %826 = vmatprep.subr.mxu0 0.0
    %827 = vmatpush1.msra.mxu0 0.0
    %828 = vmatprep.subr.mxu0 0.0
    %829 = vmatpush1.msra.mxu0 0.0
    %830 = vmatprep.subr.mxu0 0.0
    %831 = vmatpush1.msra.mxu0 0.0
    %832 = vmatprep.subr.mxu0 0.0
    %833 = vmatpush1.msra.mxu0 0.0
    %834 = vmatprep.subr.mxu0 0.0
    %835 = vmatpush1.msra.mxu0 0.0
    %836 = vmatprep.subr.mxu0 0.0
    %837 = vmatpush1.msra.mxu0 0.0
    %838 = vmatprep.mubr.f32.mxu0 0.0
    %839 = vmatmul.mubr.f32.gmra.mrb[0].mxu0 %v772
    %v840 = vpop.f32.mrb[0].mxu0
    %v841 = vadd.f32 0.0, %v840
    %v842 = vpop.f32.mrb[0].mxu0
    %843 = vdwg.mxu0
    %v845 = vrot.slane %v841, 4
    %v847 = vadd.f32 %v123, %v845
    %v848 = vxor.u32 %v847, 2147483648
    %v849 = vmul.f32 %v848, 1.442695
    %v850 = vpow.pop %v849
    %v851 = vadd.f32 %v850, 1.0
    %v852 = vrcp.pop %v851
    %v853 = vmul.f32 1.0, %v852
    %v854 = vmul.f32 %v853, 2.0
    %v855 = vsub.f32 %v854, 1.0
    %v857 = vrot.slane %v761, 6
    %v859 = vmul.f32 %v853, %v857
    %861 = vrot.lane.b32.xlu0 %v855, 64
    %v862 = vpop.permute.xlu0 %861
    %v864 = vmul.f32 %v853, %v862
    %866 = vrot.lane.b32.xlu0 %v864, 32
    %v867 = vpop.permute.xlu0 %866
    %v869 = vadd.f32 %v859, %v867
    %v870 = vtanh.pop %v869
    %872 = vrot.lane.b32.xlu0 %v870, 64
    %v873 = vpop.permute.xlu0 %872
    %v875 = vmul.f32 %v853, %v873
    %v877 = vrot.slane %v875, 4
    %878 = vrot.lane.b32.xlu0 %v877, 32
    %v879 = vpop.permute.xlu0 %878
    %v880 = vsel %vm129, %v879, 0
    %882 = vmatprep.subr.mxu0 0.0
    %883 = vmatpush1.msra.mxu0 %v31
    %884 = vmatprep.subr.mxu0 0.0
    %885 = vmatpush1.msra.mxu0 %v32
    %886 = vmatprep.subr.mxu0 0.0
    %887 = vmatpush1.msra.mxu0 %v33
    %888 = vmatprep.subr.mxu0 0.0
    %889 = vmatpush1.msra.mxu0 %v34
    %890 = vmatprep.subr.mxu0 0.0
    %891 = vmatpush1.msra.mxu0 0.0
    %892 = vmatprep.subr.mxu0 0.0
    %893 = vmatpush1.msra.mxu0 0.0
    %894 = vmatprep.subr.mxu0 0.0
    %895 = vmatpush1.msra.mxu0 0.0
    %896 = vmatprep.subr.mxu0 0.0
    %897 = vmatpush1.msra.mxu0 0.0
    %898 = vmatprep.subr.mxu0 0.0
    %899 = vmatpush1.msra.mxu0 0.0
    %900 = vmatprep.subr.mxu0 0.0
    %901 = vmatpush1.msra.mxu0 0.0
    %902 = vmatprep.subr.mxu0 0.0
    %903 = vmatpush1.msra.mxu0 0.0
    %904 = vmatprep.subr.mxu0 0.0
    %905 = vmatpush1.msra.mxu0 0.0
    %906 = vmatprep.subr.mxu0 0.0
    %907 = vmatpush1.msra.mxu0 0.0
    %908 = vmatprep.subr.mxu0 0.0
    %909 = vmatpush1.msra.mxu0 0.0
    %910 = vmatprep.subr.mxu0 0.0
    %911 = vmatpush1.msra.mxu0 0.0
    %912 = vmatprep.subr.mxu0 0.0
    %913 = vmatpush1.msra.mxu0 0.0
    %914 = vmatprep.subr.mxu0 0.0
    %915 = vmatpush1.msra.mxu0 0.0
    %916 = vmatprep.subr.mxu0 0.0
    %917 = vmatpush1.msra.mxu0 0.0
    %918 = vmatprep.subr.mxu0 0.0
    %919 = vmatpush1.msra.mxu0 0.0
    %920 = vmatprep.subr.mxu0 0.0
    %921 = vmatpush1.msra.mxu0 0.0
    %922 = vmatprep.subr.mxu0 0.0
    %923 = vmatpush1.msra.mxu0 0.0
    %924 = vmatprep.subr.mxu0 0.0
    %925 = vmatpush1.msra.mxu0 0.0
    %926 = vmatprep.subr.mxu0 0.0
    %927 = vmatpush1.msra.mxu0 0.0
    %928 = vmatprep.subr.mxu0 0.0
    %929 = vmatpush1.msra.mxu0 0.0
    %930 = vmatprep.subr.mxu0 0.0
    %931 = vmatpush1.msra.mxu0 0.0
    %932 = vmatprep.subr.mxu0 0.0
    %933 = vmatpush1.msra.mxu0 0.0
    %934 = vmatprep.subr.mxu0 0.0
    %935 = vmatpush1.msra.mxu0 0.0
    %936 = vmatprep.subr.mxu0 0.0
    %937 = vmatpush1.msra.mxu0 0.0
    %938 = vmatprep.subr.mxu0 0.0
    %939 = vmatpush1.msra.mxu0 0.0
    %940 = vmatprep.subr.mxu0 0.0
    %941 = vmatpush1.msra.mxu0 0.0
    %942 = vmatprep.subr.mxu0 0.0
    %943 = vmatpush1.msra.mxu0 0.0
    %944 = vmatprep.subr.mxu0 0.0
    %945 = vmatpush1.msra.mxu0 0.0
    %946 = vmatprep.mubr.f32.mxu0 0.0
    %947 = vmatmul.mubr.f32.gmra.mrb[0].mxu0 %v880
    %v948 = vpop.f32.mrb[0].mxu0
    %v949 = vadd.f32 0.0, %v948
    %v950 = vpop.f32.mrb[0].mxu0
    %951 = vdwg.mxu0
    %v953 = vrot.slane %v949, 2
    %v955 = vadd.f32 %v123, %v953
    %v956 = vxor.u32 %v955, 2147483648
    %v957 = vmul.f32 %v956, 1.442695
    %v958 = vpow.pop %v957
    %v959 = vadd.f32 %v958, 1.0
    %v960 = vrcp.pop %v959
    %v961 = vmul.f32 1.0, %v960
    %v962 = vmul.f32 %v961, 2.0
    %v963 = vsub.f32 %v962, 1.0
    %v965 = vrot.slane %v869, 6
    %v967 = vmul.f32 %v961, %v965
    %969 = vrot.lane.b32.xlu0 %v963, 64
    %v970 = vpop.permute.xlu0 %969
    %v972 = vmul.f32 %v961, %v970
    %974 = vrot.lane.b32.xlu0 %v972, 32
    %v975 = vpop.permute.xlu0 %974
    %v977 = vadd.f32 %v967, %v975
    %v978 = vtanh.pop %v977
    %980 = vrot.lane.b32.xlu0 %v978, 64
    %v981 = vpop.permute.xlu0 %980
    %v983 = vmul.f32 %v961, %v981
    %vm984 = vcmask 1041408
    %v985 = vsel %vm984, %v232, %v339
    %v986 = vsel %vm47, %v985, %v447
    %vm987 = vcmask 1045504
    %v988 = vsel %vm987, %v986, %v555
    %v989 = vsel %vm984, %v660, %v767
    %v990 = vsel %vm47, %v989, %v875
    %v991 = vsel %vm987, %v990, %v983
    %v992 = vld [vmem:[#allocation2 + $0x30] sm:$0xff]
    %v993 = vld [vmem:[#allocation2 + $0x38] sm:$0xff]
    %v994 = vld [vmem:[#allocation2 + $0x40] sm:$0xff]
    %v995 = vld [vmem:[#allocation2 + $0x48] sm:$0xff]
    %v996 = vld [vmem:[#allocation2 + $0x50] sm:$0xff]
    %v997 = vld [vmem:[#allocation2 + $0x58] sm:$0xff]
    %v998 = vld [vmem:[#allocation2 + $0x60] sm:$0xff]
    %v999 = vld [vmem:[#allocation2 + $0x68] sm:$0xff]
    %v1000 = vld [vmem:[#allocation2 + $0x70] sm:$0x1]
    %v1001 = vlaneseq
    %v1002 = vshrl.u32 %v1001, 7
    %v1003 = vsub.s32 0, %v1002
    %v1004 = vrot.slane %v1000, %v1003
    %1007 = vrot.lane.b32.xlu0 %v988, 32
    %v1008 = vpop.permute.xlu0 %1007
    %1009 = vrot.lane.b32.xlu0 %v991, 32
    %v1010 = vpop.permute.xlu0 %1009
    %v1011 = vsel %vm129, %v1008, 0
    %v1013 = vsel %vm129, %v1010, 0
    %1015 = vmatprep.subr.mxu0 0.0
    %1016 = vmatpush1.msra.mxu0 %v992
    %1017 = vmatprep.subr.mxu0 0.0
    %1018 = vmatpush1.msra.mxu0 %v993
    %1019 = vmatprep.subr.mxu0 0.0
    %1020 = vmatpush1.msra.mxu0 %v994
    %1021 = vmatprep.subr.mxu0 0.0
    %1022 = vmatpush1.msra.mxu0 %v995
    %1023 = vmatprep.subr.mxu0 0.0
    %1024 = vmatpush1.msra.mxu0 0.0
    %1025 = vmatprep.subr.mxu0 0.0
    %1026 = vmatpush1.msra.mxu0 0.0
    %1027 = vmatprep.subr.mxu0 0.0
    %1028 = vmatpush1.msra.mxu0 0.0
    %1029 = vmatprep.subr.mxu0 0.0
    %1030 = vmatpush1.msra.mxu0 0.0
    %1031 = vmatprep.subr.mxu0 0.0
    %1032 = vmatpush1.msra.mxu0 0.0
    %1033 = vmatprep.subr.mxu0 0.0
    %1034 = vmatpush1.msra.mxu0 0.0
    %1035 = vmatprep.subr.mxu0 0.0
    %1036 = vmatpush1.msra.mxu0 0.0
    %1037 = vmatprep.subr.mxu0 0.0
    %1038 = vmatpush1.msra.mxu0 0.0
    %1039 = vmatprep.subr.mxu0 0.0
    %1040 = vmatpush1.msra.mxu0 0.0
    %1041 = vmatprep.subr.mxu0 0.0
    %1042 = vmatpush1.msra.mxu0 0.0
    %1043 = vmatprep.subr.mxu0 0.0
    %1044 = vmatpush1.msra.mxu0 0.0
    %1045 = vmatprep.subr.mxu0 0.0
    %1046 = vmatpush1.msra.mxu0 0.0
    %1047 = vmatprep.subr.mxu0 0.0
    %1048 = vmatpush1.msra.mxu0 0.0
    %1049 = vmatprep.subr.mxu0 0.0
    %1050 = vmatpush1.msra.mxu0 0.0
    %1051 = vmatprep.subr.mxu0 0.0
    %1052 = vmatpush1.msra.mxu0 0.0
    %1053 = vmatprep.subr.mxu0 0.0
    %1054 = vmatpush1.msra.mxu0 0.0
    %1055 = vmatprep.subr.mxu0 0.0
    %1056 = vmatpush1.msra.mxu0 0.0
    %1057 = vmatprep.subr.mxu0 0.0
    %1058 = vmatpush1.msra.mxu0 0.0
    %1059 = vmatprep.subr.mxu0 0.0
    %1060 = vmatpush1.msra.mxu0 0.0
    %1061 = vmatprep.subr.mxu0 0.0
    %1062 = vmatpush1.msra.mxu0 0.0
    %1063 = vmatprep.subr.mxu0 0.0
    %1064 = vmatpush1.msra.mxu0 0.0
    %1065 = vmatprep.subr.mxu0 0.0
    %1066 = vmatpush1.msra.mxu0 0.0
    %1067 = vmatprep.subr.mxu0 0.0
    %1068 = vmatpush1.msra.mxu0 0.0
    %1069 = vmatprep.subr.mxu0 0.0
    %1070 = vmatpush1.msra.mxu0 0.0
    %1071 = vmatprep.subr.mxu0 0.0
    %1072 = vmatpush1.msra.mxu0 0.0
    %1073 = vmatprep.subr.mxu0 0.0
    %1074 = vmatpush1.msra.mxu0 0.0
    %1075 = vmatprep.subr.mxu0 0.0
    %1076 = vmatpush1.msra.mxu0 0.0
    %1077 = vmatprep.subr.mxu0 0.0
    %1078 = vmatpush1.msra.mxu0 0.0
    %1079 = vmatprep.mubr.f32.mxu0 0.0
    %1080 = vmatmul.mubr.f32.gmra.mrb[0].mxu0 %v1011
    %v1081 = vpop.f32.mrb[0].mxu0
    %v1082 = vadd.f32 %v1004, %v1081
    %v1083 = vpop.f32.mrb[0].mxu0
    %1084 = vmatprep.mubr.f32.mxu0 0.0
    %1085 = vmatmul.mubr.f32.gmra.mrb[0].mxu0 %v1013
    %v1086 = vpop.f32.mrb[0].mxu0
    %v1087 = vadd.f32 %v1004, %v1086
    %v1088 = vpop.f32.mrb[0].mxu0
    %1089 = vdwg.mxu0
    %s1090 = scalar_lea.vmem %s1, 2
    %v1091 = vld [vmem:[%s1090] sm:$0x3]
    %s1092 = scalar_lea.vmem %s1, 6
    %v1093 = vld [vmem:[%s1092] sm:$0x3]
    %v1095 = vsel %vm129, %v1091, 0
    %1097 = vmatprep.subr.mxu0 0.0
    %1098 = vmatpush1.msra.mxu0 %v996
    %1099 = vmatprep.subr.mxu0 0.0
    %1100 = vmatpush1.msra.mxu0 %v997
    %1101 = vmatprep.subr.mxu0 0.0
    %1102 = vmatpush1.msra.mxu0 %v998
    %1103 = vmatprep.subr.mxu0 0.0
    %1104 = vmatpush1.msra.mxu0 %v999
    %1105 = vmatprep.subr.mxu0 0.0
    %1106 = vmatpush1.msra.mxu0 0.0
    %1107 = vmatprep.subr.mxu0 0.0
    %1108 = vmatpush1.msra.mxu0 0.0
    %1109 = vmatprep.subr.mxu0 0.0
    %1110 = vmatpush1.msra.mxu0 0.0
    %1111 = vmatprep.subr.mxu0 0.0
    %1112 = vmatpush1.msra.mxu0 0.0
    %1113 = vmatprep.subr.mxu0 0.0
    %1114 = vmatpush1.msra.mxu0 0.0
    %1115 = vmatprep.subr.mxu0 0.0
    %1116 = vmatpush1.msra.mxu0 0.0
    %1117 = vmatprep.subr.mxu0 0.0
    %1118 = vmatpush1.msra.mxu0 0.0
    %1119 = vmatprep.subr.mxu0 0.0
    %1120 = vmatpush1.msra.mxu0 0.0
    %1121 = vmatprep.subr.mxu0 0.0
    %1122 = vmatpush1.msra.mxu0 0.0
    %1123 = vmatprep.subr.mxu0 0.0
    %1124 = vmatpush1.msra.mxu0 0.0
    %1125 = vmatprep.subr.mxu0 0.0
    %1126 = vmatpush1.msra.mxu0 0.0
    %1127 = vmatprep.subr.mxu0 0.0
    %1128 = vmatpush1.msra.mxu0 0.0
    %1129 = vmatprep.subr.mxu0 0.0
    %1130 = vmatpush1.msra.mxu0 0.0
    %1131 = vmatprep.subr.mxu0 0.0
    %1132 = vmatpush1.msra.mxu0 0.0
    %1133 = vmatprep.subr.mxu0 0.0
    %1134 = vmatpush1.msra.mxu0 0.0
    %1135 = vmatprep.subr.mxu0 0.0
    %1136 = vmatpush1.msra.mxu0 0.0
    %1137 = vmatprep.subr.mxu0 0.0
    %1138 = vmatpush1.msra.mxu0 0.0
    %1139 = vmatprep.subr.mxu0 0.0
    %1140 = vmatpush1.msra.mxu0 0.0
    %1141 = vmatprep.subr.mxu0 0.0
    %1142 = vmatpush1.msra.mxu0 0.0
    %1143 = vmatprep.subr.mxu0 0.0
    %1144 = vmatpush1.msra.mxu0 0.0
    %1145 = vmatprep.subr.mxu0 0.0
    %1146 = vmatpush1.msra.mxu0 0.0
    %1147 = vmatprep.subr.mxu0 0.0
    %1148 = vmatpush1.msra.mxu0 0.0
    %1149 = vmatprep.subr.mxu0 0.0
    %1150 = vmatpush1.msra.mxu0 0.0
    %1151 = vmatprep.subr.mxu0 0.0
    %1152 = vmatpush1.msra.mxu0 0.0
    %1153 = vmatprep.subr.mxu0 0.0
    %1154 = vmatpush1.msra.mxu0 0.0
    %1155 = vmatprep.subr.mxu0 0.0
    %1156 = vmatpush1.msra.mxu0 0.0
    %1157 = vmatprep.subr.mxu0 0.0
    %1158 = vmatpush1.msra.mxu0 0.0
    %1159 = vmatprep.subr.mxu0 0.0
    %1160 = vmatpush1.msra.mxu0 0.0
    %1161 = vmatprep.mubr.f32.mxu0 0.0
    %1162 = vmatmul.mubr.f32.gmra.mrb[0].mxu0 %v1095
    %v1163 = vpop.f32.mrb[0].mxu0
    %v1164 = vadd.f32 0.0, %v1163
    %v1165 = vpop.f32.mrb[0].mxu0
    %1166 = vdwg.mxu0
    %v1167 = vadd.f32 %v1082, %v1164
    %v1168 = vxor.u32 %v1167, 2147483648
    %v1169 = vmul.f32 %v1168, 1.442695
    %v1170 = vpow.pop %v1169
    %v1171 = vadd.f32 %v1170, 1.0
    %v1172 = vrcp.pop %v1171
    %v1173 = vmul.f32 1.0, %v1172
    %v1174 = vmul.f32 %v1173, 2.0
    %v1175 = vsub.f32 %v1174, 1.0
    %1177 = vrot.lane.b32.xlu0 %v1093, 32
    %v1178 = vpop.permute.xlu0 %1177
    %v1180 = vmul.f32 %v1173, %v1178
    %1182 = vrot.lane.b32.xlu0 %v1175, 64
    %v1183 = vpop.permute.xlu0 %1182
    %v1185 = vmul.f32 %v1173, %v1183
    %1187 = vrot.lane.b32.xlu0 %v1185, 32
    %v1188 = vpop.permute.xlu0 %1187
    %v1190 = vadd.f32 %v1180, %v1188
    %v1191 = vtanh.pop %v1190
    %1193 = vrot.lane.b32.xlu0 %v1191, 64
    %v1194 = vpop.permute.xlu0 %1193
    %v1196 = vmul.f32 %v1173, %v1194
    %1198 = vrot.lane.b32.xlu0 %v1196, 32
    %v1199 = vpop.permute.xlu0 %1198
    %v1200 = vsel %vm129, %v1199, 0
    %1202 = vmatprep.subr.mxu0 0.0
    %1203 = vmatpush1.msra.mxu0 %v996
    %1204 = vmatprep.subr.mxu0 0.0
    %1205 = vmatpush1.msra.mxu0 %v997
    %1206 = vmatprep.subr.mxu0 0.0
    %1207 = vmatpush1.msra.mxu0 %v998
    %1208 = vmatprep.subr.mxu0 0.0
    %1209 = vmatpush1.msra.mxu0 %v999
    %1210 = vmatprep.subr.mxu0 0.0
    %1211 = vmatpush1.msra.mxu0 0.0
    %1212 = vmatprep.subr.mxu0 0.0
    %1213 = vmatpush1.msra.mxu0 0.0
    %1214 = vmatprep.subr.mxu0 0.0
    %1215 = vmatpush1.msra.mxu0 0.0
    %1216 = vmatprep.subr.mxu0 0.0
    %1217 = vmatpush1.msra.mxu0 0.0
    %1218 = vmatprep.subr.mxu0 0.0
    %1219 = vmatpush1.msra.mxu0 0.0
    %1220 = vmatprep.subr.mxu0 0.0
    %1221 = vmatpush1.msra.mxu0 0.0
    %1222 = vmatprep.subr.mxu0 0.0
    %1223 = vmatpush1.msra.mxu0 0.0
    %1224 = vmatprep.subr.mxu0 0.0
    %1225 = vmatpush1.msra.mxu0 0.0
    %1226 = vmatprep.subr.mxu0 0.0
    %1227 = vmatpush1.msra.mxu0 0.0
    %1228 = vmatprep.subr.mxu0 0.0
    %1229 = vmatpush1.msra.mxu0 0.0
    %1230 = vmatprep.subr.mxu0 0.0
    %1231 = vmatpush1.msra.mxu0 0.0
    %1232 = vmatprep.subr.mxu0 0.0
    %1233 = vmatpush1.msra.mxu0 0.0
    %1234 = vmatprep.subr.mxu0 0.0
    %1235 = vmatpush1.msra.mxu0 0.0
    %1236 = vmatprep.subr.mxu0 0.0
    %1237 = vmatpush1.msra.mxu0 0.0
    %1238 = vmatprep.subr.mxu0 0.0
    %1239 = vmatpush1.msra.mxu0 0.0
    %1240 = vmatprep.subr.mxu0 0.0
    %1241 = vmatpush1.msra.mxu0 0.0
    %1242 = vmatprep.subr.mxu0 0.0
    %1243 = vmatpush1.msra.mxu0 0.0
    %1244 = vmatprep.subr.mxu0 0.0
    %1245 = vmatpush1.msra.mxu0 0.0
    %1246 = vmatprep.subr.mxu0 0.0
    %1247 = vmatpush1.msra.mxu0 0.0
    %1248 = vmatprep.subr.mxu0 0.0
    %1249 = vmatpush1.msra.mxu0 0.0
    %1250 = vmatprep.subr.mxu0 0.0
    %1251 = vmatpush1.msra.mxu0 0.0
    %1252 = vmatprep.subr.mxu0 0.0
    %1253 = vmatpush1.msra.mxu0 0.0
    %1254 = vmatprep.subr.mxu0 0.0
    %1255 = vmatpush1.msra.mxu0 0.0
    %1256 = vmatprep.subr.mxu0 0.0
    %1257 = vmatpush1.msra.mxu0 0.0
    %1258 = vmatprep.subr.mxu0 0.0
    %1259 = vmatpush1.msra.mxu0 0.0
    %1260 = vmatprep.subr.mxu0 0.0
    %1261 = vmatpush1.msra.mxu0 0.0
    %1262 = vmatprep.subr.mxu0 0.0
    %1263 = vmatpush1.msra.mxu0 0.0
    %1264 = vmatprep.subr.mxu0 0.0
    %1265 = vmatpush1.msra.mxu0 0.0
    %1266 = vmatprep.mubr.f32.mxu0 0.0
    %1267 = vmatmul.mubr.f32.gmra.mrb[0].mxu0 %v1200
    %v1268 = vpop.f32.mrb[0].mxu0
    %v1269 = vadd.f32 0.0, %v1268
    %v1270 = vpop.f32.mrb[0].mxu0
    %1271 = vdwg.mxu0
    %v1273 = vrot.slane %v1269, 6
    %v1275 = vadd.f32 %v1082, %v1273
    %v1276 = vxor.u32 %v1275, 2147483648
    %v1277 = vmul.f32 %v1276, 1.442695
    %v1278 = vpow.pop %v1277
    %v1279 = vadd.f32 %v1278, 1.0
    %v1280 = vrcp.pop %v1279
    %v1281 = vmul.f32 1.0, %v1280
    %v1282 = vmul.f32 %v1281, 2.0
    %v1283 = vsub.f32 %v1282, 1.0
    %v1285 = vrot.slane %v1190, 6
    %v1287 = vmul.f32 %v1281, %v1285
    %1289 = vrot.lane.b32.xlu0 %v1283, 64
    %v1290 = vpop.permute.xlu0 %1289
    %v1292 = vmul.f32 %v1281, %v1290
    %1294 = vrot.lane.b32.xlu0 %v1292, 32
    %v1295 = vpop.permute.xlu0 %1294
    %v1297 = vadd.f32 %v1287, %v1295
    %v1298 = vtanh.pop %v1297
    %1300 = vrot.lane.b32.xlu0 %v1298, 64
    %v1301 = vpop.permute.xlu0 %1300
    %v1303 = vmul.f32 %v1281, %v1301
    %v1305 = vrot.slane %v1303, 2
    %1306 = vrot.lane.b32.xlu0 %v1305, 32
    %v1307 = vpop.permute.xlu0 %1306
    %v1308 = vsel %vm129, %v1307, 0
    %1310 = vmatprep.subr.mxu0 0.0
    %1311 = vmatpush1.msra.mxu0 %v996
    %1312 = vmatprep.subr.mxu0 0.0
    %1313 = vmatpush1.msra.mxu0 %v997
    %1314 = vmatprep.subr.mxu0 0.0
    %1315 = vmatpush1.msra.mxu0 %v998
    %1316 = vmatprep.subr.mxu0 0.0
    %1317 = vmatpush1.msra.mxu0 %v999
    %1318 = vmatprep.subr.mxu0 0.0
    %1319 = vmatpush1.msra.mxu0 0.0
    %1320 = vmatprep.subr.mxu0 0.0
    %1321 = vmatpush1.msra.mxu0 0.0
    %1322 = vmatprep.subr.mxu0 0.0
    %1323 = vmatpush1.msra.mxu0 0.0
    %1324 = vmatprep.subr.mxu0 0.0
    %1325 = vmatpush1.msra.mxu0 0.0
    %1326 = vmatprep.subr.mxu0 0.0
    %1327 = vmatpush1.msra.mxu0 0.0
    %1328 = vmatprep.subr.mxu0 0.0
    %1329 = vmatpush1.msra.mxu0 0.0
    %1330 = vmatprep.subr.mxu0 0.0
    %1331 = vmatpush1.msra.mxu0 0.0
    %1332 = vmatprep.subr.mxu0 0.0
    %1333 = vmatpush1.msra.mxu0 0.0
    %1334 = vmatprep.subr.mxu0 0.0
    %1335 = vmatpush1.msra.mxu0 0.0
    %1336 = vmatprep.subr.mxu0 0.0
    %1337 = vmatpush1.msra.mxu0 0.0
    %1338 = vmatprep.subr.mxu0 0.0
    %1339 = vmatpush1.msra.mxu0 0.0
    %1340 = vmatprep.subr.mxu0 0.0
    %1341 = vmatpush1.msra.mxu0 0.0
    %1342 = vmatprep.subr.mxu0 0.0
    %1343 = vmatpush1.msra.mxu0 0.0
    %1344 = vmatprep.subr.mxu0 0.0
    %1345 = vmatpush1.msra.mxu0 0.0
    %1346 = vmatprep.subr.mxu0 0.0
    %1347 = vmatpush1.msra.mxu0 0.0
    %1348 = vmatprep.subr.mxu0 0.0
    %1349 = vmatpush1.msra.mxu0 0.0
    %1350 = vmatprep.subr.mxu0 0.0
    %1351 = vmatpush1.msra.mxu0 0.0
    %1352 = vmatprep.subr.mxu0 0.0
    %1353 = vmatpush1.msra.mxu0 0.0
    %1354 = vmatprep.subr.mxu0 0.0
    %1355 = vmatpush1.msra.mxu0 0.0
    %1356 = vmatprep.subr.mxu0 0.0
    %1357 = vmatpush1.msra.mxu0 0.0
    %1358 = vmatprep.subr.mxu0 0.0
    %1359 = vmatpush1.msra.mxu0 0.0
    %1360 = vmatprep.subr.mxu0 0.0
    %1361 = vmatpush1.msra.mxu0 0.0
    %1362 = vmatprep.subr.mxu0 0.0
    %1363 = vmatpush1.msra.mxu0 0.0
    %1364 = vmatprep.subr.mxu0 0.0
    %1365 = vmatpush1.msra.mxu0 0.0
    %1366 = vmatprep.subr.mxu0 0.0
    %1367 = vmatpush1.msra.mxu0 0.0
    %1368 = vmatprep.subr.mxu0 0.0
    %1369 = vmatpush1.msra.mxu0 0.0
    %1370 = vmatprep.subr.mxu0 0.0
    %1371 = vmatpush1.msra.mxu0 0.0
    %1372 = vmatprep.subr.mxu0 0.0
    %1373 = vmatpush1.msra.mxu0 0.0
    %1374 = vmatprep.mubr.f32.mxu0 0.0
    %1375 = vmatmul.mubr.f32.gmra.mrb[0].mxu0 %v1308
    %v1376 = vpop.f32.mrb[0].mxu0
    %v1377 = vadd.f32 0.0, %v1376
    %v1378 = vpop.f32.mrb[0].mxu0
    %1379 = vdwg.mxu0
    %v1381 = vrot.slane %v1377, 4
    %v1383 = vadd.f32 %v1082, %v1381
    %v1384 = vxor.u32 %v1383, 2147483648
    %v1385 = vmul.f32 %v1384, 1.442695
    %v1386 = vpow.pop %v1385
    %v1387 = vadd.f32 %v1386, 1.0
    %v1388 = vrcp.pop %v1387
    %v1389 = vmul.f32 1.0, %v1388
    %v1390 = vmul.f32 %v1389, 2.0
    %v1391 = vsub.f32 %v1390, 1.0
    %v1393 = vrot.slane %v1297, 6
    %v1395 = vmul.f32 %v1389, %v1393
    %1397 = vrot.lane.b32.xlu0 %v1391, 64
    %v1398 = vpop.permute.xlu0 %1397
    %v1400 = vmul.f32 %v1389, %v1398
    %1402 = vrot.lane.b32.xlu0 %v1400, 32
    %v1403 = vpop.permute.xlu0 %1402
    %v1405 = vadd.f32 %v1395, %v1403
    %v1406 = vtanh.pop %v1405
    %1408 = vrot.lane.b32.xlu0 %v1406, 64
    %v1409 = vpop.permute.xlu0 %1408
    %v1411 = vmul.f32 %v1389, %v1409
    %v1413 = vrot.slane %v1411, 4
    %1414 = vrot.lane.b32.xlu0 %v1413, 32
    %v1415 = vpop.permute.xlu0 %1414
    %v1416 = vsel %vm129, %v1415, 0
    %1418 = vmatprep.subr.mxu0 0.0
    %1419 = vmatpush1.msra.mxu0 %v996
    %1420 = vmatprep.subr.mxu0 0.0
    %1421 = vmatpush1.msra.mxu0 %v997
    %1422 = vmatprep.subr.mxu0 0.0
    %1423 = vmatpush1.msra.mxu0 %v998
    %1424 = vmatprep.subr.mxu0 0.0
    %1425 = vmatpush1.msra.mxu0 %v999
    %1426 = vmatprep.subr.mxu0 0.0
    %1427 = vmatpush1.msra.mxu0 0.0
    %1428 = vmatprep.subr.mxu0 0.0
    %1429 = vmatpush1.msra.mxu0 0.0
    %1430 = vmatprep.subr.mxu0 0.0
    %1431 = vmatpush1.msra.mxu0 0.0
    %1432 = vmatprep.subr.mxu0 0.0
    %1433 = vmatpush1.msra.mxu0 0.0
    %1434 = vmatprep.subr.mxu0 0.0
    %1435 = vmatpush1.msra.mxu0 0.0
    %1436 = vmatprep.subr.mxu0 0.0
    %1437 = vmatpush1.msra.mxu0 0.0
    %1438 = vmatprep.subr.mxu0 0.0
    %1439 = vmatpush1.msra.mxu0 0.0
    %1440 = vmatprep.subr.mxu0 0.0
    %1441 = vmatpush1.msra.mxu0 0.0
    %1442 = vmatprep.subr.mxu0 0.0
    %1443 = vmatpush1.msra.mxu0 0.0
    %1444 = vmatprep.subr.mxu0 0.0
    %1445 = vmatpush1.msra.mxu0 0.0
    %1446 = vmatprep.subr.mxu0 0.0
    %1447 = vmatpush1.msra.mxu0 0.0
    %1448 = vmatprep.subr.mxu0 0.0
    %1449 = vmatpush1.msra.mxu0 0.0
    %1450 = vmatprep.subr.mxu0 0.0
    %1451 = vmatpush1.msra.mxu0 0.0
    %1452 = vmatprep.subr.mxu0 0.0
    %1453 = vmatpush1.msra.mxu0 0.0
    %1454 = vmatprep.subr.mxu0 0.0
    %1455 = vmatpush1.msra.mxu0 0.0
    %1456 = vmatprep.subr.mxu0 0.0
    %1457 = vmatpush1.msra.mxu0 0.0
    %1458 = vmatprep.subr.mxu0 0.0
    %1459 = vmatpush1.msra.mxu0 0.0
    %1460 = vmatprep.subr.mxu0 0.0
    %1461 = vmatpush1.msra.mxu0 0.0
    %1462 = vmatprep.subr.mxu0 0.0
    %1463 = vmatpush1.msra.mxu0 0.0
    %1464 = vmatprep.subr.mxu0 0.0
    %1465 = vmatpush1.msra.mxu0 0.0
    %1466 = vmatprep.subr.mxu0 0.0
    %1467 = vmatpush1.msra.mxu0 0.0
    %1468 = vmatprep.subr.mxu0 0.0
    %1469 = vmatpush1.msra.mxu0 0.0
    %1470 = vmatprep.subr.mxu0 0.0
    %1471 = vmatpush1.msra.mxu0 0.0
    %1472 = vmatprep.subr.mxu0 0.0
    %1473 = vmatpush1.msra.mxu0 0.0
    %1474 = vmatprep.subr.mxu0 0.0
    %1475 = vmatpush1.msra.mxu0 0.0
    %1476 = vmatprep.subr.mxu0 0.0
    %1477 = vmatpush1.msra.mxu0 0.0
    %1478 = vmatprep.subr.mxu0 0.0
    %1479 = vmatpush1.msra.mxu0 0.0
    %1480 = vmatprep.subr.mxu0 0.0
    %1481 = vmatpush1.msra.mxu0 0.0
    %1482 = vmatprep.mubr.f32.mxu0 0.0
    %1483 = vmatmul.mubr.f32.gmra.mrb[0].mxu0 %v1416
    %v1484 = vpop.f32.mrb[0].mxu0
    %v1485 = vadd.f32 0.0, %v1484
    %v1486 = vpop.f32.mrb[0].mxu0
    %1487 = vdwg.mxu0
    %v1489 = vrot.slane %v1485, 2
    %v1491 = vadd.f32 %v1082, %v1489
    %v1492 = vxor.u32 %v1491, 2147483648
    %v1493 = vmul.f32 %v1492, 1.442695
    %v1494 = vpow.pop %v1493
    %v1495 = vadd.f32 %v1494, 1.0
    %v1496 = vrcp.pop %v1495
    %v1497 = vmul.f32 1.0, %v1496
    %v1498 = vmul.f32 %v1497, 2.0
    %v1499 = vsub.f32 %v1498, 1.0
    %v1501 = vrot.slane %v1405, 6
    %v1503 = vmul.f32 %v1497, %v1501
    %1505 = vrot.lane.b32.xlu0 %v1499, 64
    %v1506 = vpop.permute.xlu0 %1505
    %v1508 = vmul.f32 %v1497, %v1506
    %1510 = vrot.lane.b32.xlu0 %v1508, 32
    %v1511 = vpop.permute.xlu0 %1510
    %v1513 = vadd.f32 %v1503, %v1511
    %v1514 = vtanh.pop %v1513
    %1516 = vrot.lane.b32.xlu0 %v1514, 64
    %v1517 = vpop.permute.xlu0 %1516
    %v1519 = vmul.f32 %v1497, %v1517
    %v1521 = vrot.slane %v1519, 6
    %1522 = vrot.lane.b32.xlu0 %v1521, 32
    %v1523 = vpop.permute.xlu0 %1522
    %v1524 = vsel %vm129, %v1523, 0
    %1526 = vmatprep.subr.mxu0 0.0
    %1527 = vmatpush1.msra.mxu0 %v996
    %1528 = vmatprep.subr.mxu0 0.0
    %1529 = vmatpush1.msra.mxu0 %v997
    %1530 = vmatprep.subr.mxu0 0.0
    %1531 = vmatpush1.msra.mxu0 %v998
    %1532 = vmatprep.subr.mxu0 0.0
    %1533 = vmatpush1.msra.mxu0 %v999
    %1534 = vmatprep.subr.mxu0 0.0
    %1535 = vmatpush1.msra.mxu0 0.0
    %1536 = vmatprep.subr.mxu0 0.0
    %1537 = vmatpush1.msra.mxu0 0.0
    %1538 = vmatprep.subr.mxu0 0.0
    %1539 = vmatpush1.msra.mxu0 0.0
    %1540 = vmatprep.subr.mxu0 0.0
    %1541 = vmatpush1.msra.mxu0 0.0
    %1542 = vmatprep.subr.mxu0 0.0
    %1543 = vmatpush1.msra.mxu0 0.0
    %1544 = vmatprep.subr.mxu0 0.0
    %1545 = vmatpush1.msra.mxu0 0.0
    %1546 = vmatprep.subr.mxu0 0.0
    %1547 = vmatpush1.msra.mxu0 0.0
    %1548 = vmatprep.subr.mxu0 0.0
    %1549 = vmatpush1.msra.mxu0 0.0
    %1550 = vmatprep.subr.mxu0 0.0
    %1551 = vmatpush1.msra.mxu0 0.0
    %1552 = vmatprep.subr.mxu0 0.0
    %1553 = vmatpush1.msra.mxu0 0.0
    %1554 = vmatprep.subr.mxu0 0.0
    %1555 = vmatpush1.msra.mxu0 0.0
    %1556 = vmatprep.subr.mxu0 0.0
    %1557 = vmatpush1.msra.mxu0 0.0
    %1558 = vmatprep.subr.mxu0 0.0
    %1559 = vmatpush1.msra.mxu0 0.0
    %1560 = vmatprep.subr.mxu0 0.0
    %1561 = vmatpush1.msra.mxu0 0.0
    %1562 = vmatprep.subr.mxu0 0.0
    %1563 = vmatpush1.msra.mxu0 0.0
    %1564 = vmatprep.subr.mxu0 0.0
    %1565 = vmatpush1.msra.mxu0 0.0
    %1566 = vmatprep.subr.mxu0 0.0
    %1567 = vmatpush1.msra.mxu0 0.0
    %1568 = vmatprep.subr.mxu0 0.0
    %1569 = vmatpush1.msra.mxu0 0.0
    %1570 = vmatprep.subr.mxu0 0.0
    %1571 = vmatpush1.msra.mxu0 0.0
    %1572 = vmatprep.subr.mxu0 0.0
    %1573 = vmatpush1.msra.mxu0 0.0
    %1574 = vmatprep.subr.mxu0 0.0
    %1575 = vmatpush1.msra.mxu0 0.0
    %1576 = vmatprep.subr.mxu0 0.0
    %1577 = vmatpush1.msra.mxu0 0.0
    %1578 = vmatprep.subr.mxu0 0.0
    %1579 = vmatpush1.msra.mxu0 0.0
    %1580 = vmatprep.subr.mxu0 0.0
    %1581 = vmatpush1.msra.mxu0 0.0
    %1582 = vmatprep.subr.mxu0 0.0
    %1583 = vmatpush1.msra.mxu0 0.0
    %1584 = vmatprep.subr.mxu0 0.0
    %1585 = vmatpush1.msra.mxu0 0.0
    %1586 = vmatprep.subr.mxu0 0.0
    %1587 = vmatpush1.msra.mxu0 0.0
    %1588 = vmatprep.subr.mxu0 0.0
    %1589 = vmatpush1.msra.mxu0 0.0
    %1590 = vmatprep.mubr.f32.mxu0 0.0
    %1591 = vmatmul.mubr.f32.gmra.mrb[0].mxu0 %v1524
    %v1592 = vpop.f32.mrb[0].mxu0
    %v1593 = vadd.f32 0.0, %v1592
    %v1594 = vpop.f32.mrb[0].mxu0
    %1595 = vdwg.mxu0
    %v1596 = vadd.f32 %v1087, %v1593
    %v1597 = vxor.u32 %v1596, 2147483648
    %v1598 = vmul.f32 %v1597, 1.442695
    %v1599 = vpow.pop %v1598
    %v1600 = vadd.f32 %v1599, 1.0
    %v1601 = vrcp.pop %v1600
    %v1602 = vmul.f32 1.0, %v1601
    %v1603 = vmul.f32 %v1602, 2.0
    %v1604 = vsub.f32 %v1603, 1.0
    %v1606 = vrot.slane %v1513, 6
    %v1608 = vmul.f32 %v1602, %v1606
    %1610 = vrot.lane.b32.xlu0 %v1604, 64
    %v1611 = vpop.permute.xlu0 %1610
    %v1613 = vmul.f32 %v1602, %v1611
    %1615 = vrot.lane.b32.xlu0 %v1613, 32
    %v1616 = vpop.permute.xlu0 %1615
    %v1618 = vadd.f32 %v1608, %v1616
    %v1619 = vtanh.pop %v1618
    %1621 = vrot.lane.b32.xlu0 %v1619, 64
    %v1622 = vpop.permute.xlu0 %1621
    %v1624 = vmul.f32 %v1602, %v1622
    %1626 = vrot.lane.b32.xlu0 %v1624, 32
    %v1627 = vpop.permute.xlu0 %1626
    %v1628 = vsel %vm129, %v1627, 0
    %1630 = vmatprep.subr.mxu0 0.0
    %1631 = vmatpush1.msra.mxu0 %v996
    %1632 = vmatprep.subr.mxu0 0.0
    %1633 = vmatpush1.msra.mxu0 %v997
    %1634 = vmatprep.subr.mxu0 0.0
    %1635 = vmatpush1.msra.mxu0 %v998
    %1636 = vmatprep.subr.mxu0 0.0
    %1637 = vmatpush1.msra.mxu0 %v999
    %1638 = vmatprep.subr.mxu0 0.0
    %1639 = vmatpush1.msra.mxu0 0.0
    %1640 = vmatprep.subr.mxu0 0.0
    %1641 = vmatpush1.msra.mxu0 0.0
    %1642 = vmatprep.subr.mxu0 0.0
    %1643 = vmatpush1.msra.mxu0 0.0
    %1644 = vmatprep.subr.mxu0 0.0
    %1645 = vmatpush1.msra.mxu0 0.0
    %1646 = vmatprep.subr.mxu0 0.0
    %1647 = vmatpush1.msra.mxu0 0.0
    %1648 = vmatprep.subr.mxu0 0.0
    %1649 = vmatpush1.msra.mxu0 0.0
    %1650 = vmatprep.subr.mxu0 0.0
    %1651 = vmatpush1.msra.mxu0 0.0
    %1652 = vmatprep.subr.mxu0 0.0
    %1653 = vmatpush1.msra.mxu0 0.0
    %1654 = vmatprep.subr.mxu0 0.0
    %1655 = vmatpush1.msra.mxu0 0.0
    %1656 = vmatprep.subr.mxu0 0.0
    %1657 = vmatpush1.msra.mxu0 0.0
    %1658 = vmatprep.subr.mxu0 0.0
    %1659 = vmatpush1.msra.mxu0 0.0
    %1660 = vmatprep.subr.mxu0 0.0
    %1661 = vmatpush1.msra.mxu0 0.0
    %1662 = vmatprep.subr.mxu0 0.0
    %1663 = vmatpush1.msra.mxu0 0.0
    %1664 = vmatprep.subr.mxu0 0.0
    %1665 = vmatpush1.msra.mxu0 0.0
    %1666 = vmatprep.subr.mxu0 0.0
    %1667 = vmatpush1.msra.mxu0 0.0
    %1668 = vmatprep.subr.mxu0 0.0
    %1669 = vmatpush1.msra.mxu0 0.0
    %1670 = vmatprep.subr.mxu0 0.0
    %1671 = vmatpush1.msra.mxu0 0.0
    %1672 = vmatprep.subr.mxu0 0.0
    %1673 = vmatpush1.msra.mxu0 0.0
    %1674 = vmatprep.subr.mxu0 0.0
    %1675 = vmatpush1.msra.mxu0 0.0
    %1676 = vmatprep.subr.mxu0 0.0
    %1677 = vmatpush1.msra.mxu0 0.0
    %1678 = vmatprep.subr.mxu0 0.0
    %1679 = vmatpush1.msra.mxu0 0.0
    %1680 = vmatprep.subr.mxu0 0.0
    %1681 = vmatpush1.msra.mxu0 0.0
    %1682 = vmatprep.subr.mxu0 0.0
    %1683 = vmatpush1.msra.mxu0 0.0
    %1684 = vmatprep.subr.mxu0 0.0
    %1685 = vmatpush1.msra.mxu0 0.0
    %1686 = vmatprep.subr.mxu0 0.0
    %1687 = vmatpush1.msra.mxu0 0.0
    %1688 = vmatprep.subr.mxu0 0.0
    %1689 = vmatpush1.msra.mxu0 0.0
    %1690 = vmatprep.subr.mxu0 0.0
    %1691 = vmatpush1.msra.mxu0 0.0
    %1692 = vmatprep.subr.mxu0 0.0
    %1693 = vmatpush1.msra.mxu0 0.0
    %1694 = vmatprep.mubr.f32.mxu0 0.0
    %1695 = vmatmul.mubr.f32.gmra.mrb[0].mxu0 %v1628
    %v1696 = vpop.f32.mrb[0].mxu0
    %v1697 = vadd.f32 0.0, %v1696
    %v1698 = vpop.f32.mrb[0].mxu0
    %1699 = vdwg.mxu0
    %v1701 = vrot.slane %v1697, 6
    %v1703 = vadd.f32 %v1087, %v1701
    %v1704 = vxor.u32 %v1703, 2147483648
    %v1705 = vmul.f32 %v1704, 1.442695
    %v1706 = vpow.pop %v1705
    %v1707 = vadd.f32 %v1706, 1.0
    %v1708 = vrcp.pop %v1707
    %v1709 = vmul.f32 1.0, %v1708
    %v1710 = vmul.f32 %v1709, 2.0
    %v1711 = vsub.f32 %v1710, 1.0
    %v1713 = vrot.slane %v1618, 6
    %v1715 = vmul.f32 %v1709, %v1713
    %1717 = vrot.lane.b32.xlu0 %v1711, 64
    %v1718 = vpop.permute.xlu0 %1717
    %v1720 = vmul.f32 %v1709, %v1718
    %1722 = vrot.lane.b32.xlu0 %v1720, 32
    %v1723 = vpop.permute.xlu0 %1722
    %v1725 = vadd.f32 %v1715, %v1723
    %v1726 = vtanh.pop %v1725
    %1728 = vrot.lane.b32.xlu0 %v1726, 64
    %v1729 = vpop.permute.xlu0 %1728
    %v1731 = vmul.f32 %v1709, %v1729
    %v1733 = vrot.slane %v1731, 2
    %1734 = vrot.lane.b32.xlu0 %v1733, 32
    %v1735 = vpop.permute.xlu0 %1734
    %v1736 = vsel %vm129, %v1735, 0
    %1738 = vmatprep.subr.mxu0 0.0
    %1739 = vmatpush1.msra.mxu0 %v996
    %1740 = vmatprep.subr.mxu0 0.0
    %1741 = vmatpush1.msra.mxu0 %v997
    %1742 = vmatprep.subr.mxu0 0.0
    %1743 = vmatpush1.msra.mxu0 %v998
    %1744 = vmatprep.subr.mxu0 0.0
    %1745 = vmatpush1.msra.mxu0 %v999
    %1746 = vmatprep.subr.mxu0 0.0
    %1747 = vmatpush1.msra.mxu0 0.0
    %1748 = vmatprep.subr.mxu0 0.0
    %1749 = vmatpush1.msra.mxu0 0.0
    %1750 = vmatprep.subr.mxu0 0.0
    %1751 = vmatpush1.msra.mxu0 0.0
    %1752 = vmatprep.subr.mxu0 0.0
    %1753 = vmatpush1.msra.mxu0 0.0
    %1754 = vmatprep.subr.mxu0 0.0
    %1755 = vmatpush1.msra.mxu0 0.0
    %1756 = vmatprep.subr.mxu0 0.0
    %1757 = vmatpush1.msra.mxu0 0.0
    %1758 = vmatprep.subr.mxu0 0.0
    %1759 = vmatpush1.msra.mxu0 0.0
    %1760 = vmatprep.subr.mxu0 0.0
    %1761 = vmatpush1.msra.mxu0 0.0
    %1762 = vmatprep.subr.mxu0 0.0
    %1763 = vmatpush1.msra.mxu0 0.0
    %1764 = vmatprep.subr.mxu0 0.0
    %1765 = vmatpush1.msra.mxu0 0.0
    %1766 = vmatprep.subr.mxu0 0.0
    %1767 = vmatpush1.msra.mxu0 0.0
    %1768 = vmatprep.subr.mxu0 0.0
    %1769 = vmatpush1.msra.mxu0 0.0
    %1770 = vmatprep.subr.mxu0 0.0
    %1771 = vmatpush1.msra.mxu0 0.0
    %1772 = vmatprep.subr.mxu0 0.0
    %1773 = vmatpush1.msra.mxu0 0.0
    %1774 = vmatprep.subr.mxu0 0.0
    %1775 = vmatpush1.msra.mxu0 0.0
    %1776 = vmatprep.subr.mxu0 0.0
    %1777 = vmatpush1.msra.mxu0 0.0
    %1778 = vmatprep.subr.mxu0 0.0
    %1779 = vmatpush1.msra.mxu0 0.0
    %1780 = vmatprep.subr.mxu0 0.0
    %1781 = vmatpush1.msra.mxu0 0.0
    %1782 = vmatprep.subr.mxu0 0.0
    %1783 = vmatpush1.msra.mxu0 0.0
    %1784 = vmatprep.subr.mxu0 0.0
    %1785 = vmatpush1.msra.mxu0 0.0
    %1786 = vmatprep.subr.mxu0 0.0
    %1787 = vmatpush1.msra.mxu0 0.0
    %1788 = vmatprep.subr.mxu0 0.0
    %1789 = vmatpush1.msra.mxu0 0.0
    %1790 = vmatprep.subr.mxu0 0.0
    %1791 = vmatpush1.msra.mxu0 0.0
    %1792 = vmatprep.subr.mxu0 0.0
    %1793 = vmatpush1.msra.mxu0 0.0
    %1794 = vmatprep.subr.mxu0 0.0
    %1795 = vmatpush1.msra.mxu0 0.0
    %1796 = vmatprep.subr.mxu0 0.0
    %1797 = vmatpush1.msra.mxu0 0.0
    %1798 = vmatprep.subr.mxu0 0.0
    %1799 = vmatpush1.msra.mxu0 0.0
    %1800 = vmatprep.subr.mxu0 0.0
    %1801 = vmatpush1.msra.mxu0 0.0
    %1802 = vmatprep.mubr.f32.mxu0 0.0
    %1803 = vmatmul.mubr.f32.gmra.mrb[0].mxu0 %v1736
    %v1804 = vpop.f32.mrb[0].mxu0
    %v1805 = vadd.f32 0.0, %v1804
    %v1806 = vpop.f32.mrb[0].mxu0
    %1807 = vdwg.mxu0
    %v1809 = vrot.slane %v1805, 4
    %v1811 = vadd.f32 %v1087, %v1809
    %v1812 = vxor.u32 %v1811, 2147483648
    %v1813 = vmul.f32 %v1812, 1.442695
    %v1814 = vpow.pop %v1813
    %v1815 = vadd.f32 %v1814, 1.0
    %v1816 = vrcp.pop %v1815
    %v1817 = vmul.f32 1.0, %v1816
    %v1818 = vmul.f32 %v1817, 2.0
    %v1819 = vsub.f32 %v1818, 1.0
    %v1821 = vrot.slane %v1725, 6
    %v1823 = vmul.f32 %v1817, %v1821
    %1825 = vrot.lane.b32.xlu0 %v1819, 64
    %v1826 = vpop.permute.xlu0 %1825
    %v1828 = vmul.f32 %v1817, %v1826
    %1830 = vrot.lane.b32.xlu0 %v1828, 32
    %v1831 = vpop.permute.xlu0 %1830
    %v1833 = vadd.f32 %v1823, %v1831
    %v1834 = vtanh.pop %v1833
    %1836 = vrot.lane.b32.xlu0 %v1834, 64
    %v1837 = vpop.permute.xlu0 %1836
    %v1839 = vmul.f32 %v1817, %v1837
    %v1841 = vrot.slane %v1839, 4
    %1842 = vrot.lane.b32.xlu0 %v1841, 32
    %v1843 = vpop.permute.xlu0 %1842
    %v1844 = vsel %vm129, %v1843, 0
    %1846 = vmatprep.subr.mxu0 0.0
    %1847 = vmatpush1.msra.mxu0 %v996
    %1848 = vmatprep.subr.mxu0 0.0
    %1849 = vmatpush1.msra.mxu0 %v997
    %1850 = vmatprep.subr.mxu0 0.0
    %1851 = vmatpush1.msra.mxu0 %v998
    %1852 = vmatprep.subr.mxu0 0.0
    %1853 = vmatpush1.msra.mxu0 %v999
    %1854 = vmatprep.subr.mxu0 0.0
    %1855 = vmatpush1.msra.mxu0 0.0
    %1856 = vmatprep.subr.mxu0 0.0
    %1857 = vmatpush1.msra.mxu0 0.0
    %1858 = vmatprep.subr.mxu0 0.0
    %1859 = vmatpush1.msra.mxu0 0.0
    %1860 = vmatprep.subr.mxu0 0.0
    %1861 = vmatpush1.msra.mxu0 0.0
    %1862 = vmatprep.subr.mxu0 0.0
    %1863 = vmatpush1.msra.mxu0 0.0
    %1864 = vmatprep.subr.mxu0 0.0
    %1865 = vmatpush1.msra.mxu0 0.0
    %1866 = vmatprep.subr.mxu0 0.0
    %1867 = vmatpush1.msra.mxu0 0.0
    %1868 = vmatprep.subr.mxu0 0.0
    %1869 = vmatpush1.msra.mxu0 0.0
    %1870 = vmatprep.subr.mxu0 0.0
    %1871 = vmatpush1.msra.mxu0 0.0
    %1872 = vmatprep.subr.mxu0 0.0
    %1873 = vmatpush1.msra.mxu0 0.0
    %1874 = vmatprep.subr.mxu0 0.0
    %1875 = vmatpush1.msra.mxu0 0.0
    %1876 = vmatprep.subr.mxu0 0.0
    %1877 = vmatpush1.msra.mxu0 0.0
    %1878 = vmatprep.subr.mxu0 0.0
    %1879 = vmatpush1.msra.mxu0 0.0
    %1880 = vmatprep.subr.mxu0 0.0
    %1881 = vmatpush1.msra.mxu0 0.0
    %1882 = vmatprep.subr.mxu0 0.0
    %1883 = vmatpush1.msra.mxu0 0.0
    %1884 = vmatprep.subr.mxu0 0.0
    %1885 = vmatpush1.msra.mxu0 0.0
    %1886 = vmatprep.subr.mxu0 0.0
    %1887 = vmatpush1.msra.mxu0 0.0
    %1888 = vmatprep.subr.mxu0 0.0
    %1889 = vmatpush1.msra.mxu0 0.0
    %1890 = vmatprep.subr.mxu0 0.0
    %1891 = vmatpush1.msra.mxu0 0.0
    %1892 = vmatprep.subr.mxu0 0.0
    %1893 = vmatpush1.msra.mxu0 0.0
    %1894 = vmatprep.subr.mxu0 0.0
    %1895 = vmatpush1.msra.mxu0 0.0
    %1896 = vmatprep.subr.mxu0 0.0
    %1897 = vmatpush1.msra.mxu0 0.0
    %1898 = vmatprep.subr.mxu0 0.0
    %1899 = vmatpush1.msra.mxu0 0.0
    %1900 = vmatprep.subr.mxu0 0.0
    %1901 = vmatpush1.msra.mxu0 0.0
    %1902 = vmatprep.subr.mxu0 0.0
    %1903 = vmatpush1.msra.mxu0 0.0
    %1904 = vmatprep.subr.mxu0 0.0
    %1905 = vmatpush1.msra.mxu0 0.0
    %1906 = vmatprep.subr.mxu0 0.0
    %1907 = vmatpush1.msra.mxu0 0.0
    %1908 = vmatprep.subr.mxu0 0.0
    %1909 = vmatpush1.msra.mxu0 0.0
    %1910 = vmatprep.mubr.f32.mxu0 0.0
    %1911 = vmatmul.mubr.f32.gmra.mrb[0].mxu0 %v1844
    %v1912 = vpop.f32.mrb[0].mxu0
    %v1913 = vadd.f32 0.0, %v1912
    %v1914 = vpop.f32.mrb[0].mxu0
    %1915 = vdwg.mxu0
    %v1917 = vrot.slane %v1913, 2
    %v1919 = vadd.f32 %v1087, %v1917
    %v1920 = vxor.u32 %v1919, 2147483648
    %v1921 = vmul.f32 %v1920, 1.442695
    %v1922 = vpow.pop %v1921
    %v1923 = vadd.f32 %v1922, 1.0
    %v1924 = vrcp.pop %v1923
    %v1925 = vmul.f32 1.0, %v1924
    %v1926 = vmul.f32 %v1925, 2.0
    %v1927 = vsub.f32 %v1926, 1.0
    %v1929 = vrot.slane %v1833, 6
    %v1931 = vmul.f32 %v1925, %v1929
    %1933 = vrot.lane.b32.xlu0 %v1927, 64
    %v1934 = vpop.permute.xlu0 %1933
    %v1936 = vmul.f32 %v1925, %v1934
    %1938 = vrot.lane.b32.xlu0 %v1936, 32
    %v1939 = vpop.permute.xlu0 %1938
    %v1941 = vadd.f32 %v1931, %v1939
    %v1942 = vtanh.pop %v1941
    %1944 = vrot.lane.b32.xlu0 %v1942, 64
    %v1945 = vpop.permute.xlu0 %1944
    %v1947 = vmul.f32 %v1925, %v1945
    %v1948 = vld [vmem:[#allocation2 + $0x78] sm:$0xf]
    %v1949 = vld [vmem:[#allocation2 + $0x80] sm:$0xff]
    %v1950 = vld [vmem:[#allocation2 + $0x88] sm:$0xff]
    %v1951 = vld [vmem:[#allocation2 + $0x90] sm:$0xff]
    %v1952 = vld [vmem:[#allocation2 + $0x98] sm:$0xff]
    %v1953 = vld [vmem:[#allocation2 + $0xa0] sm:$0x1]
    %v1954 = vld [vmem:[#allocation2 + $0xa8] sm:$0xff]
    %v1955 = vld [vmem:[#allocation2 + $0xb0] sm:$0xff]
    %v1956 = vld [vmem:[#allocation2 + $0xb8] sm:$0xff]
    %v1957 = vld [vmem:[#allocation2 + $0xc0] sm:$0xff]
    %v1958 = vld [vmem:[#allocation2 + $0xc8] sm:$0x1]
    %v1959 = vlaneseq
    %v1960 = vshrl.u32 %v1959, 7
    %v1961 = vsub.s32 0, %v1960
    %v1962 = vrot.slane %v1958, %v1961
    %v1963 = vld [vmem:[#allocation2 + $0xd0] sm:$0xff]
    %v1964 = vld [vmem:[#allocation2 + $0xd8] sm:$0xff]
    %v1965 = vld [vmem:[#allocation2 + $0xe0] sm:$0xff]
    %v1966 = vld [vmem:[#allocation2 + $0xe8] sm:$0xff]
    %v1967 = vld [vmem:[#allocation2 + $0xf0] sm:$0xff]
    %v1968 = vld [vmem:[#allocation2 + $0xf8] sm:$0xff]
    %v1969 = vld [vmem:[#allocation2 + $0x100] sm:$0xff]
    %v1970 = vld [vmem:[#allocation2 + $0x108] sm:$0xff]
    %v1971 = vld [vmem:[#allocation2 + $0x110] sm:$0x1]
    %v1972 = vlaneseq
    %v1973 = vshrl.u32 %v1972, 7
    %v1974 = vsub.s32 0, %v1973
    %v1975 = vrot.slane %v1971, %v1974
    %v1976 = vld [vmem:[#allocation2 + $0x118] sm:$0xff]
    %v1977 = vld [vmem:[#allocation2 + $0x120] sm:$0xff]
    %v1978 = vld [vmem:[#allocation2 + $0x128] sm:$0xff]
    %v1979 = vld [vmem:[#allocation2 + $0x130] sm:$0xff]
    %v1980 = vld [vmem:[#allocation2 + $0x138] sm:$0x1]
    %v1981 = vlaneseq
    %v1982 = vshrl.u32 %v1981, 7
    %v1983 = vsub.s32 0, %v1982
    %v1984 = vrot.slane %v1980, %v1983
    %v1985 = vld [vmem:[%s0 + $0xe] sm:$0x3]
    %v1987 = vrot.slane %v983, 6
    %1988 = vrot.lane.b32.xlu0 %v1987, 32
    %v1989 = vpop.permute.xlu0 %1988
    %v1990 = vsel %vm129, %v1989, 0
    %1992 = vmatprep.subr.mxu0 0.0
    %1993 = vmatpush1.msra.mxu0 %v1949
    %1994 = vmatprep.subr.mxu0 0.0
    %1995 = vmatpush1.msra.mxu0 %v1950
    %1996 = vmatprep.subr.mxu0 0.0
    %1997 = vmatpush1.msra.mxu0 %v1951
    %1998 = vmatprep.subr.mxu0 0.0
    %1999 = vmatpush1.msra.mxu0 %v1952
    %2000 = vmatprep.subr.mxu0 0.0
    %2001 = vmatpush1.msra.mxu0 0.0
    %2002 = vmatprep.subr.mxu0 0.0
    %2003 = vmatpush1.msra.mxu0 0.0
    %2004 = vmatprep.subr.mxu0 0.0
    %2005 = vmatpush1.msra.mxu0 0.0
    %2006 = vmatprep.subr.mxu0 0.0
    %2007 = vmatpush1.msra.mxu0 0.0
    %2008 = vmatprep.subr.mxu0 0.0
    %2009 = vmatpush1.msra.mxu0 0.0
    %2010 = vmatprep.subr.mxu0 0.0
    %2011 = vmatpush1.msra.mxu0 0.0
    %2012 = vmatprep.subr.mxu0 0.0
    %2013 = vmatpush1.msra.mxu0 0.0
    %2014 = vmatprep.subr.mxu0 0.0
    %2015 = vmatpush1.msra.mxu0 0.0
    %2016 = vmatprep.subr.mxu0 0.0
    %2017 = vmatpush1.msra.mxu0 0.0
    %2018 = vmatprep.subr.mxu0 0.0
    %2019 = vmatpush1.msra.mxu0 0.0
    %2020 = vmatprep.subr.mxu0 0.0
    %2021 = vmatpush1.msra.mxu0 0.0
    %2022 = vmatprep.subr.mxu0 0.0
    %2023 = vmatpush1.msra.mxu0 0.0
    %2024 = vmatprep.subr.mxu0 0.0
    %2025 = vmatpush1.msra.mxu0 0.0
    %2026 = vmatprep.subr.mxu0 0.0
    %2027 = vmatpush1.msra.mxu0 0.0
    %2028 = vmatprep.subr.mxu0 0.0
    %2029 = vmatpush1.msra.mxu0 0.0
    %2030 = vmatprep.subr.mxu0 0.0
    %2031 = vmatpush1.msra.mxu0 0.0
    %2032 = vmatprep.subr.mxu0 0.0
    %2033 = vmatpush1.msra.mxu0 0.0
    %2034 = vmatprep.subr.mxu0 0.0
    %2035 = vmatpush1.msra.mxu0 0.0
    %2036 = vmatprep.subr.mxu0 0.0
    %2037 = vmatpush1.msra.mxu0 0.0
    %2038 = vmatprep.subr.mxu0 0.0
    %2039 = vmatpush1.msra.mxu0 0.0
    %2040 = vmatprep.subr.mxu0 0.0
    %2041 = vmatpush1.msra.mxu0 0.0
    %2042 = vmatprep.subr.mxu0 0.0
    %2043 = vmatpush1.msra.mxu0 0.0
    %2044 = vmatprep.subr.mxu0 0.0
    %2045 = vmatpush1.msra.mxu0 0.0
    %2046 = vmatprep.subr.mxu0 0.0
    %2047 = vmatpush1.msra.mxu0 0.0
    %2048 = vmatprep.subr.mxu0 0.0
    %2049 = vmatpush1.msra.mxu0 0.0
    %2050 = vmatprep.subr.mxu0 0.0
    %2051 = vmatpush1.msra.mxu0 0.0
    %2052 = vmatprep.subr.mxu0 0.0
    %2053 = vmatpush1.msra.mxu0 0.0
    %2054 = vmatprep.subr.mxu0 0.0
    %2055 = vmatpush1.msra.mxu0 0.0
    %2056 = vmatprep.mubr.f32.mxu0 0.0
    %2057 = vmatmul.mubr.f32.gmra.mrb[0].mxu0 %v1990
    %v2058 = vpop.f32.mrb[0].mxu0
    %v2059 = vadd.f32 0.0, %v2058
    %v2060 = vpop.f32.mrb[0].mxu0
    %2061 = vdwg.mxu0
    %v2063 = vsel %vm40, %v1985, 0
    %v2066 = vsel %vm47, %v1948, 0
    %2068 = vmatprep.subr.mxu0 0.0
    %2069 = vmatpush1.msra.mxu0 %v2066
    %2070 = vmatprep.subr.mxu0 0.0
    %2071 = vmatpush1.msra.mxu0 0.0
    %2072 = vmatprep.subr.mxu0 0.0
    %2073 = vmatpush1.msra.mxu0 0.0
    %2074 = vmatprep.subr.mxu0 0.0
    %2075 = vmatpush1.msra.mxu0 0.0
    %2076 = vmatprep.subr.mxu0 0.0
    %2077 = vmatpush1.msra.mxu0 0.0
    %2078 = vmatprep.subr.mxu0 0.0
    %2079 = vmatpush1.msra.mxu0 0.0
    %2080 = vmatprep.subr.mxu0 0.0
    %2081 = vmatpush1.msra.mxu0 0.0
    %2082 = vmatprep.subr.mxu0 0.0
    %2083 = vmatpush1.msra.mxu0 0.0
    %2084 = vmatprep.subr.mxu0 0.0
    %2085 = vmatpush1.msra.mxu0 0.0
    %2086 = vmatprep.subr.mxu0 0.0
    %2087 = vmatpush1.msra.mxu0 0.0
    %2088 = vmatprep.subr.mxu0 0.0
    %2089 = vmatpush1.msra.mxu0 0.0
    %2090 = vmatprep.subr.mxu0 0.0
    %2091 = vmatpush1.msra.mxu0 0.0
    %2092 = vmatprep.subr.mxu0 0.0
    %2093 = vmatpush1.msra.mxu0 0.0
    %2094 = vmatprep.subr.mxu0 0.0
    %2095 = vmatpush1.msra.mxu0 0.0
    %2096 = vmatprep.subr.mxu0 0.0
    %2097 = vmatpush1.msra.mxu0 0.0
    %2098 = vmatprep.subr.mxu0 0.0
    %2099 = vmatpush1.msra.mxu0 0.0
    %2100 = vmatprep.subr.mxu0 0.0
    %2101 = vmatpush1.msra.mxu0 0.0
    %2102 = vmatprep.subr.mxu0 0.0
    %2103 = vmatpush1.msra.mxu0 0.0
    %2104 = vmatprep.subr.mxu0 0.0
    %2105 = vmatpush1.msra.mxu0 0.0
    %2106 = vmatprep.subr.mxu0 0.0
    %2107 = vmatpush1.msra.mxu0 0.0
    %2108 = vmatprep.subr.mxu0 0.0
    %2109 = vmatpush1.msra.mxu0 0.0
    %2110 = vmatprep.subr.mxu0 0.0
    %2111 = vmatpush1.msra.mxu0 0.0
    %2112 = vmatprep.subr.mxu0 0.0
    %2113 = vmatpush1.msra.mxu0 0.0
    %2114 = vmatprep.subr.mxu0 0.0
    %2115 = vmatpush1.msra.mxu0 0.0
    %2116 = vmatprep.subr.mxu0 0.0
    %2117 = vmatpush1.msra.mxu0 0.0
    %2118 = vmatprep.subr.mxu0 0.0
    %2119 = vmatpush1.msra.mxu0 0.0
    %2120 = vmatprep.subr.mxu0 0.0
    %2121 = vmatpush1.msra.mxu0 0.0
    %2122 = vmatprep.subr.mxu0 0.0
    %2123 = vmatpush1.msra.mxu0 0.0
    %2124 = vmatprep.subr.mxu0 0.0
    %2125 = vmatpush1.msra.mxu0 0.0
    %2126 = vmatprep.subr.mxu0 0.0
    %2127 = vmatpush1.msra.mxu0 0.0
    %2128 = vmatprep.subr.mxu0 0.0
    %2129 = vmatpush1.msra.mxu0 0.0
    %2130 = vmatprep.subr.mxu0 0.0
    %2131 = vmatpush1.msra.mxu0 0.0
    %2132 = vmatprep.mubr.f32.mxu0 0.0
    %2133 = vmatmul.mubr.f32.gmra.mrb[0].mxu0 %v2063
    %v2134 = vpop.f32.mrb[0].mxu0
    %v2135 = vadd.f32 %v2059, %v2134
    %v2136 = vpop.f32.mrb[0].mxu0
    %2137 = vdwg.mxu0
    %v2138 = vlaneseq
    %v2139 = vshrl.u32 %v2138, 7
    %v2140 = vsub.s32 0, %v2139
    %v2141 = vrot.slane %v1953, %v2140
    %v2142 = vadd.f32 %v2135, %v2141
    %v2143 = vxor.u32 %v2142, 2147483648
    %v2144 = vmul.f32 %v2143, 1.442695
    %v2145 = vpow.pop %v2144
    %v2146 = vadd.f32 %v2145, 1.0
    %v2147 = vrcp.pop %v2146
    %v2148 = vmul.f32 1.0, %v2147
    %v2149 = vmul.f32 %v2148, 2.0
    %v2150 = vsub.f32 %v2149, 1.0
    %v2152 = vrot.slane %v977, 6
    %v2154 = vmul.f32 %v2148, %v2152
    %2156 = vrot.lane.b32.xlu0 %v2150, 64
    %v2157 = vpop.permute.xlu0 %2156
    %v2159 = vmul.f32 %v2148, %v2157
    %2161 = vrot.lane.b32.xlu0 %v2159, 32
    %v2162 = vpop.permute.xlu0 %2161
    %v2164 = vadd.f32 %v2154, %v2162
    %v2165 = vtanh.pop %v2164
    %2167 = vrot.lane.b32.xlu0 %v2165, 64
    %v2168 = vpop.permute.xlu0 %2167
    %v2170 = vmul.f32 %v2148, %v2168
    %v2172 = vrot.slane %v1947, 6
    %2173 = vrot.lane.b32.xlu0 %v2172, 32
    %v2174 = vpop.permute.xlu0 %2173
    %v2175 = vsel %vm129, %v2174, 0
    %2177 = vmatprep.subr.mxu0 0.0
    %2178 = vmatpush1.msra.mxu0 %v1967
    %2179 = vmatprep.subr.mxu0 0.0
    %2180 = vmatpush1.msra.mxu0 %v1968
    %2181 = vmatprep.subr.mxu0 0.0
    %2182 = vmatpush1.msra.mxu0 %v1969
    %2183 = vmatprep.subr.mxu0 0.0
    %2184 = vmatpush1.msra.mxu0 %v1970
    %2185 = vmatprep.subr.mxu0 0.0
    %2186 = vmatpush1.msra.mxu0 0.0
    %2187 = vmatprep.subr.mxu0 0.0
    %2188 = vmatpush1.msra.mxu0 0.0
    %2189 = vmatprep.subr.mxu0 0.0
    %2190 = vmatpush1.msra.mxu0 0.0
    %2191 = vmatprep.subr.mxu0 0.0
    %2192 = vmatpush1.msra.mxu0 0.0
    %2193 = vmatprep.subr.mxu0 0.0
    %2194 = vmatpush1.msra.mxu0 0.0
    %2195 = vmatprep.subr.mxu0 0.0
    %2196 = vmatpush1.msra.mxu0 0.0
    %2197 = vmatprep.subr.mxu0 0.0
    %2198 = vmatpush1.msra.mxu0 0.0
    %2199 = vmatprep.subr.mxu0 0.0
    %2200 = vmatpush1.msra.mxu0 0.0
    %2201 = vmatprep.subr.mxu0 0.0
    %2202 = vmatpush1.msra.mxu0 0.0
    %2203 = vmatprep.subr.mxu0 0.0
    %2204 = vmatpush1.msra.mxu0 0.0
    %2205 = vmatprep.subr.mxu0 0.0
    %2206 = vmatpush1.msra.mxu0 0.0
    %2207 = vmatprep.subr.mxu0 0.0
    %2208 = vmatpush1.msra.mxu0 0.0
    %2209 = vmatprep.subr.mxu0 0.0
    %2210 = vmatpush1.msra.mxu0 0.0
    %2211 = vmatprep.subr.mxu0 0.0
    %2212 = vmatpush1.msra.mxu0 0.0
    %2213 = vmatprep.subr.mxu0 0.0
    %2214 = vmatpush1.msra.mxu0 0.0
    %2215 = vmatprep.subr.mxu0 0.0
    %2216 = vmatpush1.msra.mxu0 0.0
    %2217 = vmatprep.subr.mxu0 0.0
    %2218 = vmatpush1.msra.mxu0 0.0
    %2219 = vmatprep.subr.mxu0 0.0
    %2220 = vmatpush1.msra.mxu0 0.0
    %2221 = vmatprep.subr.mxu0 0.0
    %2222 = vmatpush1.msra.mxu0 0.0
    %2223 = vmatprep.subr.mxu0 0.0
    %2224 = vmatpush1.msra.mxu0 0.0
    %2225 = vmatprep.subr.mxu0 0.0
    %2226 = vmatpush1.msra.mxu0 0.0
    %2227 = vmatprep.subr.mxu0 0.0
    %2228 = vmatpush1.msra.mxu0 0.0
    %2229 = vmatprep.subr.mxu0 0.0
    %2230 = vmatpush1.msra.mxu0 0.0
    %2231 = vmatprep.subr.mxu0 0.0
    %2232 = vmatpush1.msra.mxu0 0.0
    %2233 = vmatprep.subr.mxu0 0.0
    %2234 = vmatpush1.msra.mxu0 0.0
    %2235 = vmatprep.subr.mxu0 0.0
    %2236 = vmatpush1.msra.mxu0 0.0
    %2237 = vmatprep.subr.mxu0 0.0
    %2238 = vmatpush1.msra.mxu0 0.0
    %2239 = vmatprep.subr.mxu0 0.0
    %2240 = vmatpush1.msra.mxu0 0.0
    %2241 = vmatprep.mubr.f32.mxu0 0.0
    %2242 = vmatmul.mubr.f32.gmra.mrb[0].mxu0 %v2175
    %v2243 = vpop.f32.mrb[0].mxu0
    %v2244 = vadd.f32 0.0, %v2243
    %v2245 = vpop.f32.mrb[0].mxu0
    %2246 = vdwg.mxu0
    %2248 = vrot.lane.b32.xlu0 %v2170, 32
    %v2249 = vpop.permute.xlu0 %2248
    %v2250 = vsel %vm129, %v2249, 0
    %2252 = vmatprep.subr.mxu0 0.0
    %2253 = vmatpush1.msra.mxu0 %v1963
    %2254 = vmatprep.subr.mxu0 0.0
    %2255 = vmatpush1.msra.mxu0 %v1964
    %2256 = vmatprep.subr.mxu0 0.0
    %2257 = vmatpush1.msra.mxu0 %v1965
    %2258 = vmatprep.subr.mxu0 0.0
    %2259 = vmatpush1.msra.mxu0 %v1966
    %2260 = vmatprep.subr.mxu0 0.0
    %2261 = vmatpush1.msra.mxu0 0.0
    %2262 = vmatprep.subr.mxu0 0.0
    %2263 = vmatpush1.msra.mxu0 0.0
    %2264 = vmatprep.subr.mxu0 0.0
    %2265 = vmatpush1.msra.mxu0 0.0
    %2266 = vmatprep.subr.mxu0 0.0
    %2267 = vmatpush1.msra.mxu0 0.0
    %2268 = vmatprep.subr.mxu0 0.0
    %2269 = vmatpush1.msra.mxu0 0.0
    %2270 = vmatprep.subr.mxu0 0.0
    %2271 = vmatpush1.msra.mxu0 0.0
    %2272 = vmatprep.subr.mxu0 0.0
    %2273 = vmatpush1.msra.mxu0 0.0
    %2274 = vmatprep.subr.mxu0 0.0
    %2275 = vmatpush1.msra.mxu0 0.0
    %2276 = vmatprep.subr.mxu0 0.0
    %2277 = vmatpush1.msra.mxu0 0.0
    %2278 = vmatprep.subr.mxu0 0.0
    %2279 = vmatpush1.msra.mxu0 0.0
    %2280 = vmatprep.subr.mxu0 0.0
    %2281 = vmatpush1.msra.mxu0 0.0
    %2282 = vmatprep.subr.mxu0 0.0
    %2283 = vmatpush1.msra.mxu0 0.0
    %2284 = vmatprep.subr.mxu0 0.0
    %2285 = vmatpush1.msra.mxu0 0.0
    %2286 = vmatprep.subr.mxu0 0.0
    %2287 = vmatpush1.msra.mxu0 0.0
    %2288 = vmatprep.subr.mxu0 0.0
    %2289 = vmatpush1.msra.mxu0 0.0
    %2290 = vmatprep.subr.mxu0 0.0
    %2291 = vmatpush1.msra.mxu0 0.0
    %2292 = vmatprep.subr.mxu0 0.0
    %2293 = vmatpush1.msra.mxu0 0.0
    %2294 = vmatprep.subr.mxu0 0.0
    %2295 = vmatpush1.msra.mxu0 0.0
    %2296 = vmatprep.subr.mxu0 0.0
    %2297 = vmatpush1.msra.mxu0 0.0
    %2298 = vmatprep.subr.mxu0 0.0
    %2299 = vmatpush1.msra.mxu0 0.0
    %2300 = vmatprep.subr.mxu0 0.0
    %2301 = vmatpush1.msra.mxu0 0.0
    %2302 = vmatprep.subr.mxu0 0.0
    %2303 = vmatpush1.msra.mxu0 0.0
    %2304 = vmatprep.subr.mxu0 0.0
    %2305 = vmatpush1.msra.mxu0 0.0
    %2306 = vmatprep.subr.mxu0 0.0
    %2307 = vmatpush1.msra.mxu0 0.0
    %2308 = vmatprep.subr.mxu0 0.0
    %2309 = vmatpush1.msra.mxu0 0.0
    %2310 = vmatprep.subr.mxu0 0.0
    %2311 = vmatpush1.msra.mxu0 0.0
    %2312 = vmatprep.subr.mxu0 0.0
    %2313 = vmatpush1.msra.mxu0 0.0
    %2314 = vmatprep.subr.mxu0 0.0
    %2315 = vmatpush1.msra.mxu0 0.0
    %2316 = vmatprep.mubr.f32.mxu0 0.0
    %2317 = vmatmul.mubr.f32.gmra.mrb[0].mxu0 %v2250
    %v2318 = vpop.f32.mrb[0].mxu0
    %v2319 = vadd.f32 %v2244, %v2318
    %v2320 = vpop.f32.mrb[0].mxu0
    %2321 = vdwg.mxu0
    %v2322 = vadd.f32 %v2319, %v1975
    %v2323 = vxor.u32 %v2322, 2147483648
    %v2324 = vmul.f32 %v2323, 1.442695
    %v2325 = vpow.pop %v2324
    %v2326 = vadd.f32 %v2325, 1.0
    %v2327 = vrcp.pop %v2326
    %v2328 = vmul.f32 1.0, %v2327
    %v2329 = vmul.f32 %v2328, 2.0
    %v2330 = vsub.f32 %v2329, 1.0
    %v2332 = vrot.slane %v1941, 6
    %v2334 = vmul.f32 %v2328, %v2332
    %2336 = vrot.lane.b32.xlu0 %v2330, 64
    %v2337 = vpop.permute.xlu0 %2336
    %v2339 = vmul.f32 %v2328, %v2337
    %2341 = vrot.lane.b32.xlu0 %v2339, 32
    %v2342 = vpop.permute.xlu0 %2341
    %v2344 = vadd.f32 %v2334, %v2342
    %v2345 = vtanh.pop %v2344
    %2347 = vrot.lane.b32.xlu0 %v2345, 64
    %v2348 = vpop.permute.xlu0 %2347
    %v2350 = vmul.f32 %v2328, %v2348
    %2352 = vrot.lane.b32.xlu0 %v2350, 32
    %v2353 = vpop.permute.xlu0 %2352
    %v2354 = vsel %vm129, %v2353, 0
    %2356 = vmatprep.subr.mxu0 0.0
    %2357 = vmatpush1.msra.mxu0 %v1976
    %2358 = vmatprep.subr.mxu0 0.0
    %2359 = vmatpush1.msra.mxu0 %v1977
    %2360 = vmatprep.subr.mxu0 0.0
    %2361 = vmatpush1.msra.mxu0 %v1978
    %2362 = vmatprep.subr.mxu0 0.0
    %2363 = vmatpush1.msra.mxu0 %v1979
    %2364 = vmatprep.subr.mxu0 0.0
    %2365 = vmatpush1.msra.mxu0 0.0
    %2366 = vmatprep.subr.mxu0 0.0
    %2367 = vmatpush1.msra.mxu0 0.0
    %2368 = vmatprep.subr.mxu0 0.0
    %2369 = vmatpush1.msra.mxu0 0.0
    %2370 = vmatprep.subr.mxu0 0.0
    %2371 = vmatpush1.msra.mxu0 0.0
    %2372 = vmatprep.subr.mxu0 0.0
    %2373 = vmatpush1.msra.mxu0 0.0
    %2374 = vmatprep.subr.mxu0 0.0
    %2375 = vmatpush1.msra.mxu0 0.0
    %2376 = vmatprep.subr.mxu0 0.0
    %2377 = vmatpush1.msra.mxu0 0.0
    %2378 = vmatprep.subr.mxu0 0.0
    %2379 = vmatpush1.msra.mxu0 0.0
    %2380 = vmatprep.subr.mxu0 0.0
    %2381 = vmatpush1.msra.mxu0 0.0
    %2382 = vmatprep.subr.mxu0 0.0
    %2383 = vmatpush1.msra.mxu0 0.0
    %2384 = vmatprep.subr.mxu0 0.0
    %2385 = vmatpush1.msra.mxu0 0.0
    %2386 = vmatprep.subr.mxu0 0.0
    %2387 = vmatpush1.msra.mxu0 0.0
    %2388 = vmatprep.subr.mxu0 0.0
    %2389 = vmatpush1.msra.mxu0 0.0
    %2390 = vmatprep.subr.mxu0 0.0
    %2391 = vmatpush1.msra.mxu0 0.0
    %2392 = vmatprep.subr.mxu0 0.0
    %2393 = vmatpush1.msra.mxu0 0.0
    %2394 = vmatprep.subr.mxu0 0.0
    %2395 = vmatpush1.msra.mxu0 0.0
    %2396 = vmatprep.subr.mxu0 0.0
    %2397 = vmatpush1.msra.mxu0 0.0
    %2398 = vmatprep.subr.mxu0 0.0
    %2399 = vmatpush1.msra.mxu0 0.0
    %2400 = vmatprep.subr.mxu0 0.0
    %2401 = vmatpush1.msra.mxu0 0.0
    %2402 = vmatprep.subr.mxu0 0.0
    %2403 = vmatpush1.msra.mxu0 0.0
    %2404 = vmatprep.subr.mxu0 0.0
    %2405 = vmatpush1.msra.mxu0 0.0
    %2406 = vmatprep.subr.mxu0 0.0
    %2407 = vmatpush1.msra.mxu0 0.0
    %2408 = vmatprep.subr.mxu0 0.0
    %2409 = vmatpush1.msra.mxu0 0.0
    %2410 = vmatprep.subr.mxu0 0.0
    %2411 = vmatpush1.msra.mxu0 0.0
    %2412 = vmatprep.subr.mxu0 0.0
    %2413 = vmatpush1.msra.mxu0 0.0
    %2414 = vmatprep.subr.mxu0 0.0
    %2415 = vmatpush1.msra.mxu0 0.0
    %2416 = vmatprep.subr.mxu0 0.0
    %2417 = vmatpush1.msra.mxu0 0.0
    %2418 = vmatprep.subr.mxu0 0.0
    %2419 = vmatpush1.msra.mxu0 0.0
    %2420 = vmatprep.mubr.f32.mxu0 0.0
    %2421 = vmatmul.mubr.f32.gmra.mrb[0].mxu0 %v2354
    %v2422 = vpop.f32.mrb[0].mxu0
    %v2423 = vadd.f32 %v1984, %v2422
    %v2424 = vpop.f32.mrb[0].mxu0
    %2425 = vdwg.mxu0
    %vm2426 = vcmask 25600
    %2427 = vst.msk [vmem:[%s3] sm:$0x3] %vm2426, %v2423
    %2428 = vmatprep.subr.mxu0 0.0
    %2429 = vmatpush1.msra.mxu0 %v1949
    %2430 = vmatprep.subr.mxu0 0.0
    %2431 = vmatpush1.msra.mxu0 %v1950
    %2432 = vmatprep.subr.mxu0 0.0
    %2433 = vmatpush1.msra.mxu0 %v1951
    %2434 = vmatprep.subr.mxu0 0.0
    %2435 = vmatpush1.msra.mxu0 %v1952
    %2436 = vmatprep.subr.mxu0 0.0
    %2437 = vmatpush1.msra.mxu0 0.0
    %2438 = vmatprep.subr.mxu0 0.0
    %2439 = vmatpush1.msra.mxu0 0.0
    %2440 = vmatprep.subr.mxu0 0.0
    %2441 = vmatpush1.msra.mxu0 0.0
    %2442 = vmatprep.subr.mxu0 0.0
    %2443 = vmatpush1.msra.mxu0 0.0
    %2444 = vmatprep.subr.mxu0 0.0
    %2445 = vmatpush1.msra.mxu0 0.0
    %2446 = vmatprep.subr.mxu0 0.0
    %2447 = vmatpush1.msra.mxu0 0.0
    %2448 = vmatprep.subr.mxu0 0.0
    %2449 = vmatpush1.msra.mxu0 0.0
    %2450 = vmatprep.subr.mxu0 0.0
    %2451 = vmatpush1.msra.mxu0 0.0
    %2452 = vmatprep.subr.mxu0 0.0
    %2453 = vmatpush1.msra.mxu0 0.0
    %2454 = vmatprep.subr.mxu0 0.0
    %2455 = vmatpush1.msra.mxu0 0.0
    %2456 = vmatprep.subr.mxu0 0.0
    %2457 = vmatpush1.msra.mxu0 0.0
    %2458 = vmatprep.subr.mxu0 0.0
    %2459 = vmatpush1.msra.mxu0 0.0
    %2460 = vmatprep.subr.mxu0 0.0
    %2461 = vmatpush1.msra.mxu0 0.0
    %2462 = vmatprep.subr.mxu0 0.0
    %2463 = vmatpush1.msra.mxu0 0.0
    %2464 = vmatprep.subr.mxu0 0.0
    %2465 = vmatpush1.msra.mxu0 0.0
    %2466 = vmatprep.subr.mxu0 0.0
    %2467 = vmatpush1.msra.mxu0 0.0
    %2468 = vmatprep.subr.mxu0 0.0
    %2469 = vmatpush1.msra.mxu0 0.0
    %2470 = vmatprep.subr.mxu0 0.0
    %2471 = vmatpush1.msra.mxu0 0.0
    %2472 = vmatprep.subr.mxu0 0.0
    %2473 = vmatpush1.msra.mxu0 0.0
    %2474 = vmatprep.subr.mxu0 0.0
    %2475 = vmatpush1.msra.mxu0 0.0
    %2476 = vmatprep.subr.mxu0 0.0
    %2477 = vmatpush1.msra.mxu0 0.0
    %2478 = vmatprep.subr.mxu0 0.0
    %2479 = vmatpush1.msra.mxu0 0.0
    %2480 = vmatprep.subr.mxu0 0.0
    %2481 = vmatpush1.msra.mxu0 0.0
    %2482 = vmatprep.subr.mxu0 0.0
    %2483 = vmatpush1.msra.mxu0 0.0
    %2484 = vmatprep.subr.mxu0 0.0
    %2485 = vmatpush1.msra.mxu0 0.0
    %2486 = vmatprep.subr.mxu0 0.0
    %2487 = vmatpush1.msra.mxu0 0.0
    %2488 = vmatprep.subr.mxu0 0.0
    %2489 = vmatpush1.msra.mxu0 0.0
    %2490 = vmatprep.subr.mxu0 0.0
    %2491 = vmatpush1.msra.mxu0 0.0
    %2492 = vmatprep.mubr.f32.mxu0 0.0
    %2493 = vmatmul.mubr.f32.gmra.mrb[0].mxu0 %v2250
    %v2494 = vpop.f32.mrb[0].mxu0
    %v2495 = vadd.f32 0.0, %v2494
    %v2496 = vpop.f32.mrb[0].mxu0
    %2497 = vdwg.mxu0
    %2498 = vmatprep.subr.mxu0 0.0
    %2499 = vmatpush1.msra.mxu0 %v1954
    %2500 = vmatprep.subr.mxu0 0.0
    %2501 = vmatpush1.msra.mxu0 %v1955
    %2502 = vmatprep.subr.mxu0 0.0
    %2503 = vmatpush1.msra.mxu0 %v1956
    %2504 = vmatprep.subr.mxu0 0.0
    %2505 = vmatpush1.msra.mxu0 %v1957
    %2506 = vmatprep.subr.mxu0 0.0
    %2507 = vmatpush1.msra.mxu0 0.0
    %2508 = vmatprep.subr.mxu0 0.0
    %2509 = vmatpush1.msra.mxu0 0.0
    %2510 = vmatprep.subr.mxu0 0.0
    %2511 = vmatpush1.msra.mxu0 0.0
    %2512 = vmatprep.subr.mxu0 0.0
    %2513 = vmatpush1.msra.mxu0 0.0
    %2514 = vmatprep.subr.mxu0 0.0
    %2515 = vmatpush1.msra.mxu0 0.0
    %2516 = vmatprep.subr.mxu0 0.0
    %2517 = vmatpush1.msra.mxu0 0.0
    %2518 = vmatprep.subr.mxu0 0.0
    %2519 = vmatpush1.msra.mxu0 0.0
    %2520 = vmatprep.subr.mxu0 0.0
    %2521 = vmatpush1.msra.mxu0 0.0
    %2522 = vmatprep.subr.mxu0 0.0
    %2523 = vmatpush1.msra.mxu0 0.0
    %2524 = vmatprep.subr.mxu0 0.0
    %2525 = vmatpush1.msra.mxu0 0.0
    %2526 = vmatprep.subr.mxu0 0.0
    %2527 = vmatpush1.msra.mxu0 0.0
    %2528 = vmatprep.subr.mxu0 0.0
    %2529 = vmatpush1.msra.mxu0 0.0
    %2530 = vmatprep.subr.mxu0 0.0
    %2531 = vmatpush1.msra.mxu0 0.0
    %2532 = vmatprep.subr.mxu0 0.0
    %2533 = vmatpush1.msra.mxu0 0.0
    %2534 = vmatprep.subr.mxu0 0.0
    %2535 = vmatpush1.msra.mxu0 0.0
    %2536 = vmatprep.subr.mxu0 0.0
    %2537 = vmatpush1.msra.mxu0 0.0
    %2538 = vmatprep.subr.mxu0 0.0
    %2539 = vmatpush1.msra.mxu0 0.0
    %2540 = vmatprep.subr.mxu0 0.0
    %2541 = vmatpush1.msra.mxu0 0.0
    %2542 = vmatprep.subr.mxu0 0.0
    %2543 = vmatpush1.msra.mxu0 0.0
    %2544 = vmatprep.subr.mxu0 0.0
    %2545 = vmatpush1.msra.mxu0 0.0
    %2546 = vmatprep.subr.mxu0 0.0
    %2547 = vmatpush1.msra.mxu0 0.0
    %2548 = vmatprep.subr.mxu0 0.0
    %2549 = vmatpush1.msra.mxu0 0.0
    %2550 = vmatprep.subr.mxu0 0.0
    %2551 = vmatpush1.msra.mxu0 0.0
    %2552 = vmatprep.subr.mxu0 0.0
    %2553 = vmatpush1.msra.mxu0 0.0
    %2554 = vmatprep.subr.mxu0 0.0
    %2555 = vmatpush1.msra.mxu0 0.0
    %2556 = vmatprep.subr.mxu0 0.0
    %2557 = vmatpush1.msra.mxu0 0.0
    %2558 = vmatprep.subr.mxu0 0.0
    %2559 = vmatpush1.msra.mxu0 0.0
    %2560 = vmatprep.subr.mxu0 0.0
    %2561 = vmatpush1.msra.mxu0 0.0
    %2562 = vmatprep.mubr.f32.mxu0 0.0
    %2563 = vmatmul.mubr.f32.gmra.mrb[0].mxu0 %v2354
    %v2564 = vpop.f32.mrb[0].mxu0
    %v2565 = vadd.f32 %v2495, %v2564
    %v2566 = vpop.f32.mrb[0].mxu0
    %2567 = vdwg.mxu0
    %v2568 = vadd.f32 %v2565, %v1962
    %v2569 = vxor.u32 %v2568, 2147483648
    %v2570 = vmul.f32 %v2569, 1.442695
    %v2571 = vpow.pop %v2570
    %v2572 = vadd.f32 %v2571, 1.0
    %v2573 = vrcp.pop %v2572
    %v2574 = vmul.f32 1.0, %v2573
    %v2575 = vmul.f32 %v2574, 2.0
    %v2576 = vsub.f32 %v2575, 1.0
    %v2577 = vmul.f32 %v2574, %v2164
    %2579 = vrot.lane.b32.xlu0 %v2576, 64
    %v2580 = vpop.permute.xlu0 %2579
    %v2582 = vmul.f32 %v2574, %v2580
    %2584 = vrot.lane.b32.xlu0 %v2582, 32
    %v2585 = vpop.permute.xlu0 %2584
    %v2587 = vadd.f32 %v2577, %v2585
    %v2588 = vtanh.pop %v2587
    %2590 = vrot.lane.b32.xlu0 %v2588, 64
    %v2591 = vpop.permute.xlu0 %2590
    %v2593 = vmul.f32 %v2574, %v2591
    %2594 = vmatprep.subr.mxu0 0.0
    %2595 = vmatpush1.msra.mxu0 %v1967
    %2596 = vmatprep.subr.mxu0 0.0
    %2597 = vmatpush1.msra.mxu0 %v1968
    %2598 = vmatprep.subr.mxu0 0.0
    %2599 = vmatpush1.msra.mxu0 %v1969
    %2600 = vmatprep.subr.mxu0 0.0
    %2601 = vmatpush1.msra.mxu0 %v1970
    %2602 = vmatprep.subr.mxu0 0.0
    %2603 = vmatpush1.msra.mxu0 0.0
    %2604 = vmatprep.subr.mxu0 0.0
    %2605 = vmatpush1.msra.mxu0 0.0
    %2606 = vmatprep.subr.mxu0 0.0
    %2607 = vmatpush1.msra.mxu0 0.0
    %2608 = vmatprep.subr.mxu0 0.0
    %2609 = vmatpush1.msra.mxu0 0.0
    %2610 = vmatprep.subr.mxu0 0.0
    %2611 = vmatpush1.msra.mxu0 0.0
    %2612 = vmatprep.subr.mxu0 0.0
    %2613 = vmatpush1.msra.mxu0 0.0
    %2614 = vmatprep.subr.mxu0 0.0
    %2615 = vmatpush1.msra.mxu0 0.0
    %2616 = vmatprep.subr.mxu0 0.0
    %2617 = vmatpush1.msra.mxu0 0.0
    %2618 = vmatprep.subr.mxu0 0.0
    %2619 = vmatpush1.msra.mxu0 0.0
    %2620 = vmatprep.subr.mxu0 0.0
    %2621 = vmatpush1.msra.mxu0 0.0
    %2622 = vmatprep.subr.mxu0 0.0
    %2623 = vmatpush1.msra.mxu0 0.0
    %2624 = vmatprep.subr.mxu0 0.0
    %2625 = vmatpush1.msra.mxu0 0.0
    %2626 = vmatprep.subr.mxu0 0.0
    %2627 = vmatpush1.msra.mxu0 0.0
    %2628 = vmatprep.subr.mxu0 0.0
    %2629 = vmatpush1.msra.mxu0 0.0
    %2630 = vmatprep.subr.mxu0 0.0
    %2631 = vmatpush1.msra.mxu0 0.0
    %2632 = vmatprep.subr.mxu0 0.0
    %2633 = vmatpush1.msra.mxu0 0.0
    %2634 = vmatprep.subr.mxu0 0.0
    %2635 = vmatpush1.msra.mxu0 0.0
    %2636 = vmatprep.subr.mxu0 0.0
    %2637 = vmatpush1.msra.mxu0 0.0
    %2638 = vmatprep.subr.mxu0 0.0
    %2639 = vmatpush1.msra.mxu0 0.0
    %2640 = vmatprep.subr.mxu0 0.0
    %2641 = vmatpush1.msra.mxu0 0.0
    %2642 = vmatprep.subr.mxu0 0.0
    %2643 = vmatpush1.msra.mxu0 0.0
    %2644 = vmatprep.subr.mxu0 0.0
    %2645 = vmatpush1.msra.mxu0 0.0
    %2646 = vmatprep.subr.mxu0 0.0
    %2647 = vmatpush1.msra.mxu0 0.0
    %2648 = vmatprep.subr.mxu0 0.0
    %2649 = vmatpush1.msra.mxu0 0.0
    %2650 = vmatprep.subr.mxu0 0.0
    %2651 = vmatpush1.msra.mxu0 0.0
    %2652 = vmatprep.subr.mxu0 0.0
    %2653 = vmatpush1.msra.mxu0 0.0
    %2654 = vmatprep.subr.mxu0 0.0
    %2655 = vmatpush1.msra.mxu0 0.0
    %2656 = vmatprep.subr.mxu0 0.0
    %2657 = vmatpush1.msra.mxu0 0.0
    %2658 = vmatprep.mubr.f32.mxu0 0.0
    %2659 = vmatmul.mubr.f32.gmra.mrb[0].mxu0 %v2354
    %v2660 = vpop.f32.mrb[0].mxu0
    %v2661 = vadd.f32 0.0, %v2660
    %v2662 = vpop.f32.mrb[0].mxu0
    %2663 = vdwg.mxu0
    %2665 = vrot.lane.b32.xlu0 %v2593, 32
    %v2666 = vpop.permute.xlu0 %2665
    %v2667 = vsel %vm129, %v2666, 0
    %2669 = vmatprep.subr.mxu0 0.0
    %2670 = vmatpush1.msra.mxu0 %v1963
    %2671 = vmatprep.subr.mxu0 0.0
    %2672 = vmatpush1.msra.mxu0 %v1964
    %2673 = vmatprep.subr.mxu0 0.0
    %2674 = vmatpush1.msra.mxu0 %v1965
    %2675 = vmatprep.subr.mxu0 0.0
    %2676 = vmatpush1.msra.mxu0 %v1966
    %2677 = vmatprep.subr.mxu0 0.0
    %2678 = vmatpush1.msra.mxu0 0.0
    %2679 = vmatprep.subr.mxu0 0.0
    %2680 = vmatpush1.msra.mxu0 0.0
    %2681 = vmatprep.subr.mxu0 0.0
    %2682 = vmatpush1.msra.mxu0 0.0
    %2683 = vmatprep.subr.mxu0 0.0
    %2684 = vmatpush1.msra.mxu0 0.0
    %2685 = vmatprep.subr.mxu0 0.0
    %2686 = vmatpush1.msra.mxu0 0.0
    %2687 = vmatprep.subr.mxu0 0.0
    %2688 = vmatpush1.msra.mxu0 0.0
    %2689 = vmatprep.subr.mxu0 0.0
    %2690 = vmatpush1.msra.mxu0 0.0
    %2691 = vmatprep.subr.mxu0 0.0
    %2692 = vmatpush1.msra.mxu0 0.0
    %2693 = vmatprep.subr.mxu0 0.0
    %2694 = vmatpush1.msra.mxu0 0.0
    %2695 = vmatprep.subr.mxu0 0.0
    %2696 = vmatpush1.msra.mxu0 0.0
    %2697 = vmatprep.subr.mxu0 0.0
    %2698 = vmatpush1.msra.mxu0 0.0
    %2699 = vmatprep.subr.mxu0 0.0
    %2700 = vmatpush1.msra.mxu0 0.0
    %2701 = vmatprep.subr.mxu0 0.0
    %2702 = vmatpush1.msra.mxu0 0.0
    %2703 = vmatprep.subr.mxu0 0.0
    %2704 = vmatpush1.msra.mxu0 0.0
    %2705 = vmatprep.subr.mxu0 0.0
    %2706 = vmatpush1.msra.mxu0 0.0
    %2707 = vmatprep.subr.mxu0 0.0
    %2708 = vmatpush1.msra.mxu0 0.0
    %2709 = vmatprep.subr.mxu0 0.0
    %2710 = vmatpush1.msra.mxu0 0.0
    %2711 = vmatprep.subr.mxu0 0.0
    %2712 = vmatpush1.msra.mxu0 0.0
    %2713 = vmatprep.subr.mxu0 0.0
    %2714 = vmatpush1.msra.mxu0 0.0
    %2715 = vmatprep.subr.mxu0 0.0
    %2716 = vmatpush1.msra.mxu0 0.0
    %2717 = vmatprep.subr.mxu0 0.0
    %2718 = vmatpush1.msra.mxu0 0.0
    %2719 = vmatprep.subr.mxu0 0.0
    %2720 = vmatpush1.msra.mxu0 0.0
    %2721 = vmatprep.subr.mxu0 0.0
    %2722 = vmatpush1.msra.mxu0 0.0
    %2723 = vmatprep.subr.mxu0 0.0
    %2724 = vmatpush1.msra.mxu0 0.0
    %2725 = vmatprep.subr.mxu0 0.0
    %2726 = vmatpush1.msra.mxu0 0.0
    %2727 = vmatprep.subr.mxu0 0.0
    %2728 = vmatpush1.msra.mxu0 0.0
    %2729 = vmatprep.subr.mxu0 0.0
    %2730 = vmatpush1.msra.mxu0 0.0
    %2731 = vmatprep.subr.mxu0 0.0
    %2732 = vmatpush1.msra.mxu0 0.0
    %2733 = vmatprep.mubr.f32.mxu0 0.0
    %2734 = vmatmul.mubr.f32.gmra.mrb[0].mxu0 %v2667
    %v2735 = vpop.f32.mrb[0].mxu0
    %v2736 = vadd.f32 %v2661, %v2735
    %v2737 = vpop.f32.mrb[0].mxu0
    %2738 = vdwg.mxu0
    %v2739 = vadd.f32 %v2736, %v1975
    %v2740 = vxor.u32 %v2739, 2147483648
    %v2741 = vmul.f32 %v2740, 1.442695
    %v2742 = vpow.pop %v2741
    %v2743 = vadd.f32 %v2742, 1.0
    %v2744 = vrcp.pop %v2743
    %v2745 = vmul.f32 1.0, %v2744
    %v2746 = vmul.f32 %v2745, 2.0
    %v2747 = vsub.f32 %v2746, 1.0
    %v2748 = vmul.f32 %v2745, %v2344
    %2750 = vrot.lane.b32.xlu0 %v2747, 64
    %v2751 = vpop.permute.xlu0 %2750
    %v2753 = vmul.f32 %v2745, %v2751
    %2755 = vrot.lane.b32.xlu0 %v2753, 32
    %v2756 = vpop.permute.xlu0 %2755
    %v2758 = vadd.f32 %v2748, %v2756
    %v2759 = vtanh.pop %v2758
    %2761 = vrot.lane.b32.xlu0 %v2759, 64
    %v2762 = vpop.permute.xlu0 %2761
    %v2764 = vmul.f32 %v2745, %v2762
    %2766 = vrot.lane.b32.xlu0 %v2764, 32
    %v2767 = vpop.permute.xlu0 %2766
    %v2768 = vsel %vm129, %v2767, 0
    %2770 = vmatprep.subr.mxu0 0.0
    %2771 = vmatpush1.msra.mxu0 %v1976
    %2772 = vmatprep.subr.mxu0 0.0
    %2773 = vmatpush1.msra.mxu0 %v1977
    %2774 = vmatprep.subr.mxu0 0.0
    %2775 = vmatpush1.msra.mxu0 %v1978
    %2776 = vmatprep.subr.mxu0 0.0
    %2777 = vmatpush1.msra.mxu0 %v1979
    %2778 = vmatprep.subr.mxu0 0.0
    %2779 = vmatpush1.msra.mxu0 0.0
    %2780 = vmatprep.subr.mxu0 0.0
    %2781 = vmatpush1.msra.mxu0 0.0
    %2782 = vmatprep.subr.mxu0 0.0
    %2783 = vmatpush1.msra.mxu0 0.0
    %2784 = vmatprep.subr.mxu0 0.0
    %2785 = vmatpush1.msra.mxu0 0.0
    %2786 = vmatprep.subr.mxu0 0.0
    %2787 = vmatpush1.msra.mxu0 0.0
    %2788 = vmatprep.subr.mxu0 0.0
    %2789 = vmatpush1.msra.mxu0 0.0
    %2790 = vmatprep.subr.mxu0 0.0
    %2791 = vmatpush1.msra.mxu0 0.0
    %2792 = vmatprep.subr.mxu0 0.0
    %2793 = vmatpush1.msra.mxu0 0.0
    %2794 = vmatprep.subr.mxu0 0.0
    %2795 = vmatpush1.msra.mxu0 0.0
    %2796 = vmatprep.subr.mxu0 0.0
    %2797 = vmatpush1.msra.mxu0 0.0
    %2798 = vmatprep.subr.mxu0 0.0
    %2799 = vmatpush1.msra.mxu0 0.0
    %2800 = vmatprep.subr.mxu0 0.0
    %2801 = vmatpush1.msra.mxu0 0.0
    %2802 = vmatprep.subr.mxu0 0.0
    %2803 = vmatpush1.msra.mxu0 0.0
    %2804 = vmatprep.subr.mxu0 0.0
    %2805 = vmatpush1.msra.mxu0 0.0
    %2806 = vmatprep.subr.mxu0 0.0
    %2807 = vmatpush1.msra.mxu0 0.0
    %2808 = vmatprep.subr.mxu0 0.0
    %2809 = vmatpush1.msra.mxu0 0.0
    %2810 = vmatprep.subr.mxu0 0.0
    %2811 = vmatpush1.msra.mxu0 0.0
    %2812 = vmatprep.subr.mxu0 0.0
    %2813 = vmatpush1.msra.mxu0 0.0
    %2814 = vmatprep.subr.mxu0 0.0
    %2815 = vmatpush1.msra.mxu0 0.0
    %2816 = vmatprep.subr.mxu0 0.0
    %2817 = vmatpush1.msra.mxu0 0.0
    %2818 = vmatprep.subr.mxu0 0.0
    %2819 = vmatpush1.msra.mxu0 0.0
    %2820 = vmatprep.subr.mxu0 0.0
    %2821 = vmatpush1.msra.mxu0 0.0
    %2822 = vmatprep.subr.mxu0 0.0
    %2823 = vmatpush1.msra.mxu0 0.0
    %2824 = vmatprep.subr.mxu0 0.0
    %2825 = vmatpush1.msra.mxu0 0.0
    %2826 = vmatprep.subr.mxu0 0.0
    %2827 = vmatpush1.msra.mxu0 0.0
    %2828 = vmatprep.subr.mxu0 0.0
    %2829 = vmatpush1.msra.mxu0 0.0
    %2830 = vmatprep.subr.mxu0 0.0
    %2831 = vmatpush1.msra.mxu0 0.0
    %2832 = vmatprep.subr.mxu0 0.0
    %2833 = vmatpush1.msra.mxu0 0.0
    %2834 = vmatprep.mubr.f32.mxu0 0.0
    %2835 = vmatmul.mubr.f32.gmra.mrb[0].mxu0 %v2768
    %v2836 = vpop.f32.mrb[0].mxu0
    %v2837 = vadd.f32 %v1984, %v2836
    %v2838 = vpop.f32.mrb[0].mxu0
    %2839 = vdwg.mxu0
    %s2840 = scalar_lea.vmem %s3, 2
    %2841 = vst.msk [vmem:[%s2840] sm:$0x3] %vm2426, %v2837
    %2842 = vmatprep.subr.mxu0 0.0
    %2843 = vmatpush1.msra.mxu0 %v1949
    %2844 = vmatprep.subr.mxu0 0.0
    %2845 = vmatpush1.msra.mxu0 %v1950
    %2846 = vmatprep.subr.mxu0 0.0
    %2847 = vmatpush1.msra.mxu0 %v1951
    %2848 = vmatprep.subr.mxu0 0.0
    %2849 = vmatpush1.msra.mxu0 %v1952
    %2850 = vmatprep.subr.mxu0 0.0
    %2851 = vmatpush1.msra.mxu0 0.0
    %2852 = vmatprep.subr.mxu0 0.0
    %2853 = vmatpush1.msra.mxu0 0.0
    %2854 = vmatprep.subr.mxu0 0.0
    %2855 = vmatpush1.msra.mxu0 0.0
    %2856 = vmatprep.subr.mxu0 0.0
    %2857 = vmatpush1.msra.mxu0 0.0
    %2858 = vmatprep.subr.mxu0 0.0
    %2859 = vmatpush1.msra.mxu0 0.0
    %2860 = vmatprep.subr.mxu0 0.0
    %2861 = vmatpush1.msra.mxu0 0.0
    %2862 = vmatprep.subr.mxu0 0.0
    %2863 = vmatpush1.msra.mxu0 0.0
    %2864 = vmatprep.subr.mxu0 0.0
    %2865 = vmatpush1.msra.mxu0 0.0
    %2866 = vmatprep.subr.mxu0 0.0
    %2867 = vmatpush1.msra.mxu0 0.0
    %2868 = vmatprep.subr.mxu0 0.0
    %2869 = vmatpush1.msra.mxu0 0.0
    %2870 = vmatprep.subr.mxu0 0.0
    %2871 = vmatpush1.msra.mxu0 0.0
    %2872 = vmatprep.subr.mxu0 0.0
    %2873 = vmatpush1.msra.mxu0 0.0
    %2874 = vmatprep.subr.mxu0 0.0
    %2875 = vmatpush1.msra.mxu0 0.0
    %2876 = vmatprep.subr.mxu0 0.0
    %2877 = vmatpush1.msra.mxu0 0.0
    %2878 = vmatprep.subr.mxu0 0.0
    %2879 = vmatpush1.msra.mxu0 0.0
    %2880 = vmatprep.subr.mxu0 0.0
    %2881 = vmatpush1.msra.mxu0 0.0
    %2882 = vmatprep.subr.mxu0 0.0
    %2883 = vmatpush1.msra.mxu0 0.0
    %2884 = vmatprep.subr.mxu0 0.0
    %2885 = vmatpush1.msra.mxu0 0.0
    %2886 = vmatprep.subr.mxu0 0.0
    %2887 = vmatpush1.msra.mxu0 0.0
    %2888 = vmatprep.subr.mxu0 0.0
    %2889 = vmatpush1.msra.mxu0 0.0
    %2890 = vmatprep.subr.mxu0 0.0
    %2891 = vmatpush1.msra.mxu0 0.0
    %2892 = vmatprep.subr.mxu0 0.0
    %2893 = vmatpush1.msra.mxu0 0.0
    %2894 = vmatprep.subr.mxu0 0.0
    %2895 = vmatpush1.msra.mxu0 0.0
    %2896 = vmatprep.subr.mxu0 0.0
    %2897 = vmatpush1.msra.mxu0 0.0
    %2898 = vmatprep.subr.mxu0 0.0
    %2899 = vmatpush1.msra.mxu0 0.0
    %2900 = vmatprep.subr.mxu0 0.0
    %2901 = vmatpush1.msra.mxu0 0.0
    %2902 = vmatprep.subr.mxu0 0.0
    %2903 = vmatpush1.msra.mxu0 0.0
    %2904 = vmatprep.subr.mxu0 0.0
    %2905 = vmatpush1.msra.mxu0 0.0
    %2906 = vmatprep.mubr.f32.mxu0 0.0
    %2907 = vmatmul.mubr.f32.gmra.mrb[0].mxu0 %v2667
    %v2908 = vpop.f32.mrb[0].mxu0
    %v2909 = vadd.f32 0.0, %v2908
    %v2910 = vpop.f32.mrb[0].mxu0
    %2911 = vdwg.mxu0
    %2912 = vmatprep.subr.mxu0 0.0
    %2913 = vmatpush1.msra.mxu0 %v1954
    %2914 = vmatprep.subr.mxu0 0.0
    %2915 = vmatpush1.msra.mxu0 %v1955
    %2916 = vmatprep.subr.mxu0 0.0
    %2917 = vmatpush1.msra.mxu0 %v1956
    %2918 = vmatprep.subr.mxu0 0.0
    %2919 = vmatpush1.msra.mxu0 %v1957
    %2920 = vmatprep.subr.mxu0 0.0
    %2921 = vmatpush1.msra.mxu0 0.0
    %2922 = vmatprep.subr.mxu0 0.0
    %2923 = vmatpush1.msra.mxu0 0.0
    %2924 = vmatprep.subr.mxu0 0.0
    %2925 = vmatpush1.msra.mxu0 0.0
    %2926 = vmatprep.subr.mxu0 0.0
    %2927 = vmatpush1.msra.mxu0 0.0
    %2928 = vmatprep.subr.mxu0 0.0
    %2929 = vmatpush1.msra.mxu0 0.0
    %2930 = vmatprep.subr.mxu0 0.0
    %2931 = vmatpush1.msra.mxu0 0.0
    %2932 = vmatprep.subr.mxu0 0.0
    %2933 = vmatpush1.msra.mxu0 0.0
    %2934 = vmatprep.subr.mxu0 0.0
    %2935 = vmatpush1.msra.mxu0 0.0
    %2936 = vmatprep.subr.mxu0 0.0
    %2937 = vmatpush1.msra.mxu0 0.0
    %2938 = vmatprep.subr.mxu0 0.0
    %2939 = vmatpush1.msra.mxu0 0.0
    %2940 = vmatprep.subr.mxu0 0.0
    %2941 = vmatpush1.msra.mxu0 0.0
    %2942 = vmatprep.subr.mxu0 0.0
    %2943 = vmatpush1.msra.mxu0 0.0
    %2944 = vmatprep.subr.mxu0 0.0
    %2945 = vmatpush1.msra.mxu0 0.0
    %2946 = vmatprep.subr.mxu0 0.0
    %2947 = vmatpush1.msra.mxu0 0.0
    %2948 = vmatprep.subr.mxu0 0.0
    %2949 = vmatpush1.msra.mxu0 0.0
    %2950 = vmatprep.subr.mxu0 0.0
    %2951 = vmatpush1.msra.mxu0 0.0
    %2952 = vmatprep.subr.mxu0 0.0
    %2953 = vmatpush1.msra.mxu0 0.0
    %2954 = vmatprep.subr.mxu0 0.0
    %2955 = vmatpush1.msra.mxu0 0.0
    %2956 = vmatprep.subr.mxu0 0.0
    %2957 = vmatpush1.msra.mxu0 0.0
    %2958 = vmatprep.subr.mxu0 0.0
    %2959 = vmatpush1.msra.mxu0 0.0
    %2960 = vmatprep.subr.mxu0 0.0
    %2961 = vmatpush1.msra.mxu0 0.0
    %2962 = vmatprep.subr.mxu0 0.0
    %2963 = vmatpush1.msra.mxu0 0.0
    %2964 = vmatprep.subr.mxu0 0.0
    %2965 = vmatpush1.msra.mxu0 0.0
    %2966 = vmatprep.subr.mxu0 0.0
    %2967 = vmatpush1.msra.mxu0 0.0
    %2968 = vmatprep.subr.mxu0 0.0
    %2969 = vmatpush1.msra.mxu0 0.0
    %2970 = vmatprep.subr.mxu0 0.0
    %2971 = vmatpush1.msra.mxu0 0.0
    %2972 = vmatprep.subr.mxu0 0.0
    %2973 = vmatpush1.msra.mxu0 0.0
    %2974 = vmatprep.subr.mxu0 0.0
    %2975 = vmatpush1.msra.mxu0 0.0
    %2976 = vmatprep.mubr.f32.mxu0 0.0
    %2977 = vmatmul.mubr.f32.gmra.mrb[0].mxu0 %v2768
    %v2978 = vpop.f32.mrb[0].mxu0
    %v2979 = vadd.f32 %v2909, %v2978
    %v2980 = vpop.f32.mrb[0].mxu0
    %2981 = vdwg.mxu0
    %v2982 = vadd.f32 %v2979, %v1962
    %v2983 = vxor.u32 %v2982, 2147483648
    %v2984 = vmul.f32 %v2983, 1.442695
    %v2985 = vpow.pop %v2984
    %v2986 = vadd.f32 %v2985, 1.0
    %v2987 = vrcp.pop %v2986
    %v2988 = vmul.f32 1.0, %v2987
    %v2989 = vmul.f32 %v2988, 2.0
    %v2990 = vsub.f32 %v2989, 1.0
    %v2991 = vmul.f32 %v2988, %v2587
    %2993 = vrot.lane.b32.xlu0 %v2990, 64
    %v2994 = vpop.permute.xlu0 %2993
    %v2996 = vmul.f32 %v2988, %v2994
    %2998 = vrot.lane.b32.xlu0 %v2996, 32
    %v2999 = vpop.permute.xlu0 %2998
    %v3001 = vadd.f32 %v2991, %v2999
    %v3002 = vtanh.pop %v3001
    %3004 = vrot.lane.b32.xlu0 %v3002, 64
    %v3005 = vpop.permute.xlu0 %3004
    %v3007 = vmul.f32 %v2988, %v3005
    %3008 = vmatprep.subr.mxu0 0.0
    %3009 = vmatpush1.msra.mxu0 %v1967
    %3010 = vmatprep.subr.mxu0 0.0
    %3011 = vmatpush1.msra.mxu0 %v1968
    %3012 = vmatprep.subr.mxu0 0.0
    %3013 = vmatpush1.msra.mxu0 %v1969
    %3014 = vmatprep.subr.mxu0 0.0
    %3015 = vmatpush1.msra.mxu0 %v1970
    %3016 = vmatprep.subr.mxu0 0.0
    %3017 = vmatpush1.msra.mxu0 0.0
    %3018 = vmatprep.subr.mxu0 0.0
    %3019 = vmatpush1.msra.mxu0 0.0
    %3020 = vmatprep.subr.mxu0 0.0
    %3021 = vmatpush1.msra.mxu0 0.0
    %3022 = vmatprep.subr.mxu0 0.0
    %3023 = vmatpush1.msra.mxu0 0.0
    %3024 = vmatprep.subr.mxu0 0.0
    %3025 = vmatpush1.msra.mxu0 0.0
    %3026 = vmatprep.subr.mxu0 0.0
    %3027 = vmatpush1.msra.mxu0 0.0
    %3028 = vmatprep.subr.mxu0 0.0
    %3029 = vmatpush1.msra.mxu0 0.0
    %3030 = vmatprep.subr.mxu0 0.0
    %3031 = vmatpush1.msra.mxu0 0.0
    %3032 = vmatprep.subr.mxu0 0.0
    %3033 = vmatpush1.msra.mxu0 0.0
    %3034 = vmatprep.subr.mxu0 0.0
    %3035 = vmatpush1.msra.mxu0 0.0
    %3036 = vmatprep.subr.mxu0 0.0
    %3037 = vmatpush1.msra.mxu0 0.0
    %3038 = vmatprep.subr.mxu0 0.0
    %3039 = vmatpush1.msra.mxu0 0.0
    %3040 = vmatprep.subr.mxu0 0.0
    %3041 = vmatpush1.msra.mxu0 0.0
    %3042 = vmatprep.subr.mxu0 0.0
    %3043 = vmatpush1.msra.mxu0 0.0
    %3044 = vmatprep.subr.mxu0 0.0
    %3045 = vmatpush1.msra.mxu0 0.0
    %3046 = vmatprep.subr.mxu0 0.0
    %3047 = vmatpush1.msra.mxu0 0.0
    %3048 = vmatprep.subr.mxu0 0.0
    %3049 = vmatpush1.msra.mxu0 0.0
    %3050 = vmatprep.subr.mxu0 0.0
    %3051 = vmatpush1.msra.mxu0 0.0
    %3052 = vmatprep.subr.mxu0 0.0
    %3053 = vmatpush1.msra.mxu0 0.0
    %3054 = vmatprep.subr.mxu0 0.0
    %3055 = vmatpush1.msra.mxu0 0.0
    %3056 = vmatprep.subr.mxu0 0.0
    %3057 = vmatpush1.msra.mxu0 0.0
    %3058 = vmatprep.subr.mxu0 0.0
    %3059 = vmatpush1.msra.mxu0 0.0
    %3060 = vmatprep.subr.mxu0 0.0
    %3061 = vmatpush1.msra.mxu0 0.0
    %3062 = vmatprep.subr.mxu0 0.0
    %3063 = vmatpush1.msra.mxu0 0.0
    %3064 = vmatprep.subr.mxu0 0.0
    %3065 = vmatpush1.msra.mxu0 0.0
    %3066 = vmatprep.subr.mxu0 0.0
    %3067 = vmatpush1.msra.mxu0 0.0
    %3068 = vmatprep.subr.mxu0 0.0
    %3069 = vmatpush1.msra.mxu0 0.0
    %3070 = vmatprep.subr.mxu0 0.0
    %3071 = vmatpush1.msra.mxu0 0.0
    %3072 = vmatprep.mubr.f32.mxu0 0.0
    %3073 = vmatmul.mubr.f32.gmra.mrb[0].mxu0 %v2768
    %v3074 = vpop.f32.mrb[0].mxu0
    %v3075 = vadd.f32 0.0, %v3074
    %v3076 = vpop.f32.mrb[0].mxu0
    %3077 = vdwg.mxu0
    %3079 = vrot.lane.b32.xlu0 %v3007, 32
    %v3080 = vpop.permute.xlu0 %3079
    %v3081 = vsel %vm129, %v3080, 0
    %3083 = vmatprep.subr.mxu0 0.0
    %3084 = vmatpush1.msra.mxu0 %v1963
    %3085 = vmatprep.subr.mxu0 0.0
    %3086 = vmatpush1.msra.mxu0 %v1964
    %3087 = vmatprep.subr.mxu0 0.0
    %3088 = vmatpush1.msra.mxu0 %v1965
    %3089 = vmatprep.subr.mxu0 0.0
    %3090 = vmatpush1.msra.mxu0 %v1966
    %3091 = vmatprep.subr.mxu0 0.0
    %3092 = vmatpush1.msra.mxu0 0.0
    %3093 = vmatprep.subr.mxu0 0.0
    %3094 = vmatpush1.msra.mxu0 0.0
    %3095 = vmatprep.subr.mxu0 0.0
    %3096 = vmatpush1.msra.mxu0 0.0
    %3097 = vmatprep.subr.mxu0 0.0
    %3098 = vmatpush1.msra.mxu0 0.0
    %3099 = vmatprep.subr.mxu0 0.0
    %3100 = vmatpush1.msra.mxu0 0.0
    %3101 = vmatprep.subr.mxu0 0.0
    %3102 = vmatpush1.msra.mxu0 0.0
    %3103 = vmatprep.subr.mxu0 0.0
    %3104 = vmatpush1.msra.mxu0 0.0
    %3105 = vmatprep.subr.mxu0 0.0
    %3106 = vmatpush1.msra.mxu0 0.0
    %3107 = vmatprep.subr.mxu0 0.0
    %3108 = vmatpush1.msra.mxu0 0.0
    %3109 = vmatprep.subr.mxu0 0.0
    %3110 = vmatpush1.msra.mxu0 0.0
    %3111 = vmatprep.subr.mxu0 0.0
    %3112 = vmatpush1.msra.mxu0 0.0
    %3113 = vmatprep.subr.mxu0 0.0
    %3114 = vmatpush1.msra.mxu0 0.0
    %3115 = vmatprep.subr.mxu0 0.0
    %3116 = vmatpush1.msra.mxu0 0.0
    %3117 = vmatprep.subr.mxu0 0.0
    %3118 = vmatpush1.msra.mxu0 0.0
    %3119 = vmatprep.subr.mxu0 0.0
    %3120 = vmatpush1.msra.mxu0 0.0
    %3121 = vmatprep.subr.mxu0 0.0
    %3122 = vmatpush1.msra.mxu0 0.0
    %3123 = vmatprep.subr.mxu0 0.0
    %3124 = vmatpush1.msra.mxu0 0.0
    %3125 = vmatprep.subr.mxu0 0.0
    %3126 = vmatpush1.msra.mxu0 0.0
    %3127 = vmatprep.subr.mxu0 0.0
    %3128 = vmatpush1.msra.mxu0 0.0
    %3129 = vmatprep.subr.mxu0 0.0
    %3130 = vmatpush1.msra.mxu0 0.0
    %3131 = vmatprep.subr.mxu0 0.0
    %3132 = vmatpush1.msra.mxu0 0.0
    %3133 = vmatprep.subr.mxu0 0.0
    %3134 = vmatpush1.msra.mxu0 0.0
    %3135 = vmatprep.subr.mxu0 0.0
    %3136 = vmatpush1.msra.mxu0 0.0
    %3137 = vmatprep.subr.mxu0 0.0
    %3138 = vmatpush1.msra.mxu0 0.0
    %3139 = vmatprep.subr.mxu0 0.0
    %3140 = vmatpush1.msra.mxu0 0.0
    %3141 = vmatprep.subr.mxu0 0.0
    %3142 = vmatpush1.msra.mxu0 0.0
    %3143 = vmatprep.subr.mxu0 0.0
    %3144 = vmatpush1.msra.mxu0 0.0
    %3145 = vmatprep.subr.mxu0 0.0
    %3146 = vmatpush1.msra.mxu0 0.0
    %3147 = vmatprep.mubr.f32.mxu0 0.0
    %3148 = vmatmul.mubr.f32.gmra.mrb[0].mxu0 %v3081
    %v3149 = vpop.f32.mrb[0].mxu0
    %v3150 = vadd.f32 %v3075, %v3149
    %v3151 = vpop.f32.mrb[0].mxu0
    %3152 = vdwg.mxu0
    %v3153 = vadd.f32 %v3150, %v1975
    %v3154 = vxor.u32 %v3153, 2147483648
    %v3155 = vmul.f32 %v3154, 1.442695
    %v3156 = vpow.pop %v3155
    %v3157 = vadd.f32 %v3156, 1.0
    %v3158 = vrcp.pop %v3157
    %v3159 = vmul.f32 1.0, %v3158
    %v3160 = vmul.f32 %v3159, 2.0
    %v3161 = vsub.f32 %v3160, 1.0
    %v3162 = vmul.f32 %v3159, %v2758
    %3164 = vrot.lane.b32.xlu0 %v3161, 64
    %v3165 = vpop.permute.xlu0 %3164
    %v3167 = vmul.f32 %v3159, %v3165
    %3169 = vrot.lane.b32.xlu0 %v3167, 32
    %v3170 = vpop.permute.xlu0 %3169
    %v3172 = vadd.f32 %v3162, %v3170
    %v3173 = vtanh.pop %v3172
    %3175 = vrot.lane.b32.xlu0 %v3173, 64
    %v3176 = vpop.permute.xlu0 %3175
    %v3178 = vmul.f32 %v3159, %v3176
    %3180 = vrot.lane.b32.xlu0 %v3178, 32
    %v3181 = vpop.permute.xlu0 %3180
    %v3182 = vsel %vm129, %v3181, 0
    %3184 = vmatprep.subr.mxu0 0.0
    %3185 = vmatpush1.msra.mxu0 %v1976
    %3186 = vmatprep.subr.mxu0 0.0
    %3187 = vmatpush1.msra.mxu0 %v1977
    %3188 = vmatprep.subr.mxu0 0.0
    %3189 = vmatpush1.msra.mxu0 %v1978
    %3190 = vmatprep.subr.mxu0 0.0
    %3191 = vmatpush1.msra.mxu0 %v1979
    %3192 = vmatprep.subr.mxu0 0.0
    %3193 = vmatpush1.msra.mxu0 0.0
    %3194 = vmatprep.subr.mxu0 0.0
    %3195 = vmatpush1.msra.mxu0 0.0
    %3196 = vmatprep.subr.mxu0 0.0
    %3197 = vmatpush1.msra.mxu0 0.0
    %3198 = vmatprep.subr.mxu0 0.0
    %3199 = vmatpush1.msra.mxu0 0.0
    %3200 = vmatprep.subr.mxu0 0.0
    %3201 = vmatpush1.msra.mxu0 0.0
    %3202 = vmatprep.subr.mxu0 0.0
    %3203 = vmatpush1.msra.mxu0 0.0
    %3204 = vmatprep.subr.mxu0 0.0
    %3205 = vmatpush1.msra.mxu0 0.0
    %3206 = vmatprep.subr.mxu0 0.0
    %3207 = vmatpush1.msra.mxu0 0.0
    %3208 = vmatprep.subr.mxu0 0.0
    %3209 = vmatpush1.msra.mxu0 0.0
    %3210 = vmatprep.subr.mxu0 0.0
    %3211 = vmatpush1.msra.mxu0 0.0
    %3212 = vmatprep.subr.mxu0 0.0
    %3213 = vmatpush1.msra.mxu0 0.0
    %3214 = vmatprep.subr.mxu0 0.0
    %3215 = vmatpush1.msra.mxu0 0.0
    %3216 = vmatprep.subr.mxu0 0.0
    %3217 = vmatpush1.msra.mxu0 0.0
    %3218 = vmatprep.subr.mxu0 0.0
    %3219 = vmatpush1.msra.mxu0 0.0
    %3220 = vmatprep.subr.mxu0 0.0
    %3221 = vmatpush1.msra.mxu0 0.0
    %3222 = vmatprep.subr.mxu0 0.0
    %3223 = vmatpush1.msra.mxu0 0.0
    %3224 = vmatprep.subr.mxu0 0.0
    %3225 = vmatpush1.msra.mxu0 0.0
    %3226 = vmatprep.subr.mxu0 0.0
    %3227 = vmatpush1.msra.mxu0 0.0
    %3228 = vmatprep.subr.mxu0 0.0
    %3229 = vmatpush1.msra.mxu0 0.0
    %3230 = vmatprep.subr.mxu0 0.0
    %3231 = vmatpush1.msra.mxu0 0.0
    %3232 = vmatprep.subr.mxu0 0.0
    %3233 = vmatpush1.msra.mxu0 0.0
    %3234 = vmatprep.subr.mxu0 0.0
    %3235 = vmatpush1.msra.mxu0 0.0
    %3236 = vmatprep.subr.mxu0 0.0
    %3237 = vmatpush1.msra.mxu0 0.0
    %3238 = vmatprep.subr.mxu0 0.0
    %3239 = vmatpush1.msra.mxu0 0.0
    %3240 = vmatprep.subr.mxu0 0.0
    %3241 = vmatpush1.msra.mxu0 0.0
    %3242 = vmatprep.subr.mxu0 0.0
    %3243 = vmatpush1.msra.mxu0 0.0
    %3244 = vmatprep.subr.mxu0 0.0
    %3245 = vmatpush1.msra.mxu0 0.0
    %3246 = vmatprep.subr.mxu0 0.0
    %3247 = vmatpush1.msra.mxu0 0.0
    %3248 = vmatprep.mubr.f32.mxu0 0.0
    %3249 = vmatmul.mubr.f32.gmra.mrb[0].mxu0 %v3182
    %v3250 = vpop.f32.mrb[0].mxu0
    %v3251 = vadd.f32 %v1984, %v3250
    %v3252 = vpop.f32.mrb[0].mxu0
    %3253 = vdwg.mxu0
    %s3254 = scalar_lea.vmem %s3, 4
    %3255 = vst.msk [vmem:[%s3254] sm:$0x3] %vm2426, %v3251
    %3256 = vmatprep.subr.mxu0 0.0
    %3257 = vmatpush1.msra.mxu0 %v1949
    %3258 = vmatprep.subr.mxu0 0.0
    %3259 = vmatpush1.msra.mxu0 %v1950
    %3260 = vmatprep.subr.mxu0 0.0
    %3261 = vmatpush1.msra.mxu0 %v1951
    %3262 = vmatprep.subr.mxu0 0.0
    %3263 = vmatpush1.msra.mxu0 %v1952
    %3264 = vmatprep.subr.mxu0 0.0
    %3265 = vmatpush1.msra.mxu0 0.0
    %3266 = vmatprep.subr.mxu0 0.0
    %3267 = vmatpush1.msra.mxu0 0.0
    %3268 = vmatprep.subr.mxu0 0.0
    %3269 = vmatpush1.msra.mxu0 0.0
    %3270 = vmatprep.subr.mxu0 0.0
    %3271 = vmatpush1.msra.mxu0 0.0
    %3272 = vmatprep.subr.mxu0 0.0
    %3273 = vmatpush1.msra.mxu0 0.0
    %3274 = vmatprep.subr.mxu0 0.0
    %3275 = vmatpush1.msra.mxu0 0.0
    %3276 = vmatprep.subr.mxu0 0.0
    %3277 = vmatpush1.msra.mxu0 0.0
    %3278 = vmatprep.subr.mxu0 0.0
    %3279 = vmatpush1.msra.mxu0 0.0
    %3280 = vmatprep.subr.mxu0 0.0
    %3281 = vmatpush1.msra.mxu0 0.0
    %3282 = vmatprep.subr.mxu0 0.0
    %3283 = vmatpush1.msra.mxu0 0.0
    %3284 = vmatprep.subr.mxu0 0.0
    %3285 = vmatpush1.msra.mxu0 0.0
    %3286 = vmatprep.subr.mxu0 0.0
    %3287 = vmatpush1.msra.mxu0 0.0
    %3288 = vmatprep.subr.mxu0 0.0
    %3289 = vmatpush1.msra.mxu0 0.0
    %3290 = vmatprep.subr.mxu0 0.0
    %3291 = vmatpush1.msra.mxu0 0.0
    %3292 = vmatprep.subr.mxu0 0.0
    %3293 = vmatpush1.msra.mxu0 0.0
    %3294 = vmatprep.subr.mxu0 0.0
    %3295 = vmatpush1.msra.mxu0 0.0
    %3296 = vmatprep.subr.mxu0 0.0
    %3297 = vmatpush1.msra.mxu0 0.0
    %3298 = vmatprep.subr.mxu0 0.0
    %3299 = vmatpush1.msra.mxu0 0.0
    %3300 = vmatprep.subr.mxu0 0.0
    %3301 = vmatpush1.msra.mxu0 0.0
    %3302 = vmatprep.subr.mxu0 0.0
    %3303 = vmatpush1.msra.mxu0 0.0
    %3304 = vmatprep.subr.mxu0 0.0
    %3305 = vmatpush1.msra.mxu0 0.0
    %3306 = vmatprep.subr.mxu0 0.0
    %3307 = vmatpush1.msra.mxu0 0.0
    %3308 = vmatprep.subr.mxu0 0.0
    %3309 = vmatpush1.msra.mxu0 0.0
    %3310 = vmatprep.subr.mxu0 0.0
    %3311 = vmatpush1.msra.mxu0 0.0
    %3312 = vmatprep.subr.mxu0 0.0
    %3313 = vmatpush1.msra.mxu0 0.0
    %3314 = vmatprep.subr.mxu0 0.0
    %3315 = vmatpush1.msra.mxu0 0.0
    %3316 = vmatprep.subr.mxu0 0.0
    %3317 = vmatpush1.msra.mxu0 0.0
    %3318 = vmatprep.subr.mxu0 0.0
    %3319 = vmatpush1.msra.mxu0 0.0
    %3320 = vmatprep.mubr.f32.mxu0 0.0
    %3321 = vmatmul.mubr.f32.gmra.mrb[0].mxu0 %v3081
    %v3322 = vpop.f32.mrb[0].mxu0
    %v3323 = vadd.f32 0.0, %v3322
    %v3324 = vpop.f32.mrb[0].mxu0
    %3325 = vdwg.mxu0
    %3326 = vmatprep.subr.mxu0 0.0
    %3327 = vmatpush1.msra.mxu0 %v1954
    %3328 = vmatprep.subr.mxu0 0.0
    %3329 = vmatpush1.msra.mxu0 %v1955
    %3330 = vmatprep.subr.mxu0 0.0
    %3331 = vmatpush1.msra.mxu0 %v1956
    %3332 = vmatprep.subr.mxu0 0.0
    %3333 = vmatpush1.msra.mxu0 %v1957
    %3334 = vmatprep.subr.mxu0 0.0
    %3335 = vmatpush1.msra.mxu0 0.0
    %3336 = vmatprep.subr.mxu0 0.0
    %3337 = vmatpush1.msra.mxu0 0.0
    %3338 = vmatprep.subr.mxu0 0.0
    %3339 = vmatpush1.msra.mxu0 0.0
    %3340 = vmatprep.subr.mxu0 0.0
    %3341 = vmatpush1.msra.mxu0 0.0
    %3342 = vmatprep.subr.mxu0 0.0
    %3343 = vmatpush1.msra.mxu0 0.0
    %3344 = vmatprep.subr.mxu0 0.0
    %3345 = vmatpush1.msra.mxu0 0.0
    %3346 = vmatprep.subr.mxu0 0.0
    %3347 = vmatpush1.msra.mxu0 0.0
    %3348 = vmatprep.subr.mxu0 0.0
    %3349 = vmatpush1.msra.mxu0 0.0
    %3350 = vmatprep.subr.mxu0 0.0
    %3351 = vmatpush1.msra.mxu0 0.0
    %3352 = vmatprep.subr.mxu0 0.0
    %3353 = vmatpush1.msra.mxu0 0.0
    %3354 = vmatprep.subr.mxu0 0.0
    %3355 = vmatpush1.msra.mxu0 0.0
    %3356 = vmatprep.subr.mxu0 0.0
    %3357 = vmatpush1.msra.mxu0 0.0
    %3358 = vmatprep.subr.mxu0 0.0
    %3359 = vmatpush1.msra.mxu0 0.0
    %3360 = vmatprep.subr.mxu0 0.0
    %3361 = vmatpush1.msra.mxu0 0.0
    %3362 = vmatprep.subr.mxu0 0.0
    %3363 = vmatpush1.msra.mxu0 0.0
    %3364 = vmatprep.subr.mxu0 0.0
    %3365 = vmatpush1.msra.mxu0 0.0
    %3366 = vmatprep.subr.mxu0 0.0
    %3367 = vmatpush1.msra.mxu0 0.0
    %3368 = vmatprep.subr.mxu0 0.0
    %3369 = vmatpush1.msra.mxu0 0.0
    %3370 = vmatprep.subr.mxu0 0.0
    %3371 = vmatpush1.msra.mxu0 0.0
    %3372 = vmatprep.subr.mxu0 0.0
    %3373 = vmatpush1.msra.mxu0 0.0
    %3374 = vmatprep.subr.mxu0 0.0
    %3375 = vmatpush1.msra.mxu0 0.0
    %3376 = vmatprep.subr.mxu0 0.0
    %3377 = vmatpush1.msra.mxu0 0.0
    %3378 = vmatprep.subr.mxu0 0.0
    %3379 = vmatpush1.msra.mxu0 0.0
    %3380 = vmatprep.subr.mxu0 0.0
    %3381 = vmatpush1.msra.mxu0 0.0
    %3382 = vmatprep.subr.mxu0 0.0
    %3383 = vmatpush1.msra.mxu0 0.0
    %3384 = vmatprep.subr.mxu0 0.0
    %3385 = vmatpush1.msra.mxu0 0.0
    %3386 = vmatprep.subr.mxu0 0.0
    %3387 = vmatpush1.msra.mxu0 0.0
    %3388 = vmatprep.subr.mxu0 0.0
    %3389 = vmatpush1.msra.mxu0 0.0
    %3390 = vmatprep.mubr.f32.mxu0 0.0
    %3391 = vmatmul.mubr.f32.gmra.mrb[0].mxu0 %v3182
    %v3392 = vpop.f32.mrb[0].mxu0
    %v3393 = vadd.f32 %v3323, %v3392
    %v3394 = vpop.f32.mrb[0].mxu0
    %3395 = vdwg.mxu0
    %v3396 = vadd.f32 %v3393, %v1962
    %v3397 = vxor.u32 %v3396, 2147483648
    %v3398 = vmul.f32 %v3397, 1.442695
    %v3399 = vpow.pop %v3398
    %v3400 = vadd.f32 %v3399, 1.0
    %v3401 = vrcp.pop %v3400
    %v3402 = vmul.f32 1.0, %v3401
    %v3403 = vmul.f32 %v3402, 2.0
    %v3404 = vsub.f32 %v3403, 1.0
    %v3405 = vmul.f32 %v3402, %v3001
    %3407 = vrot.lane.b32.xlu0 %v3404, 64
    %v3408 = vpop.permute.xlu0 %3407
    %v3410 = vmul.f32 %v3402, %v3408
    %3412 = vrot.lane.b32.xlu0 %v3410, 32
    %v3413 = vpop.permute.xlu0 %3412
    %v3415 = vadd.f32 %v3405, %v3413
    %v3416 = vtanh.pop %v3415
    %3418 = vrot.lane.b32.xlu0 %v3416, 64
    %v3419 = vpop.permute.xlu0 %3418
    %v3421 = vmul.f32 %v3402, %v3419
    %3422 = vmatprep.subr.mxu0 0.0
    %3423 = vmatpush1.msra.mxu0 %v1967
    %3424 = vmatprep.subr.mxu0 0.0
    %3425 = vmatpush1.msra.mxu0 %v1968
    %3426 = vmatprep.subr.mxu0 0.0
    %3427 = vmatpush1.msra.mxu0 %v1969
    %3428 = vmatprep.subr.mxu0 0.0
    %3429 = vmatpush1.msra.mxu0 %v1970
    %3430 = vmatprep.subr.mxu0 0.0
    %3431 = vmatpush1.msra.mxu0 0.0
    %3432 = vmatprep.subr.mxu0 0.0
    %3433 = vmatpush1.msra.mxu0 0.0
    %3434 = vmatprep.subr.mxu0 0.0
    %3435 = vmatpush1.msra.mxu0 0.0
    %3436 = vmatprep.subr.mxu0 0.0
    %3437 = vmatpush1.msra.mxu0 0.0
    %3438 = vmatprep.subr.mxu0 0.0
    %3439 = vmatpush1.msra.mxu0 0.0
    %3440 = vmatprep.subr.mxu0 0.0
    %3441 = vmatpush1.msra.mxu0 0.0
    %3442 = vmatprep.subr.mxu0 0.0
    %3443 = vmatpush1.msra.mxu0 0.0
    %3444 = vmatprep.subr.mxu0 0.0
    %3445 = vmatpush1.msra.mxu0 0.0
    %3446 = vmatprep.subr.mxu0 0.0
    %3447 = vmatpush1.msra.mxu0 0.0
    %3448 = vmatprep.subr.mxu0 0.0
    %3449 = vmatpush1.msra.mxu0 0.0
    %3450 = vmatprep.subr.mxu0 0.0
    %3451 = vmatpush1.msra.mxu0 0.0
    %3452 = vmatprep.subr.mxu0 0.0
    %3453 = vmatpush1.msra.mxu0 0.0
    %3454 = vmatprep.subr.mxu0 0.0
    %3455 = vmatpush1.msra.mxu0 0.0
    %3456 = vmatprep.subr.mxu0 0.0
    %3457 = vmatpush1.msra.mxu0 0.0
    %3458 = vmatprep.subr.mxu0 0.0
    %3459 = vmatpush1.msra.mxu0 0.0
    %3460 = vmatprep.subr.mxu0 0.0
    %3461 = vmatpush1.msra.mxu0 0.0
    %3462 = vmatprep.subr.mxu0 0.0
    %3463 = vmatpush1.msra.mxu0 0.0
    %3464 = vmatprep.subr.mxu0 0.0
    %3465 = vmatpush1.msra.mxu0 0.0
    %3466 = vmatprep.subr.mxu0 0.0
    %3467 = vmatpush1.msra.mxu0 0.0
    %3468 = vmatprep.subr.mxu0 0.0
    %3469 = vmatpush1.msra.mxu0 0.0
    %3470 = vmatprep.subr.mxu0 0.0
    %3471 = vmatpush1.msra.mxu0 0.0
    %3472 = vmatprep.subr.mxu0 0.0
    %3473 = vmatpush1.msra.mxu0 0.0
    %3474 = vmatprep.subr.mxu0 0.0
    %3475 = vmatpush1.msra.mxu0 0.0
    %3476 = vmatprep.subr.mxu0 0.0
    %3477 = vmatpush1.msra.mxu0 0.0
    %3478 = vmatprep.subr.mxu0 0.0
    %3479 = vmatpush1.msra.mxu0 0.0
    %3480 = vmatprep.subr.mxu0 0.0
    %3481 = vmatpush1.msra.mxu0 0.0
    %3482 = vmatprep.subr.mxu0 0.0
    %3483 = vmatpush1.msra.mxu0 0.0
    %3484 = vmatprep.subr.mxu0 0.0
    %3485 = vmatpush1.msra.mxu0 0.0
    %3486 = vmatprep.mubr.f32.mxu0 0.0
    %3487 = vmatmul.mubr.f32.gmra.mrb[0].mxu0 %v3182
    %v3488 = vpop.f32.mrb[0].mxu0
    %v3489 = vadd.f32 0.0, %v3488
    %v3490 = vpop.f32.mrb[0].mxu0
    %3491 = vdwg.mxu0
    %3493 = vrot.lane.b32.xlu0 %v3421, 32
    %v3494 = vpop.permute.xlu0 %3493
    %v3495 = vsel %vm129, %v3494, 0
    %3497 = vmatprep.subr.mxu0 0.0
    %3498 = vmatpush1.msra.mxu0 %v1963
    %3499 = vmatprep.subr.mxu0 0.0
    %3500 = vmatpush1.msra.mxu0 %v1964
    %3501 = vmatprep.subr.mxu0 0.0
    %3502 = vmatpush1.msra.mxu0 %v1965
    %3503 = vmatprep.subr.mxu0 0.0
    %3504 = vmatpush1.msra.mxu0 %v1966
    %3505 = vmatprep.subr.mxu0 0.0
    %3506 = vmatpush1.msra.mxu0 0.0
    %3507 = vmatprep.subr.mxu0 0.0
    %3508 = vmatpush1.msra.mxu0 0.0
    %3509 = vmatprep.subr.mxu0 0.0
    %3510 = vmatpush1.msra.mxu0 0.0
    %3511 = vmatprep.subr.mxu0 0.0
    %3512 = vmatpush1.msra.mxu0 0.0
    %3513 = vmatprep.subr.mxu0 0.0
    %3514 = vmatpush1.msra.mxu0 0.0
    %3515 = vmatprep.subr.mxu0 0.0
    %3516 = vmatpush1.msra.mxu0 0.0
    %3517 = vmatprep.subr.mxu0 0.0
    %3518 = vmatpush1.msra.mxu0 0.0
    %3519 = vmatprep.subr.mxu0 0.0
    %3520 = vmatpush1.msra.mxu0 0.0
    %3521 = vmatprep.subr.mxu0 0.0
    %3522 = vmatpush1.msra.mxu0 0.0
    %3523 = vmatprep.subr.mxu0 0.0
    %3524 = vmatpush1.msra.mxu0 0.0
    %3525 = vmatprep.subr.mxu0 0.0
    %3526 = vmatpush1.msra.mxu0 0.0
    %3527 = vmatprep.subr.mxu0 0.0
    %3528 = vmatpush1.msra.mxu0 0.0
    %3529 = vmatprep.subr.mxu0 0.0
    %3530 = vmatpush1.msra.mxu0 0.0
    %3531 = vmatprep.subr.mxu0 0.0
    %3532 = vmatpush1.msra.mxu0 0.0
    %3533 = vmatprep.subr.mxu0 0.0
    %3534 = vmatpush1.msra.mxu0 0.0
    %3535 = vmatprep.subr.mxu0 0.0
    %3536 = vmatpush1.msra.mxu0 0.0
    %3537 = vmatprep.subr.mxu0 0.0
    %3538 = vmatpush1.msra.mxu0 0.0
    %3539 = vmatprep.subr.mxu0 0.0
    %3540 = vmatpush1.msra.mxu0 0.0
    %3541 = vmatprep.subr.mxu0 0.0
    %3542 = vmatpush1.msra.mxu0 0.0
    %3543 = vmatprep.subr.mxu0 0.0
    %3544 = vmatpush1.msra.mxu0 0.0
    %3545 = vmatprep.subr.mxu0 0.0
    %3546 = vmatpush1.msra.mxu0 0.0
    %3547 = vmatprep.subr.mxu0 0.0
    %3548 = vmatpush1.msra.mxu0 0.0
    %3549 = vmatprep.subr.mxu0 0.0
    %3550 = vmatpush1.msra.mxu0 0.0
    %3551 = vmatprep.subr.mxu0 0.0
    %3552 = vmatpush1.msra.mxu0 0.0
    %3553 = vmatprep.subr.mxu0 0.0
    %3554 = vmatpush1.msra.mxu0 0.0
    %3555 = vmatprep.subr.mxu0 0.0
    %3556 = vmatpush1.msra.mxu0 0.0
    %3557 = vmatprep.subr.mxu0 0.0
    %3558 = vmatpush1.msra.mxu0 0.0
    %3559 = vmatprep.subr.mxu0 0.0
    %3560 = vmatpush1.msra.mxu0 0.0
    %3561 = vmatprep.mubr.f32.mxu0 0.0
    %3562 = vmatmul.mubr.f32.gmra.mrb[0].mxu0 %v3495
    %v3563 = vpop.f32.mrb[0].mxu0
    %v3564 = vadd.f32 %v3489, %v3563
    %v3565 = vpop.f32.mrb[0].mxu0
    %3566 = vdwg.mxu0
    %v3567 = vadd.f32 %v3564, %v1975
    %v3568 = vxor.u32 %v3567, 2147483648
    %v3569 = vmul.f32 %v3568, 1.442695
    %v3570 = vpow.pop %v3569
    %v3571 = vadd.f32 %v3570, 1.0
    %v3572 = vrcp.pop %v3571
    %v3573 = vmul.f32 1.0, %v3572
    %v3574 = vmul.f32 %v3573, 2.0
    %v3575 = vsub.f32 %v3574, 1.0
    %v3576 = vmul.f32 %v3573, %v3172
    %3578 = vrot.lane.b32.xlu0 %v3575, 64
    %v3579 = vpop.permute.xlu0 %3578
    %v3581 = vmul.f32 %v3573, %v3579
    %3583 = vrot.lane.b32.xlu0 %v3581, 32
    %v3584 = vpop.permute.xlu0 %3583
    %v3586 = vadd.f32 %v3576, %v3584
    %v3587 = vtanh.pop %v3586
    %3589 = vrot.lane.b32.xlu0 %v3587, 64
    %v3590 = vpop.permute.xlu0 %3589
    %v3592 = vmul.f32 %v3573, %v3590
    %3594 = vrot.lane.b32.xlu0 %v3592, 32
    %v3595 = vpop.permute.xlu0 %3594
    %v3596 = vsel %vm129, %v3595, 0
    %3598 = vmatprep.subr.mxu0 0.0
    %3599 = vmatpush1.msra.mxu0 %v1976
    %3600 = vmatprep.subr.mxu0 0.0
    %3601 = vmatpush1.msra.mxu0 %v1977
    %3602 = vmatprep.subr.mxu0 0.0
    %3603 = vmatpush1.msra.mxu0 %v1978
    %3604 = vmatprep.subr.mxu0 0.0
    %3605 = vmatpush1.msra.mxu0 %v1979
    %3606 = vmatprep.subr.mxu0 0.0
    %3607 = vmatpush1.msra.mxu0 0.0
    %3608 = vmatprep.subr.mxu0 0.0
    %3609 = vmatpush1.msra.mxu0 0.0
    %3610 = vmatprep.subr.mxu0 0.0
    %3611 = vmatpush1.msra.mxu0 0.0
    %3612 = vmatprep.subr.mxu0 0.0
    %3613 = vmatpush1.msra.mxu0 0.0
    %3614 = vmatprep.subr.mxu0 0.0
    %3615 = vmatpush1.msra.mxu0 0.0
    %3616 = vmatprep.subr.mxu0 0.0
    %3617 = vmatpush1.msra.mxu0 0.0
    %3618 = vmatprep.subr.mxu0 0.0
    %3619 = vmatpush1.msra.mxu0 0.0
    %3620 = vmatprep.subr.mxu0 0.0
    %3621 = vmatpush1.msra.mxu0 0.0
    %3622 = vmatprep.subr.mxu0 0.0
    %3623 = vmatpush1.msra.mxu0 0.0
    %3624 = vmatprep.subr.mxu0 0.0
    %3625 = vmatpush1.msra.mxu0 0.0
    %3626 = vmatprep.subr.mxu0 0.0
    %3627 = vmatpush1.msra.mxu0 0.0
    %3628 = vmatprep.subr.mxu0 0.0
    %3629 = vmatpush1.msra.mxu0 0.0
    %3630 = vmatprep.subr.mxu0 0.0
    %3631 = vmatpush1.msra.mxu0 0.0
    %3632 = vmatprep.subr.mxu0 0.0
    %3633 = vmatpush1.msra.mxu0 0.0
    %3634 = vmatprep.subr.mxu0 0.0
    %3635 = vmatpush1.msra.mxu0 0.0
    %3636 = vmatprep.subr.mxu0 0.0
    %3637 = vmatpush1.msra.mxu0 0.0
    %3638 = vmatprep.subr.mxu0 0.0
    %3639 = vmatpush1.msra.mxu0 0.0
    %3640 = vmatprep.subr.mxu0 0.0
    %3641 = vmatpush1.msra.mxu0 0.0
    %3642 = vmatprep.subr.mxu0 0.0
    %3643 = vmatpush1.msra.mxu0 0.0
    %3644 = vmatprep.subr.mxu0 0.0
    %3645 = vmatpush1.msra.mxu0 0.0
    %3646 = vmatprep.subr.mxu0 0.0
    %3647 = vmatpush1.msra.mxu0 0.0
    %3648 = vmatprep.subr.mxu0 0.0
    %3649 = vmatpush1.msra.mxu0 0.0
    %3650 = vmatprep.subr.mxu0 0.0
    %3651 = vmatpush1.msra.mxu0 0.0
    %3652 = vmatprep.subr.mxu0 0.0
    %3653 = vmatpush1.msra.mxu0 0.0
    %3654 = vmatprep.subr.mxu0 0.0
    %3655 = vmatpush1.msra.mxu0 0.0
    %3656 = vmatprep.subr.mxu0 0.0
    %3657 = vmatpush1.msra.mxu0 0.0
    %3658 = vmatprep.subr.mxu0 0.0
    %3659 = vmatpush1.msra.mxu0 0.0
    %3660 = vmatprep.subr.mxu0 0.0
    %3661 = vmatpush1.msra.mxu0 0.0
    %3662 = vmatprep.mubr.f32.mxu0 0.0
    %3663 = vmatmul.mubr.f32.gmra.mrb[0].mxu0 %v3596
    %v3664 = vpop.f32.mrb[0].mxu0
    %v3665 = vadd.f32 %v1984, %v3664
    %v3666 = vpop.f32.mrb[0].mxu0
    %3667 = vdwg.mxu0
    %s3668 = scalar_lea.vmem %s3, 6
    %3669 = vst.msk [vmem:[%s3668] sm:$0x3] %vm2426, %v3665
    // Predicated region
    $region18: #{forward.1} parent=1 // pred_check
      _
    $region19: #{forward.1} parent=1 // pred_check_branch
      %3671 = sbr.rel (0) target = $region21
    $region20: #{forward.1} parent=1 // pred_region
      _
    $region21: #{forward.1} parent=1 // pred_fallthru
      _
    // Predicated region
    $region22: #{forward.1} parent=1 // pred_check
      _
    $region23: #{forward.1} parent=1 // pred_check_branch
      %3673 = sbr.rel (0) target = $region25
    $region24: #{forward.1} parent=1 // pred_region
      _
    $region25: #{forward.1} parent=1 // pred_fallthru
      _
    %3674 = vsyncpa [#allocation3], 1

</llo_original>
